<compile_context>
chip_gen: v7x
topology: tpu7x:2x2x1
jax: 0.10.0
libtpu: 0.0.40
codegen_flags: <defaults>
</compile_context>

<pallas_src>
import functools

import jax
import jax.numpy as jnp
from jax.experimental import pallas as pl
from jax.experimental.pallas import tpu as pltpu

PACK_W = 128  # lane-dense packed width for the narrow head outputs


# ----------------------------------------------------------------------------
# Fused Pallas kernel: text encoder + image encoder + TextImage_weibo head
# ----------------------------------------------------------------------------
def _fused_kernel(sel_ref, emb_ref, pimg_ref,
                  wte_ref, bte_ref, wie_ref, bie_ref,
                  wproj_ref, bproj_ref, wclf2_ref, bclf2_ref,
                  wclf_ref, bclf_ref,
                  tfeat_ref, ifeat_ref, ta_ref, ia_ref, fu_ref, packed_ref,
                  *, hidden, num_cls):
    BB = sel_ref.shape[0]

    # ---- text encoder (stand-in): masked mean pool on the MXU + linear + tanh ----
    # sel is the block-diagonal normalized attention mask (built in XLA glue), so the
    # masked mean is one bf16 matmul with f32 accumulation — no f32 upcast / sublane
    # reduction inside the kernel.
    pooled_t = jnp.dot(sel_ref[...], emb_ref[...],
                       preferred_element_type=jnp.float32)            # (BB, D)
    tfeat = jnp.tanh(
        jnp.dot(pooled_t.astype(jnp.bfloat16), wte_ref[...],
                preferred_element_type=jnp.float32) + bte_ref[...])   # (BB, D)
    tfeat_ref[...] = tfeat

    # ---- image encoder (stand-in): patches are pre-pooled in the glue; folded
    #      (patch_embed @ img_proj) weights -> single matmul + tanh ----
    ifeat = jnp.tanh(
        jnp.dot(pimg_ref[...], wie_ref[...],
                preferred_element_type=jnp.float32) + bie_ref[...])   # (BB, D)
    ifeat_ref[...] = ifeat

    # ---- head ----
    # Fused projections: (2*BB, D) @ (D, 2*hidden). Cross blocks are discarded, so the
    # wrong-bias corners never reach an output.
    feats = jnp.concatenate([tfeat, ifeat], axis=0).astype(jnp.bfloat16)   # (2BB, D)
    proj = jnp.dot(feats, wproj_ref[...],
                   preferred_element_type=jnp.float32) + bproj_ref[...]    # (2BB, 2H)
    ta = proj[:BB, :hidden]
    ia = proj[BB:, hidden:]
    ta_ref[...] = ta
    ia_ref[...] = ia

    # Fused per-view classifiers: (2*BB, hidden) @ (hidden, 2*num_cls).
    aligned = jnp.concatenate([ta, ia], axis=0).astype(jnp.bfloat16)       # (2BB, H)
    logits2 = jnp.dot(aligned, wclf2_ref[...],
                      preferred_element_type=jnp.float32) + bclf2_ref[...]  # (2BB, 2nc)
    tl = logits2[:BB, :num_cls]
    il = logits2[BB:, num_cls:2 * num_cls]

    # Consistency (stand-in): per-sample cosine similarity + mean fusion.
    # TODO(synk): torch.cosine_similarity clamps the norm product with eps; here eps is
    #             added to the squared norms before rsqrt (differs only near zero norm).
    tn = ta * jax.lax.rsqrt(jnp.sum(ta * ta, axis=-1, keepdims=True) + 1e-8)
    im = ia * jax.lax.rsqrt(jnp.sum(ia * ia, axis=-1, keepdims=True) + 1e-8)
    sims = jnp.sum(tn * im, axis=-1, keepdims=True)                         # (BB, 1)

    fusion = 0.5 * (ta + ia)                                                # (BB, hidden)
    fu_ref[...] = fusion

    # TODO(synk): PyTorch F.gelu is exact-erf; tanh approximation used for TPU lowering.
    feat = jax.nn.gelu(fusion, approximate=True)
    logit = jnp.dot(feat.astype(jnp.bfloat16), wclf_ref[...],
                    preferred_element_type=jnp.float32) + bclf_ref[...]     # (BB, 1)

    # Pack the narrow outputs into one lane-dense block and do a single full-width store:
    #   [ text_logit | image_logit | sims | logit | zeros ]
    pad = jnp.zeros((BB, PACK_W - (2 * num_cls + 2)), jnp.float32)
    packed_ref[...] = jnp.concatenate([tl, il, sims, logit, pad], axis=-1)


# ----------------------------------------------------------------------------
# Wrapper
# ----------------------------------------------------------------------------
def text_image_weibo_forward(params, token_ids, attn_mask, image):
    B, L = token_ids.shape
    D = params["text_enc_w"].shape[1]
    hidden = params["proj_w"].shape[1] // 2
    num_cls = params["clf2_w"].shape[1] // 2
    assert 2 * num_cls + 2 <= PACK_W

    P = 16
    C, Himg, Wimg = image.shape[1:]
    Np = (Himg // P) * (Wimg // P)
    Pd = C * P * P

    # ---- XLA glue feeding the fused kernel (gathers / layout / cheap pooling) ----
    emb_flat = jnp.take(params["token_emb"], token_ids, axis=0).reshape(B * L, D)  # bf16

    mask = attn_mask.astype(jnp.float32)
    nmask = mask / jnp.maximum(jnp.sum(mask, axis=1, keepdims=True), 1.0)          # (B, L)
    # Block-diagonal selector: pooled_text = sel @ emb_flat runs on the MXU in-kernel.
    sel = jnp.where(
        jnp.arange(B, dtype=jnp.int32)[:, None]
        == (jnp.arange(B * L, dtype=jnp.int32)[None, :] // L),
        nmask.reshape(1, B * L), 0.0).astype(jnp.bfloat16)                          # (B, B*L)

    patches = image.reshape(B, C, Himg // P, P, Wimg // P, P)
    patches = patches.transpose(0, 2, 4, 1, 3, 5).reshape(B, Np, Pd)
    pooled_p = jnp.mean(patches, axis=1).astype(jnp.bfloat16)                       # (B, Pd)

    # Single grid step for small batches: the kernel is weight-DMA bound, and splitting
    # would under-fill the MXU rows and duplicate the weight DMA per TensorCore (v7x).
    BB = 128 if (B >= 256 and B % 128 == 0) else B
    grid = (B // BB,)

    bmap = lambda i: (i, 0)
    selmap = lambda i: (i, i)     # within-chunk block-diagonal selector tile
    wmap = lambda i: (0, 0)
    # Constant-index weights: single-buffered (they never change block).
    wspec = lambda arr: pl.BlockSpec(arr.shape, wmap, pipeline_mode=pl.Buffered(1))

    in_specs = [
        pl.BlockSpec((BB, BB * L), selmap),   # normalized-mask selector
        pl.BlockSpec((BB * L, D), bmap),      # flattened token embeddings
        pl.BlockSpec((BB, Pd), bmap),         # pre-pooled image patches
        wspec(params["text_enc_w"]), wspec(params["text_enc_b"]),
        wspec(params["img_w_folded"]), wspec(params["img_enc_b"]),
        wspec(params["proj_w"]), wspec(params["proj_b"]),
        wspec(params["clf2_w"]), wspec(params["clf2_b"]),
        wspec(params["clf_w"]), wspec(params["clf_b"]),
    ]
    out_specs = (
        pl.BlockSpec((BB, D), bmap),          # text_feat
        pl.BlockSpec((BB, D), bmap),          # image_feat
        pl.BlockSpec((BB, hidden), bmap),     # text_aligned
        pl.BlockSpec((BB, hidden), bmap),     # image_aligned
        pl.BlockSpec((BB, hidden), bmap),     # fusion_feature
        pl.BlockSpec((BB, PACK_W), bmap),     # packed narrow outputs
    )
    out_shapes = (
        jax.ShapeDtypeStruct((B, D), jnp.float32),
        jax.ShapeDtypeStruct((B, D), jnp.float32),
        jax.ShapeDtypeStruct((B, hidden), jnp.float32),
        jax.ShapeDtypeStruct((B, hidden), jnp.float32),
        jax.ShapeDtypeStruct((B, hidden), jnp.float32),
        jax.ShapeDtypeStruct((B, PACK_W), jnp.float32),
    )

    kernel = functools.partial(_fused_kernel, hidden=hidden, num_cls=num_cls)

    (text_feature, image_feature, text_aligned, image_aligned,
     fusion_feature, packed) = pl.pallas_call(
        kernel,
        grid=grid,
        in_specs=in_specs,
        out_specs=out_specs,
        out_shape=out_shapes,
        compiler_params=pltpu.CompilerParams(
            dimension_semantics=(("parallel",) if grid[0] > 1 else ("arbitrary",))),
    )(
        sel, emb_flat, pooled_p,
        params["text_enc_w"], params["text_enc_b"],
        params["img_w_folded"], params["img_enc_b"],
        params["proj_w"], params["proj_b"],
        params["clf2_w"], params["clf2_b"],
        params["clf_w"], params["clf_b"],
    )

    # Unpack the lane-dense narrow outputs.
    text_logit = packed[:, 0:num_cls]
    image_logit = packed[:, num_cls:2 * num_cls]
    sims = packed[:, 2 * num_cls]
    logit = packed[:, 2 * num_cls + 1]          # squeeze(-1)

    return_dict = {
        "text_feat": text_feature,
        "image_feat": image_feature,
        "text_aligned": text_aligned,
        "image_aligned": image_aligned,
        "feat": fusion_feature,
        "logits": logit,
        "text_logit": text_logit,
        "image_logit": image_logit,
        "sims": sims,
    }
    return logit, return_dict


# ----------------------------------------------------------------------------
# Deterministic parameter initialization (synthetic; no checkpoint loads)
# Weights feeding the MXU are bf16; biases stay f32. Projection / per-view classifier
# weights are stacked column-wise at init so the kernel fills the 256-wide MXU.
# ----------------------------------------------------------------------------
def init_params(key, vocab, D, hidden, num_cls, patch_dim):
    ks = jax.random.split(key, 10)

    def lin(k, fan_in, fan_out):
        kw, kb = jax.random.split(k)
        lim = 1.0 / jnp.sqrt(fan_in)
        w = jax.random.uniform(kw, (fan_in, fan_out), jnp.float32, -lim, lim)
        b = jax.random.uniform(kb, (1, fan_out), jnp.float32, -lim, lim)
        return w, b

    p = {}
    p["token_emb"] = (0.02 * jax.random.normal(ks[0], (vocab, D), jnp.float32)
                      ).astype(jnp.bfloat16)

    w, b = lin(ks[1], D, D)
    p["text_enc_w"], p["text_enc_b"] = w.astype(jnp.bfloat16), b

    # Image encoder: fold patch-embedding and image projection (mean-pool commutes with
    # the linear patch embedding) into a single (patch_dim, D) bf16 weight.
    patch_w = 0.02 * jax.random.normal(ks[2], (patch_dim, D), jnp.float32)
    img_enc_w, img_enc_b = lin(ks[3], D, D)
    p["img_enc_b"] = img_enc_b
    p["img_w_folded"] = jnp.dot(patch_w, img_enc_w).astype(jnp.bfloat16)

    # text_proj / image_proj stacked column-wise: (D, 2*hidden)
    wtp, btp = lin(ks[4], D, hidden)
    wip, bip = lin(ks[5], D, hidden)
    p["proj_w"] = jnp.concatenate([wtp, wip], axis=1).astype(jnp.bfloat16)
    p["proj_b"] = jnp.concatenate([btp, bip], axis=1)

    # text_clf / image_clf stacked column-wise: (hidden, 2*num_cls)
    wtc, btc = lin(ks[6], hidden, num_cls)
    wic, bic = lin(ks[7], hidden, num_cls)
    p["clf2_w"] = jnp.concatenate([wtc, wic], axis=1).astype(jnp.bfloat16)
    p["clf2_b"] = jnp.concatenate([btc, bic], axis=1)

    wc, bc = lin(ks[8], hidden, 1)
    p["clf_w"], p["clf_b"] = wc.astype(jnp.bfloat16), bc
    return p


# ----------------------------------------------------------------------------
if __name__ == "__main__":
    B, L, VOCAB = 16, 16, 128
    D, HIDDEN, NUM_CLS = 768, 128, 2        # module defaults: in_dim=768, hidden_dim=128
    C, HIMG, WIMG, P = 3, 32, 32, 16        # small image; patch_dim = 3*16*16 = 768

    key = jax.random.PRNGKey(0)
    kp, kt, km, ki = jax.random.split(key, 4)

    params = init_params(kp, VOCAB, D, HIDDEN, NUM_CLS, C * P * P)

    token_ids = jax.random.randint(kt, (B, L), 0, VOCAB, dtype=jnp.int32)
    # mask: first part of the sequence valid, rest padding
    attn_mask = (jnp.arange(L)[None, :] < (L // 2 + jnp.arange(B)[:, None] % (L // 2))
                 ).astype(jnp.int32)
    image = jax.random.normal(ki, (B, C, HIMG, WIMG), jnp.float32)

    fwd = jax.jit(functools.partial(text_image_weibo_forward, params))
    logit, out = fwd(token_ids, attn_mask, image)
    jax.block_until_ready((logit, out))

    assert logit.shape == (B,)
    assert out["text_feat"].shape == (B, D)
    assert out["image_feat"].shape == (B, D)
    assert out["text_aligned"].shape == (B, HIDDEN)
    assert out["image_aligned"].shape == (B, HIDDEN)
    assert out["feat"].shape == (B, HIDDEN)
    assert out["text_logit"].shape == (B, NUM_CLS)
    assert out["image_logit"].shape == (B, NUM_CLS)
    assert out["sims"].shape == (B,)
    assert bool(jnp.all(jnp.isfinite(logit)))
    print("KERNEL_OK")
</pallas_src>

<mosaic_0001>
module attributes {stable_mosaic.version = 11 : i64} {
  func.func @_fused_kernel(%arg0: i32, %arg1: memref<16x256xbf16, #tpu.memory_space<vmem>>, %arg2: memref<256x768xbf16, #tpu.memory_space<vmem>>, %arg3: memref<16x768xbf16, #tpu.memory_space<vmem>>, %arg4: memref<768x768xbf16, #tpu.memory_space<vmem>>, %arg5: memref<1x768xf32, #tpu.memory_space<vmem>>, %arg6: memref<768x768xbf16, #tpu.memory_space<vmem>>, %arg7: memref<1x768xf32, #tpu.memory_space<vmem>>, %arg8: memref<768x256xbf16, #tpu.memory_space<vmem>>, %arg9: memref<1x256xf32, #tpu.memory_space<vmem>>, %arg10: memref<128x4xbf16, #tpu.memory_space<vmem>>, %arg11: memref<1x4xf32, #tpu.memory_space<vmem>>, %arg12: memref<128x1xbf16, #tpu.memory_space<vmem>>, %arg13: memref<1x1xf32, #tpu.memory_space<vmem>>, %arg14: memref<16x768xf32, #tpu.memory_space<vmem>>, %arg15: memref<16x768xf32, #tpu.memory_space<vmem>>, %arg16: memref<16x128xf32, #tpu.memory_space<vmem>>, %arg17: memref<16x128xf32, #tpu.memory_space<vmem>>, %arg18: memref<16x128xf32, #tpu.memory_space<vmem>>, %arg19: memref<16x128xf32, #tpu.memory_space<vmem>>) attributes {dimension_semantics = [#tpu.dimension_semantics<arbitrary>], iteration_bounds = array<i64: 1>, scalar_prefetch = 0 : i64, scratch_operands = 0 : i64, tpu.core_type = #tpu.core_type<tc>, window_params = [{transform_indices = @transform_0, window_bounds = array<i64: 16, 256>}, {transform_indices = @transform_1, window_bounds = array<i64: 256, 768>}, {transform_indices = @transform_2, window_bounds = array<i64: 16, 768>}, {pipeline_mode = #tpu.pipeline_mode<synchronous>, transform_indices = @transform_3, window_bounds = array<i64: 768, 768>}, {pipeline_mode = #tpu.pipeline_mode<synchronous>, transform_indices = @transform_4, window_bounds = array<i64: 1, 768>}, {pipeline_mode = #tpu.pipeline_mode<synchronous>, transform_indices = @transform_5, window_bounds = array<i64: 768, 768>}, {pipeline_mode = #tpu.pipeline_mode<synchronous>, transform_indices = @transform_6, window_bounds = array<i64: 1, 768>}, {pipeline_mode = #tpu.pipeline_mode<synchronous>, transform_indices = @transform_7, window_bounds = array<i64: 768, 256>}, {pipeline_mode = #tpu.pipeline_mode<synchronous>, transform_indices = @transform_8, window_bounds = array<i64: 1, 256>}, {pipeline_mode = #tpu.pipeline_mode<synchronous>, transform_indices = @transform_9, window_bounds = array<i64: 128, 4>}, {pipeline_mode = #tpu.pipeline_mode<synchronous>, transform_indices = @transform_10, window_bounds = array<i64: 1, 4>}, {pipeline_mode = #tpu.pipeline_mode<synchronous>, transform_indices = @transform_11, window_bounds = array<i64: 128, 1>}, {pipeline_mode = #tpu.pipeline_mode<synchronous>, transform_indices = @transform_12, window_bounds = array<i64: 1, 1>}, {transform_indices = @transform_13, window_bounds = array<i64: 16, 768>}, {transform_indices = @transform_14, window_bounds = array<i64: 16, 768>}, {transform_indices = @transform_15, window_bounds = array<i64: 16, 128>}, {transform_indices = @transform_16, window_bounds = array<i64: 16, 128>}, {transform_indices = @transform_17, window_bounds = array<i64: 16, 128>}, {transform_indices = @transform_18, window_bounds = array<i64: 16, 128>}]} {
    %c0 = arith.constant 0 : index
    %c0_0 = arith.constant 0 : index
    %0 = vector.load %arg1[%c0, %c0_0] : memref<16x256xbf16, #tpu.memory_space<vmem>>, vector<16x256xbf16>
    %c0_1 = arith.constant 0 : index
    %c0_2 = arith.constant 0 : index
    %1 = vector.load %arg2[%c0_1, %c0_2] : memref<256x768xbf16, #tpu.memory_space<vmem>>, vector<256x768xbf16>
    %cst = arith.constant dense<0.000000e+00> : vector<16x768xf32>
    %2 = tpu.matmul %0, %1, %cst {dimension_numbers = #tpu.dot_dimension_numbers<[1], [0], [0], [1], [0, 0, 1, 1], [], []>} : vector<16x256xbf16>, vector<256x768xbf16>, vector<16x768xf32> -> vector<16x768xf32>
    %3 = arith.truncf %2 : vector<16x768xf32> to vector<16x768xbf16>
    %c0_3 = arith.constant 0 : index
    %c0_4 = arith.constant 0 : index
    %4 = vector.load %arg4[%c0_3, %c0_4] : memref<768x768xbf16, #tpu.memory_space<vmem>>, vector<768x768xbf16>
    %cst_5 = arith.constant dense<0.000000e+00> : vector<16x768xf32>
    %5 = tpu.matmul %3, %4, %cst_5 {dimension_numbers = #tpu.dot_dimension_numbers<[1], [0], [0], [1], [0, 0, 1, 1], [], []>} : vector<16x768xbf16>, vector<768x768xbf16>, vector<16x768xf32> -> vector<16x768xf32>
    %c0_6 = arith.constant 0 : index
    %c0_7 = arith.constant 0 : index
    %6 = vector.load %arg5[%c0_6, %c0_7] : memref<1x768xf32, #tpu.memory_space<vmem>>, vector<1x768xf32>
    %7 = vector.broadcast %6 : vector<1x768xf32> to vector<16x768xf32>
    %8 = arith.addf %5, %7 : vector<16x768xf32>
    %9 = math.tanh %8 : vector<16x768xf32>
    %c0_8 = arith.constant 0 : index
    %c0_9 = arith.constant 0 : index
    %10 = vector.load %arg14[%c0_8, %c0_9] : memref<16x768xf32, #tpu.memory_space<vmem>>, vector<16x768xf32>
    tpu.vector_store %arg14[%c0_8, %c0_9], %9 {strides = array<i32>} : memref<16x768xf32, #tpu.memory_space<vmem>>, vector<16x768xf32>,
    %c0_10 = arith.constant 0 : index
    %c0_11 = arith.constant 0 : index
    %11 = vector.load %arg3[%c0_10, %c0_11] : memref<16x768xbf16, #tpu.memory_space<vmem>>, vector<16x768xbf16>
    %c0_12 = arith.constant 0 : index
    %c0_13 = arith.constant 0 : index
    %12 = vector.load %arg6[%c0_12, %c0_13] : memref<768x768xbf16, #tpu.memory_space<vmem>>, vector<768x768xbf16>
    %cst_14 = arith.constant dense<0.000000e+00> : vector<16x768xf32>
    %13 = tpu.matmul %11, %12, %cst_14 {dimension_numbers = #tpu.dot_dimension_numbers<[1], [0], [0], [1], [0, 0, 1, 1], [], []>} : vector<16x768xbf16>, vector<768x768xbf16>, vector<16x768xf32> -> vector<16x768xf32>
    %c0_15 = arith.constant 0 : index
    %c0_16 = arith.constant 0 : index
    %14 = vector.load %arg7[%c0_15, %c0_16] : memref<1x768xf32, #tpu.memory_space<vmem>>, vector<1x768xf32>
    %15 = vector.broadcast %14 : vector<1x768xf32> to vector<16x768xf32>
    %16 = arith.addf %13, %15 : vector<16x768xf32>
    %17 = math.tanh %16 : vector<16x768xf32>
    %c0_17 = arith.constant 0 : index
    %c0_18 = arith.constant 0 : index
    %18 = vector.load %arg15[%c0_17, %c0_18] : memref<16x768xf32, #tpu.memory_space<vmem>>, vector<16x768xf32>
    tpu.vector_store %arg15[%c0_17, %c0_18], %17 {strides = array<i32>} : memref<16x768xf32, #tpu.memory_space<vmem>>, vector<16x768xf32>,
    %19 = tpu.concatenate %9, %17 in 0 : vector<16x768xf32>, vector<16x768xf32> -> vector<32x768xf32>
    %20 = arith.truncf %19 : vector<32x768xf32> to vector<32x768xbf16>
    %c0_19 = arith.constant 0 : index
    %c0_20 = arith.constant 0 : index
    %21 = vector.load %arg8[%c0_19, %c0_20] : memref<768x256xbf16, #tpu.memory_space<vmem>>, vector<768x256xbf16>
    %cst_21 = arith.constant dense<0.000000e+00> : vector<32x256xf32>
    %22 = tpu.matmul %20, %21, %cst_21 {dimension_numbers = #tpu.dot_dimension_numbers<[1], [0], [0], [1], [0, 0, 1, 1], [], []>} : vector<32x768xbf16>, vector<768x256xbf16>, vector<32x256xf32> -> vector<32x256xf32>
    %c0_22 = arith.constant 0 : index
    %c0_23 = arith.constant 0 : index
    %23 = vector.load %arg9[%c0_22, %c0_23] : memref<1x256xf32, #tpu.memory_space<vmem>>, vector<1x256xf32>
    %24 = vector.broadcast %23 : vector<1x256xf32> to vector<32x256xf32>
    %25 = arith.addf %22, %24 : vector<32x256xf32>
    %26 = vector.extract_strided_slice %25 {offsets = [0, 0], sizes = [16, 128], strides = [1, 1]} : vector<32x256xf32> to vector<16x128xf32>
    %27 = vector.extract_strided_slice %25 {offsets = [16, 128], sizes = [16, 128], strides = [1, 1]} : vector<32x256xf32> to vector<16x128xf32>
    %c0_24 = arith.constant 0 : index
    %c0_25 = arith.constant 0 : index
    %28 = vector.load %arg16[%c0_24, %c0_25] : memref<16x128xf32, #tpu.memory_space<vmem>>, vector<16x128xf32>
    tpu.vector_store %arg16[%c0_24, %c0_25], %26 {strides = array<i32>} : memref<16x128xf32, #tpu.memory_space<vmem>>, vector<16x128xf32>,
    %c0_26 = arith.constant 0 : index
    %c0_27 = arith.constant 0 : index
    %29 = vector.load %arg17[%c0_26, %c0_27] : memref<16x128xf32, #tpu.memory_space<vmem>>, vector<16x128xf32>
    tpu.vector_store %arg17[%c0_26, %c0_27], %27 {strides = array<i32>} : memref<16x128xf32, #tpu.memory_space<vmem>>, vector<16x128xf32>,
    %30 = tpu.concatenate %26, %27 in 0 : vector<16x128xf32>, vector<16x128xf32> -> vector<32x128xf32>
    %31 = arith.truncf %30 : vector<32x128xf32> to vector<32x128xbf16>
    %c0_28 = arith.constant 0 : index
    %c0_29 = arith.constant 0 : index
    %32 = vector.load %arg10[%c0_28, %c0_29] : memref<128x4xbf16, #tpu.memory_space<vmem>>, vector<128x4xbf16>
    %cst_30 = arith.constant dense<0.000000e+00> : vector<32x4xf32>
    %33 = tpu.matmul %31, %32, %cst_30 {dimension_numbers = #tpu.dot_dimension_numbers<[1], [0], [0], [1], [0, 0, 1, 1], [], []>} : vector<32x128xbf16>, vector<128x4xbf16>, vector<32x4xf32> -> vector<32x4xf32>
    %c0_31 = arith.constant 0 : index
    %c0_32 = arith.constant 0 : index
    %34 = vector.load %arg11[%c0_31, %c0_32] : memref<1x4xf32, #tpu.memory_space<vmem>>, vector<1x4xf32>
    %35 = vector.broadcast %34 : vector<1x4xf32> to vector<32x4xf32>
    %36 = arith.addf %33, %35 : vector<32x4xf32>
    %37 = vector.extract_strided_slice %36 {offsets = [0, 0], sizes = [16, 2], strides = [1, 1]} : vector<32x4xf32> to vector<16x2xf32>
    %38 = vector.extract_strided_slice %36 {offsets = [16, 2], sizes = [16, 2], strides = [1, 1]} : vector<32x4xf32> to vector<16x2xf32>
    %39 = arith.mulf %26, %26 : vector<16x128xf32>
    %cst_33 = arith.constant dense<0.000000e+00> : vector<16xf32>
    %40 = vector.multi_reduction <add>, %39, %cst_33 [1] : vector<16x128xf32> to vector<16xf32>
    %41 = vector.shape_cast %40 : vector<16xf32> to vector<16x1xf32>
    %cst_34 = arith.constant 9.99999993E-9 : f32
    %42 = vector.broadcast %cst_34 : f32 to vector<16x1xf32>
    %43 = arith.addf %41, %42 : vector<16x1xf32>
    %44 = math.rsqrt %43 : vector<16x1xf32>
    %45 = vector.broadcast %44 : vector<16x1xf32> to vector<16x128xf32>
    %46 = arith.mulf %26, %45 : vector<16x128xf32>
    %47 = arith.mulf %27, %27 : vector<16x128xf32>
    %cst_35 = arith.constant dense<0.000000e+00> : vector<16xf32>
    %48 = vector.multi_reduction <add>, %47, %cst_35 [1] : vector<16x128xf32> to vector<16xf32>
    %49 = vector.shape_cast %48 : vector<16xf32> to vector<16x1xf32>
    %cst_36 = arith.constant 9.99999993E-9 : f32
    %50 = vector.broadcast %cst_36 : f32 to vector<16x1xf32>
    %51 = arith.addf %49, %50 : vector<16x1xf32>
    %52 = math.rsqrt %51 : vector<16x1xf32>
    %53 = vector.broadcast %52 : vector<16x1xf32> to vector<16x128xf32>
    %54 = arith.mulf %27, %53 : vector<16x128xf32>
    %55 = arith.mulf %46, %54 : vector<16x128xf32>
    %cst_37 = arith.constant dense<0.000000e+00> : vector<16xf32>
    %56 = vector.multi_reduction <add>, %55, %cst_37 [1] : vector<16x128xf32> to vector<16xf32>
    %57 = vector.shape_cast %56 : vector<16xf32> to vector<16x1xf32>
    %58 = arith.addf %26, %27 : vector<16x128xf32>
    %cst_38 = arith.constant 5.000000e-01 : f32
    %59 = vector.broadcast %cst_38 : f32 to vector<16x128xf32>
    %60 = arith.mulf %59, %58 : vector<16x128xf32>
    %c0_39 = arith.constant 0 : index
    %c0_40 = arith.constant 0 : index
    %61 = vector.load %arg18[%c0_39, %c0_40] : memref<16x128xf32, #tpu.memory_space<vmem>>, vector<16x128xf32>
    tpu.vector_store %arg18[%c0_39, %c0_40], %60 {strides = array<i32>} : memref<16x128xf32, #tpu.memory_space<vmem>>, vector<16x128xf32>,
    %62 = arith.mulf %60, %60 : vector<16x128xf32>
    %63 = arith.mulf %60, %62 : vector<16x128xf32>
    %cst_41 = arith.constant 4.471500e-02 : f32
    %64 = vector.broadcast %cst_41 : f32 to vector<16x128xf32>
    %65 = arith.mulf %64, %63 : vector<16x128xf32>
    %66 = arith.addf %60, %65 : vector<16x128xf32>
    %cst_42 = arith.constant 0.797884583 : f32
    %67 = vector.broadcast %cst_42 : f32 to vector<16x128xf32>
    %68 = arith.mulf %67, %66 : vector<16x128xf32>
    %69 = math.tanh %68 : vector<16x128xf32>
    %cst_43 = arith.constant 1.000000e+00 : f32
    %70 = vector.broadcast %cst_43 : f32 to vector<16x128xf32>
    %71 = arith.addf %70, %69 : vector<16x128xf32>
    %cst_44 = arith.constant 5.000000e-01 : f32
    %72 = vector.broadcast %cst_44 : f32 to vector<16x128xf32>
    %73 = arith.mulf %72, %71 : vector<16x128xf32>
    %74 = arith.mulf %60, %73 : vector<16x128xf32>
    %75 = arith.truncf %74 : vector<16x128xf32> to vector<16x128xbf16>
    %c0_45 = arith.constant 0 : index
    %c0_46 = arith.constant 0 : index
    %76 = vector.load %arg12[%c0_45, %c0_46] : memref<128x1xbf16, #tpu.memory_space<vmem>>, vector<128x1xbf16>
    %cst_47 = arith.constant dense<0.000000e+00> : vector<16x1xf32>
    %77 = tpu.matmul %75, %76, %cst_47 {dimension_numbers = #tpu.dot_dimension_numbers<[1], [0], [0], [1], [0, 0, 1, 1], [], []>} : vector<16x128xbf16>, vector<128x1xbf16>, vector<16x1xf32> -> vector<16x1xf32>
    %c0_48 = arith.constant 0 : index
    %c0_49 = arith.constant 0 : index
    %78 = vector.load %arg13[%c0_48, %c0_49] : memref<1x1xf32, #tpu.memory_space<vmem>>, vector<1x1xf32>
    %79 = vector.broadcast %78 : vector<1x1xf32> to vector<16x1xf32>
    %80 = arith.addf %77, %79 : vector<16x1xf32>
    %cst_50 = arith.constant 0.000000e+00 : f32
    %81 = vector.broadcast %cst_50 : f32 to vector<16x122xf32>
    %82 = tpu.concatenate %37, %38, %57, %80, %81 in 1 : vector<16x2xf32>, vector<16x2xf32>, vector<16x1xf32>, vector<16x1xf32>, vector<16x122xf32> -> vector<16x128xf32>
    %c0_51 = arith.constant 0 : index
    %c0_52 = arith.constant 0 : index
    %83 = vector.load %arg19[%c0_51, %c0_52] : memref<16x128xf32, #tpu.memory_space<vmem>>, vector<16x128xf32>
    tpu.vector_store %arg19[%c0_51, %c0_52], %82 {strides = array<i32>} : memref<16x128xf32, #tpu.memory_space<vmem>>, vector<16x128xf32>,
    return
  }
  func.func @transform_0(%arg0: i32) -> (i32, i32) {
    %c0_i32 = arith.constant 0 : i32
    return %arg0, %arg0 : i32, i32
  }
  func.func @transform_1(%arg0: i32) -> (i32, i32) {
    %c0_i32 = arith.constant 0 : i32
    %c0_i32_0 = arith.constant 0 : i32
    return %arg0, %c0_i32 : i32, i32
  }
  func.func @transform_2(%arg0: i32) -> (i32, i32) {
    %c0_i32 = arith.constant 0 : i32
    %c0_i32_0 = arith.constant 0 : i32
    return %arg0, %c0_i32 : i32, i32
  }
  func.func @transform_3(%arg0: i32) -> (i32, i32) {
    %c0_i32 = arith.constant 0 : i32
    %c0_i32_0 = arith.constant 0 : i32
    %c0_i32_1 = arith.constant 0 : i32
    return %c0_i32, %c0_i32_0 : i32, i32
  }
  func.func @transform_4(%arg0: i32) -> (i32, i32) {
    %c0_i32 = arith.constant 0 : i32
    %c0_i32_0 = arith.constant 0 : i32
    %c0_i32_1 = arith.constant 0 : i32
    return %c0_i32, %c0_i32_0 : i32, i32
  }
  func.func @transform_5(%arg0: i32) -> (i32, i32) {
    %c0_i32 = arith.constant 0 : i32
    %c0_i32_0 = arith.constant 0 : i32
    %c0_i32_1 = arith.constant 0 : i32
    return %c0_i32, %c0_i32_0 : i32, i32
  }
  func.func @transform_6(%arg0: i32) -> (i32, i32) {
    %c0_i32 = arith.constant 0 : i32
    %c0_i32_0 = arith.constant 0 : i32
    %c0_i32_1 = arith.constant 0 : i32
    return %c0_i32, %c0_i32_0 : i32, i32
  }
  func.func @transform_7(%arg0: i32) -> (i32, i32) {
    %c0_i32 = arith.constant 0 : i32
    %c0_i32_0 = arith.constant 0 : i32
    %c0_i32_1 = arith.constant 0 : i32
    return %c0_i32, %c0_i32_0 : i32, i32
  }
  func.func @transform_8(%arg0: i32) -> (i32, i32) {
    %c0_i32 = arith.constant 0 : i32
    %c0_i32_0 = arith.constant 0 : i32
    %c0_i32_1 = arith.constant 0 : i32
    return %c0_i32, %c0_i32_0 : i32, i32
  }
  func.func @transform_9(%arg0: i32) -> (i32, i32) {
    %c0_i32 = arith.constant 0 : i32
    %c0_i32_0 = arith.constant 0 : i32
    %c0_i32_1 = arith.constant 0 : i32
    return %c0_i32, %c0_i32_0 : i32, i32
  }
  func.func @transform_10(%arg0: i32) -> (i32, i32) {
    %c0_i32 = arith.constant 0 : i32
    %c0_i32_0 = arith.constant 0 : i32
    %c0_i32_1 = arith.constant 0 : i32
    return %c0_i32, %c0_i32_0 : i32, i32
  }
  func.func @transform_11(%arg0: i32) -> (i32, i32) {
    %c0_i32 = arith.constant 0 : i32
    %c0_i32_0 = arith.constant 0 : i32
    %c0_i32_1 = arith.constant 0 : i32
    return %c0_i32, %c0_i32_0 : i32, i32
  }
  func.func @transform_12(%arg0: i32) -> (i32, i32) {
    %c0_i32 = arith.constant 0 : i32
    %c0_i32_0 = arith.constant 0 : i32
    %c0_i32_1 = arith.constant 0 : i32
    return %c0_i32, %c0_i32_0 : i32, i32
  }
  func.func @transform_13(%arg0: i32) -> (i32, i32) {
    %c0_i32 = arith.constant 0 : i32
    %c0_i32_0 = arith.constant 0 : i32
    return %arg0, %c0_i32 : i32, i32
  }
  func.func @transform_14(%arg0: i32) -> (i32, i32) {
    %c0_i32 = arith.constant 0 : i32
    %c0_i32_0 = arith.constant 0 : i32
    return %arg0, %c0_i32 : i32, i32
  }
  func.func @transform_15(%arg0: i32) -> (i32, i32) {
    %c0_i32 = arith.constant 0 : i32
    %c0_i32_0 = arith.constant 0 : i32
    return %arg0, %c0_i32 : i32, i32
  }
  func.func @transform_16(%arg0: i32) -> (i32, i32) {
    %c0_i32 = arith.constant 0 : i32
    %c0_i32_0 = arith.constant 0 : i32
    return %arg0, %c0_i32 : i32, i32
  }
  func.func @transform_17(%arg0: i32) -> (i32, i32) {
    %c0_i32 = arith.constant 0 : i32
    %c0_i32_0 = arith.constant 0 : i32
    return %arg0, %c0_i32 : i32, i32
  }
  func.func @transform_18(%arg0: i32) -> (i32, i32) {
    %c0_i32 = arith.constant 0 : i32
    %c0_i32_0 = arith.constant 0 : i32
    return %arg0, %c0_i32 : i32, i32
  }
}

</mosaic_0001>

<llo_original>
// kernel: text_image_weibo_forward.1
$region0: #{text_image_weibo_forward.1}
  #allocation0 [shape = 'u32[]', space=smem, size = 0x4, offset = 0x4, fixed_abs, tag = 'smem constant byte address 0x4 - core index']
  #allocation1 [shape = 'u32[144,128]{1,0:T(1,128)}', space=vmem, size = 0x12000, scoped, tag = 'internal scratch']
  #allocation2 [shape = 'f32[1,1]{1,0:T(1,128)S(1)}', space=vmem, size = 0x200, scoped, tag = 'scoped memory for text_image_weibo_forward.1']
  %s0 = inlined_call_operand.vmem [shape: bf16[16,256], index: 0, kind: input, shape index: {}]
  %s1 = inlined_call_operand.vmem [shape: bf16[256,768], index: 1, kind: input, shape index: {}]
  %s2 = inlined_call_operand.vmem [shape: bf16[16,768], index: 2, kind: input, shape index: {}]
  %s3 = inlined_call_operand.vmem [shape: bf16[768,768], index: 3, kind: input, shape index: {}]
  %s4 = inlined_call_operand.vmem [shape: f32[1,768], index: 4, kind: input, shape index: {}]
  %s5 = inlined_call_operand.vmem [shape: bf16[768,768], index: 5, kind: input, shape index: {}]
  %s6 = inlined_call_operand.vmem [shape: f32[1,768], index: 6, kind: input, shape index: {}]
  %s7 = inlined_call_operand.vmem [shape: bf16[768,256], index: 7, kind: input, shape index: {}]
  %s8 = inlined_call_operand.vmem [shape: f32[1,256], index: 8, kind: input, shape index: {}]
  %s9 = inlined_call_operand.vmem [shape: bf16[128,4], index: 9, kind: input, shape index: {}]
  %s10 = inlined_call_operand.vmem [shape: f32[1,4], index: 10, kind: input, shape index: {}]
  %s11 = inlined_call_operand.vmem [shape: bf16[128,1], index: 11, kind: input, shape index: {}]
  %s12 = inlined_call_operand.<no memory space> [shape: f32[1,1], index: 12, kind: input, shape index: {}]
  %s13 = inlined_call_operand.hbm [shape: f32[16,768], index: 13, kind: output, shape index: {0}]
  %s14 = inlined_call_operand.hbm [shape: f32[16,768], index: 14, kind: output, shape index: {1}]
  %s15 = inlined_call_operand.hbm [shape: f32[16,128], index: 15, kind: output, shape index: {2}]
  %s16 = inlined_call_operand.hbm [shape: f32[16,128], index: 16, kind: output, shape index: {3}]
  %s17 = inlined_call_operand.hbm [shape: f32[16,128], index: 17, kind: output, shape index: {4}]
  %s18 = inlined_call_operand.vmem [shape: f32[16,128], index: 18, kind: output, shape index: {5}]
  %19 = xla_tuple %s13, %s14, %s15, %s16, %s17, %s18
  %s20 = sld [smem:[#allocation0]]
  $region102: #{text_image_weibo_forward.1} parent=0
    _
  %s22 = ssub.s32 1, %s20
  %s23 = scalar_select 0, %s22, %s20
  %v24 = vstv %s12
  %25 = vst [vmem:[#allocation2] sm:$0x1] %v24
  $region1: #{text_image_weibo_forward.1} parent=0
    #allocation3 [shape = 'u8[49152]{0}', space=vmem, size = 0xc000, scoped, tag = 'output window, operand 0, single buffered']
    #allocation4 [shape = 's32[1]{0}', space=sflag, size = 0x4, scoped, tag = 'scoped memory for text_image_weibo_forward.1']
    #allocation5 [shape = 'u8[49152]{0}', space=vmem, size = 0xc000, scoped, tag = 'output window, operand 1, single buffered']
    #allocation6 [shape = 's32[1]{0}', space=sflag, size = 0x4, scoped, tag = 'scoped memory for text_image_weibo_forward.1']
    #allocation7 [shape = 'u8[8192]{0}', space=vmem, size = 0x2000, scoped, tag = 'output window, operand 2, single buffered']
    #allocation8 [shape = 'u8[8192]{0}', space=vmem, size = 0x2000, scoped, tag = 'output window, operand 3, single buffered']
    #allocation9 [shape = 's32[1]{0}', space=sflag, size = 0x4, scoped, tag = 'scoped memory for text_image_weibo_forward.1']
    #allocation10 [shape = 'u8[8192]{0}', space=vmem, size = 0x2000, scoped, tag = 'output window, operand 4, single buffered']
    %26 = vsyncpa [#allocation4], 0
    %27 = vsyncpa [#allocation6], 0
    %28 = vsyncpa [#allocation9], 0
    // Predicated region
    $region2: #{text_image_weibo_forward.1} parent=1 // pred_check
      _
    $region3: #{text_image_weibo_forward.1} parent=1 // pred_check_branch
      %30 = sbr.rel (0) target = $region5
    $region4: #{text_image_weibo_forward.1} parent=1 // pred_region
      _
    $region5: #{text_image_weibo_forward.1} parent=1 // pred_fallthru
      _
    // Predicated region
    $region6: #{text_image_weibo_forward.1} parent=1 // pred_check
      _
    $region7: #{text_image_weibo_forward.1} parent=1 // pred_check_branch
      %32 = sbr.rel (0) target = $region9
    $region8: #{text_image_weibo_forward.1} parent=1 // pred_region
      _
    $region9: #{text_image_weibo_forward.1} parent=1 // pred_fallthru
      _
    // Predicated region
    $region10: #{text_image_weibo_forward.1} parent=1 // pred_check
      _
    $region11: #{text_image_weibo_forward.1} parent=1 // pred_check_branch
      %34 = sbr.rel (0) target = $region13
    $region12: #{text_image_weibo_forward.1} parent=1 // pred_region
      _
    $region13: #{text_image_weibo_forward.1} parent=1 // pred_fallthru
      _
    // Predicated region
    $region14: #{text_image_weibo_forward.1} parent=1 // pred_check
      _
    $region15: #{text_image_weibo_forward.1} parent=1 // pred_check_branch
      %36 = sbr.rel (0) target = $region17
    $region16: #{text_image_weibo_forward.1} parent=1 // pred_region
      _
    $region17: #{text_image_weibo_forward.1} parent=1 // pred_fallthru
      _
    // Predicated region
    $region18: #{text_image_weibo_forward.1} parent=1 // pred_check
      _
    $region19: #{text_image_weibo_forward.1} parent=1 // pred_check_branch
      %38 = sbr.rel (0) target = $region21
    $region20: #{text_image_weibo_forward.1} parent=1 // pred_region
      _
    $region21: #{text_image_weibo_forward.1} parent=1 // pred_fallthru
      _
    // Predicated region
    $region22: #{text_image_weibo_forward.1} parent=1 // pred_check
      _
    $region23: #{text_image_weibo_forward.1} parent=1 // pred_check_branch
      %40 = sbr.rel (0) target = $region25
    $region24: #{text_image_weibo_forward.1} parent=1 // pred_region
      _
    $region25: #{text_image_weibo_forward.1} parent=1 // pred_fallthru
      _
    // Predicated region
    $region26: #{text_image_weibo_forward.1} parent=1 // pred_check
      _
    $region27: #{text_image_weibo_forward.1} parent=1 // pred_check_branch
      %42 = sbr.rel (0) target = $region29
    $region28: #{text_image_weibo_forward.1} parent=1 // pred_region
      _
    $region29: #{text_image_weibo_forward.1} parent=1 // pred_fallthru
      _
    // Predicated region
    $region30: #{text_image_weibo_forward.1} parent=1 // pred_check
      _
    $region31: #{text_image_weibo_forward.1} parent=1 // pred_check_branch
      %44 = sbr.rel (0) target = $region33
    $region32: #{text_image_weibo_forward.1} parent=1 // pred_region
      _
    $region33: #{text_image_weibo_forward.1} parent=1 // pred_fallthru
      _
    // Predicated region
    $region34: #{text_image_weibo_forward.1} parent=1 // pred_check
      _
    $region35: #{text_image_weibo_forward.1} parent=1 // pred_check_branch
      %46 = sbr.rel (0) target = $region37
    $region36: #{text_image_weibo_forward.1} parent=1 // pred_region
      _
    $region37: #{text_image_weibo_forward.1} parent=1 // pred_fallthru
      _
    // Predicated region
    $region38: #{text_image_weibo_forward.1} parent=1 // pred_check
      _
    $region39: #{text_image_weibo_forward.1} parent=1 // pred_check_branch
      %48 = sbr.rel (0) target = $region41
    $region40: #{text_image_weibo_forward.1} parent=1 // pred_region
      _
    $region41: #{text_image_weibo_forward.1} parent=1 // pred_fallthru
      _
    // Predicated region
    $region42: #{text_image_weibo_forward.1} parent=1 // pred_check
      _
    $region43: #{text_image_weibo_forward.1} parent=1 // pred_check_branch
      %50 = sbr.rel (0) target = $region45
    $region44: #{text_image_weibo_forward.1} parent=1 // pred_region
      _
    $region45: #{text_image_weibo_forward.1} parent=1 // pred_fallthru
      _
    // Predicated region
    $region46: #{text_image_weibo_forward.1} parent=1 // pred_check
      _
    $region47: #{text_image_weibo_forward.1} parent=1 // pred_check_branch
      %52 = sbr.rel (0) target = $region49
    $region48: #{text_image_weibo_forward.1} parent=1 // pred_region
      _
    $region49: #{text_image_weibo_forward.1} parent=1 // pred_fallthru
      _
    // Predicated region
    $region50: #{text_image_weibo_forward.1} parent=1 // pred_check
      _
    $region51: #{text_image_weibo_forward.1} parent=1 // pred_check_branch
      %54 = sbr.rel (0) target = $region53
    $region52: #{text_image_weibo_forward.1} parent=1 // pred_region
      _
    $region53: #{text_image_weibo_forward.1} parent=1 // pred_fallthru
      _
    %v56 = vld [vmem:[%s0] sm:$0xff]
    %v57 = vld [vmem:[%s0 + $0x8] sm:$0xff]
    %v58 = vld [vmem:[%s1] sm:$0xff]
    %v59 = vld [vmem:[%s1 + $0x8] sm:$0xff]
    %v60 = vld [vmem:[%s1 + $0x10] sm:$0xff]
    %v61 = vld [vmem:[%s1 + $0x18] sm:$0xff]
    %v62 = vld [vmem:[%s1 + $0x20] sm:$0xff]
    %v63 = vld [vmem:[%s1 + $0x28] sm:$0xff]
    %v64 = vld [vmem:[%s1 + $0x30] sm:$0xff]
    %v65 = vld [vmem:[%s1 + $0x38] sm:$0xff]
    %v66 = vld [vmem:[%s1 + $0x40] sm:$0xff]
    %v67 = vld [vmem:[%s1 + $0x48] sm:$0xff]
    %v68 = vld [vmem:[%s1 + $0x50] sm:$0xff]
    %v69 = vld [vmem:[%s1 + $0x58] sm:$0xff]
    %v70 = vld [vmem:[%s1 + $0x60] sm:$0xff]
    %v71 = vld [vmem:[%s1 + $0x68] sm:$0xff]
    %v72 = vld [vmem:[%s1 + $0x70] sm:$0xff]
    %v73 = vld [vmem:[%s1 + $0x78] sm:$0xff]
    %v74 = vld [vmem:[%s1 + $0x80] sm:$0xff]
    %v75 = vld [vmem:[%s1 + $0x88] sm:$0xff]
    %v76 = vld [vmem:[%s1 + $0x90] sm:$0xff]
    %v77 = vld [vmem:[%s1 + $0x98] sm:$0xff]
    %v78 = vld [vmem:[%s1 + $0xa0] sm:$0xff]
    %v79 = vld [vmem:[%s1 + $0xa8] sm:$0xff]
    %v80 = vld [vmem:[%s1 + $0xb0] sm:$0xff]
    %v81 = vld [vmem:[%s1 + $0xb8] sm:$0xff]
    %v82 = vld [vmem:[%s1 + $0xc0] sm:$0xff]
    %v83 = vld [vmem:[%s1 + $0xc8] sm:$0xff]
    %v84 = vld [vmem:[%s1 + $0xd0] sm:$0xff]
    %v85 = vld [vmem:[%s1 + $0xd8] sm:$0xff]
    %v86 = vld [vmem:[%s1 + $0xe0] sm:$0xff]
    %v87 = vld [vmem:[%s1 + $0xe8] sm:$0xff]
    %v88 = vld [vmem:[%s1 + $0xf0] sm:$0xff]
    %v89 = vld [vmem:[%s1 + $0xf8] sm:$0xff]
    %v90 = vld [vmem:[%s1 + $0x100] sm:$0xff]
    %v91 = vld [vmem:[%s1 + $0x108] sm:$0xff]
    %v92 = vld [vmem:[%s1 + $0x110] sm:$0xff]
    %v93 = vld [vmem:[%s1 + $0x118] sm:$0xff]
    %v94 = vld [vmem:[%s1 + $0x120] sm:$0xff]
    %v95 = vld [vmem:[%s1 + $0x128] sm:$0xff]
    %v96 = vld [vmem:[%s1 + $0x130] sm:$0xff]
    %v97 = vld [vmem:[%s1 + $0x138] sm:$0xff]
    %v98 = vld [vmem:[%s1 + $0x140] sm:$0xff]
    %v99 = vld [vmem:[%s1 + $0x148] sm:$0xff]
    %v100 = vld [vmem:[%s1 + $0x150] sm:$0xff]
    %v101 = vld [vmem:[%s1 + $0x158] sm:$0xff]
    %v102 = vld [vmem:[%s1 + $0x160] sm:$0xff]
    %v103 = vld [vmem:[%s1 + $0x168] sm:$0xff]
    %v104 = vld [vmem:[%s1 + $0x170] sm:$0xff]
    %v105 = vld [vmem:[%s1 + $0x178] sm:$0xff]
    %v106 = vld [vmem:[%s1 + $0x180] sm:$0xff]
    %v107 = vld [vmem:[%s1 + $0x188] sm:$0xff]
    %v108 = vld [vmem:[%s1 + $0x190] sm:$0xff]
    %v109 = vld [vmem:[%s1 + $0x198] sm:$0xff]
    %v110 = vld [vmem:[%s1 + $0x1a0] sm:$0xff]
    %v111 = vld [vmem:[%s1 + $0x1a8] sm:$0xff]
    %v112 = vld [vmem:[%s1 + $0x1b0] sm:$0xff]
    %v113 = vld [vmem:[%s1 + $0x1b8] sm:$0xff]
    %v114 = vld [vmem:[%s1 + $0x1c0] sm:$0xff]
    %v115 = vld [vmem:[%s1 + $0x1c8] sm:$0xff]
    %v116 = vld [vmem:[%s1 + $0x1d0] sm:$0xff]
    %v117 = vld [vmem:[%s1 + $0x1d8] sm:$0xff]
    %v118 = vld [vmem:[%s1 + $0x1e0] sm:$0xff]
    %v119 = vld [vmem:[%s1 + $0x1e8] sm:$0xff]
    %v120 = vld [vmem:[%s1 + $0x1f0] sm:$0xff]
    %v121 = vld [vmem:[%s1 + $0x1f8] sm:$0xff]
    %v122 = vld [vmem:[%s1 + $0x200] sm:$0xff]
    %v123 = vld [vmem:[%s1 + $0x208] sm:$0xff]
    %v124 = vld [vmem:[%s1 + $0x210] sm:$0xff]
    %v125 = vld [vmem:[%s1 + $0x218] sm:$0xff]
    %v126 = vld [vmem:[%s1 + $0x220] sm:$0xff]
    %v127 = vld [vmem:[%s1 + $0x228] sm:$0xff]
    %v128 = vld [vmem:[%s1 + $0x230] sm:$0xff]
    %v129 = vld [vmem:[%s1 + $0x238] sm:$0xff]
    %v130 = vld [vmem:[%s1 + $0x240] sm:$0xff]
    %v131 = vld [vmem:[%s1 + $0x248] sm:$0xff]
    %v132 = vld [vmem:[%s1 + $0x250] sm:$0xff]
    %v133 = vld [vmem:[%s1 + $0x258] sm:$0xff]
    %v134 = vld [vmem:[%s1 + $0x260] sm:$0xff]
    %v135 = vld [vmem:[%s1 + $0x268] sm:$0xff]
    %v136 = vld [vmem:[%s1 + $0x270] sm:$0xff]
    %v137 = vld [vmem:[%s1 + $0x278] sm:$0xff]
    %v138 = vld [vmem:[%s1 + $0x280] sm:$0xff]
    %v139 = vld [vmem:[%s1 + $0x288] sm:$0xff]
    %v140 = vld [vmem:[%s1 + $0x290] sm:$0xff]
    %v141 = vld [vmem:[%s1 + $0x298] sm:$0xff]
    %v142 = vld [vmem:[%s1 + $0x2a0] sm:$0xff]
    %v143 = vld [vmem:[%s1 + $0x2a8] sm:$0xff]
    %v144 = vld [vmem:[%s1 + $0x2b0] sm:$0xff]
    %v145 = vld [vmem:[%s1 + $0x2b8] sm:$0xff]
    %v146 = vld [vmem:[%s1 + $0x2c0] sm:$0xff]
    %v147 = vld [vmem:[%s1 + $0x2c8] sm:$0xff]
    %v148 = vld [vmem:[%s1 + $0x2d0] sm:$0xff]
    %v149 = vld [vmem:[%s1 + $0x2d8] sm:$0xff]
    %v150 = vld [vmem:[%s1 + $0x2e0] sm:$0xff]
    %v151 = vld [vmem:[%s1 + $0x2e8] sm:$0xff]
    %v152 = vld [vmem:[%s1 + $0x2f0] sm:$0xff]
    %v153 = vld [vmem:[%s1 + $0x2f8] sm:$0xff]
    %v156 = vunpack.c.l.b16 %v56
    %v157 = vunpack.c.h.b16 %v56
    %v158 = vunpack.c.l.b16 %v57
    %v159 = vunpack.c.h.b16 %v57
    %v160 = vpack.c.b16 %v158, %v156
    %v161 = vpack.c.b16 %v159, %v157
    %v260 = vunpack.c.l.b16 %v58
    %v261 = vunpack.c.h.b16 %v58
    %v262 = vunpack.c.l.b16 %v59
    %v263 = vunpack.c.h.b16 %v59
    %v264 = vunpack.c.l.b16 %v60
    %v265 = vunpack.c.h.b16 %v60
    %v266 = vunpack.c.l.b16 %v61
    %v267 = vunpack.c.h.b16 %v61
    %v268 = vunpack.c.l.b16 %v62
    %v269 = vunpack.c.h.b16 %v62
    %v270 = vunpack.c.l.b16 %v63
    %v271 = vunpack.c.h.b16 %v63
    %v272 = vunpack.c.l.b16 %v64
    %v273 = vunpack.c.h.b16 %v64
    %v274 = vunpack.c.l.b16 %v65
    %v275 = vunpack.c.h.b16 %v65
    %v276 = vunpack.c.l.b16 %v66
    %v277 = vunpack.c.h.b16 %v66
    %v278 = vunpack.c.l.b16 %v67
    %v279 = vunpack.c.h.b16 %v67
    %v280 = vunpack.c.l.b16 %v68
    %v281 = vunpack.c.h.b16 %v68
    %v282 = vunpack.c.l.b16 %v69
    %v283 = vunpack.c.h.b16 %v69
    %v284 = vunpack.c.l.b16 %v70
    %v285 = vunpack.c.h.b16 %v70
    %v286 = vunpack.c.l.b16 %v71
    %v287 = vunpack.c.h.b16 %v71
    %v288 = vunpack.c.l.b16 %v72
    %v289 = vunpack.c.h.b16 %v72
    %v290 = vunpack.c.l.b16 %v73
    %v291 = vunpack.c.h.b16 %v73
    %v292 = vunpack.c.l.b16 %v74
    %v293 = vunpack.c.h.b16 %v74
    %v294 = vunpack.c.l.b16 %v75
    %v295 = vunpack.c.h.b16 %v75
    %v296 = vunpack.c.l.b16 %v76
    %v297 = vunpack.c.h.b16 %v76
    %v298 = vunpack.c.l.b16 %v77
    %v299 = vunpack.c.h.b16 %v77
    %v300 = vunpack.c.l.b16 %v78
    %v301 = vunpack.c.h.b16 %v78
    %v302 = vunpack.c.l.b16 %v79
    %v303 = vunpack.c.h.b16 %v79
    %v304 = vunpack.c.l.b16 %v80
    %v305 = vunpack.c.h.b16 %v80
    %v306 = vunpack.c.l.b16 %v81
    %v307 = vunpack.c.h.b16 %v81
    %v308 = vunpack.c.l.b16 %v82
    %v309 = vunpack.c.h.b16 %v82
    %v310 = vunpack.c.l.b16 %v83
    %v311 = vunpack.c.h.b16 %v83
    %v312 = vunpack.c.l.b16 %v84
    %v313 = vunpack.c.h.b16 %v84
    %v314 = vunpack.c.l.b16 %v85
    %v315 = vunpack.c.h.b16 %v85
    %v316 = vunpack.c.l.b16 %v86
    %v317 = vunpack.c.h.b16 %v86
    %v318 = vunpack.c.l.b16 %v87
    %v319 = vunpack.c.h.b16 %v87
    %v320 = vunpack.c.l.b16 %v88
    %v321 = vunpack.c.h.b16 %v88
    %v322 = vunpack.c.l.b16 %v89
    %v323 = vunpack.c.h.b16 %v89
    %v324 = vunpack.c.l.b16 %v90
    %v325 = vunpack.c.h.b16 %v90
    %v326 = vunpack.c.l.b16 %v91
    %v327 = vunpack.c.h.b16 %v91
    %v328 = vunpack.c.l.b16 %v92
    %v329 = vunpack.c.h.b16 %v92
    %v330 = vunpack.c.l.b16 %v93
    %v331 = vunpack.c.h.b16 %v93
    %v332 = vunpack.c.l.b16 %v94
    %v333 = vunpack.c.h.b16 %v94
    %v334 = vunpack.c.l.b16 %v95
    %v335 = vunpack.c.h.b16 %v95
    %v336 = vunpack.c.l.b16 %v96
    %v337 = vunpack.c.h.b16 %v96
    %v338 = vunpack.c.l.b16 %v97
    %v339 = vunpack.c.h.b16 %v97
    %v340 = vunpack.c.l.b16 %v98
    %v341 = vunpack.c.h.b16 %v98
    %v342 = vunpack.c.l.b16 %v99
    %v343 = vunpack.c.h.b16 %v99
    %v344 = vunpack.c.l.b16 %v100
    %v345 = vunpack.c.h.b16 %v100
    %v346 = vunpack.c.l.b16 %v101
    %v347 = vunpack.c.h.b16 %v101
    %v348 = vunpack.c.l.b16 %v102
    %v349 = vunpack.c.h.b16 %v102
    %v350 = vunpack.c.l.b16 %v103
    %v351 = vunpack.c.h.b16 %v103
    %v352 = vunpack.c.l.b16 %v104
    %v353 = vunpack.c.h.b16 %v104
    %v354 = vunpack.c.l.b16 %v105
    %v355 = vunpack.c.h.b16 %v105
    %v356 = vunpack.c.l.b16 %v106
    %v357 = vunpack.c.h.b16 %v106
    %v358 = vunpack.c.l.b16 %v107
    %v359 = vunpack.c.h.b16 %v107
    %v360 = vunpack.c.l.b16 %v108
    %v361 = vunpack.c.h.b16 %v108
    %v362 = vunpack.c.l.b16 %v109
    %v363 = vunpack.c.h.b16 %v109
    %v364 = vunpack.c.l.b16 %v110
    %v365 = vunpack.c.h.b16 %v110
    %v366 = vunpack.c.l.b16 %v111
    %v367 = vunpack.c.h.b16 %v111
    %v368 = vunpack.c.l.b16 %v112
    %v369 = vunpack.c.h.b16 %v112
    %v370 = vunpack.c.l.b16 %v113
    %v371 = vunpack.c.h.b16 %v113
    %v372 = vunpack.c.l.b16 %v114
    %v373 = vunpack.c.h.b16 %v114
    %v374 = vunpack.c.l.b16 %v115
    %v375 = vunpack.c.h.b16 %v115
    %v376 = vunpack.c.l.b16 %v116
    %v377 = vunpack.c.h.b16 %v116
    %v378 = vunpack.c.l.b16 %v117
    %v379 = vunpack.c.h.b16 %v117
    %v380 = vunpack.c.l.b16 %v118
    %v381 = vunpack.c.h.b16 %v118
    %v382 = vunpack.c.l.b16 %v119
    %v383 = vunpack.c.h.b16 %v119
    %v384 = vunpack.c.l.b16 %v120
    %v385 = vunpack.c.h.b16 %v120
    %v386 = vunpack.c.l.b16 %v121
    %v387 = vunpack.c.h.b16 %v121
    %v388 = vunpack.c.l.b16 %v122
    %v389 = vunpack.c.h.b16 %v122
    %v390 = vunpack.c.l.b16 %v123
    %v391 = vunpack.c.h.b16 %v123
    %v392 = vunpack.c.l.b16 %v124
    %v393 = vunpack.c.h.b16 %v124
    %v394 = vunpack.c.l.b16 %v125
    %v395 = vunpack.c.h.b16 %v125
    %v396 = vunpack.c.l.b16 %v126
    %v397 = vunpack.c.h.b16 %v126
    %v398 = vunpack.c.l.b16 %v127
    %v399 = vunpack.c.h.b16 %v127
    %v400 = vunpack.c.l.b16 %v128
    %v401 = vunpack.c.h.b16 %v128
    %v402 = vunpack.c.l.b16 %v129
    %v403 = vunpack.c.h.b16 %v129
    %v404 = vunpack.c.l.b16 %v130
    %v405 = vunpack.c.h.b16 %v130
    %v406 = vunpack.c.l.b16 %v131
    %v407 = vunpack.c.h.b16 %v131
    %v408 = vunpack.c.l.b16 %v132
    %v409 = vunpack.c.h.b16 %v132
    %v410 = vunpack.c.l.b16 %v133
    %v411 = vunpack.c.h.b16 %v133
    %v412 = vunpack.c.l.b16 %v134
    %v413 = vunpack.c.h.b16 %v134
    %v414 = vunpack.c.l.b16 %v135
    %v415 = vunpack.c.h.b16 %v135
    %v416 = vunpack.c.l.b16 %v136
    %v417 = vunpack.c.h.b16 %v136
    %v418 = vunpack.c.l.b16 %v137
    %v419 = vunpack.c.h.b16 %v137
    %v420 = vunpack.c.l.b16 %v138
    %v421 = vunpack.c.h.b16 %v138
    %v422 = vunpack.c.l.b16 %v139
    %v423 = vunpack.c.h.b16 %v139
    %v424 = vunpack.c.l.b16 %v140
    %v425 = vunpack.c.h.b16 %v140
    %v426 = vunpack.c.l.b16 %v141
    %v427 = vunpack.c.h.b16 %v141
    %v428 = vunpack.c.l.b16 %v142
    %v429 = vunpack.c.h.b16 %v142
    %v430 = vunpack.c.l.b16 %v143
    %v431 = vunpack.c.h.b16 %v143
    %v432 = vunpack.c.l.b16 %v144
    %v433 = vunpack.c.h.b16 %v144
    %v434 = vunpack.c.l.b16 %v145
    %v435 = vunpack.c.h.b16 %v145
    %v436 = vunpack.c.l.b16 %v146
    %v437 = vunpack.c.h.b16 %v146
    %v438 = vunpack.c.l.b16 %v147
    %v439 = vunpack.c.h.b16 %v147
    %v440 = vunpack.c.l.b16 %v148
    %v441 = vunpack.c.h.b16 %v148
    %v442 = vunpack.c.l.b16 %v149
    %v443 = vunpack.c.h.b16 %v149
    %v444 = vunpack.c.l.b16 %v150
    %v445 = vunpack.c.h.b16 %v150
    %v446 = vunpack.c.l.b16 %v151
    %v447 = vunpack.c.h.b16 %v151
    %v448 = vunpack.c.l.b16 %v152
    %v449 = vunpack.c.h.b16 %v152
    %v450 = vunpack.c.l.b16 %v153
    %v451 = vunpack.c.h.b16 %v153
    %v452 = vpack.c.b16 %v266, %v260
    %v453 = vpack.c.b16 %v267, %v261
    %v454 = vpack.c.b16 %v268, %v262
    %v455 = vpack.c.b16 %v269, %v263
    %v456 = vpack.c.b16 %v270, %v264
    %v457 = vpack.c.b16 %v271, %v265
    %v458 = vpack.c.b16 %v278, %v272
    %v459 = vpack.c.b16 %v279, %v273
    %v460 = vpack.c.b16 %v280, %v274
    %v461 = vpack.c.b16 %v281, %v275
    %v462 = vpack.c.b16 %v282, %v276
    %v463 = vpack.c.b16 %v283, %v277
    %v464 = vpack.c.b16 %v290, %v284
    %v465 = vpack.c.b16 %v291, %v285
    %v466 = vpack.c.b16 %v292, %v286
    %v467 = vpack.c.b16 %v293, %v287
    %v468 = vpack.c.b16 %v294, %v288
    %v469 = vpack.c.b16 %v295, %v289
    %v470 = vpack.c.b16 %v302, %v296
    %v471 = vpack.c.b16 %v303, %v297
    %v472 = vpack.c.b16 %v304, %v298
    %v473 = vpack.c.b16 %v305, %v299
    %v474 = vpack.c.b16 %v306, %v300
    %v475 = vpack.c.b16 %v307, %v301
    %v476 = vpack.c.b16 %v314, %v308
    %v477 = vpack.c.b16 %v315, %v309
    %v478 = vpack.c.b16 %v316, %v310
    %v479 = vpack.c.b16 %v317, %v311
    %v480 = vpack.c.b16 %v318, %v312
    %v481 = vpack.c.b16 %v319, %v313
    %v482 = vpack.c.b16 %v326, %v320
    %v483 = vpack.c.b16 %v327, %v321
    %v484 = vpack.c.b16 %v328, %v322
    %v485 = vpack.c.b16 %v329, %v323
    %v486 = vpack.c.b16 %v330, %v324
    %v487 = vpack.c.b16 %v331, %v325
    %v488 = vpack.c.b16 %v338, %v332
    %v489 = vpack.c.b16 %v339, %v333
    %v490 = vpack.c.b16 %v340, %v334
    %v491 = vpack.c.b16 %v341, %v335
    %v492 = vpack.c.b16 %v342, %v336
    %v493 = vpack.c.b16 %v343, %v337
    %v494 = vpack.c.b16 %v350, %v344
    %v495 = vpack.c.b16 %v351, %v345
    %v496 = vpack.c.b16 %v352, %v346
    %v497 = vpack.c.b16 %v353, %v347
    %v498 = vpack.c.b16 %v354, %v348
    %v499 = vpack.c.b16 %v355, %v349
    %v500 = vpack.c.b16 %v362, %v356
    %v501 = vpack.c.b16 %v363, %v357
    %v502 = vpack.c.b16 %v364, %v358
    %v503 = vpack.c.b16 %v365, %v359
    %v504 = vpack.c.b16 %v366, %v360
    %v505 = vpack.c.b16 %v367, %v361
    %v506 = vpack.c.b16 %v374, %v368
    %v507 = vpack.c.b16 %v375, %v369
    %v508 = vpack.c.b16 %v376, %v370
    %v509 = vpack.c.b16 %v377, %v371
    %v510 = vpack.c.b16 %v378, %v372
    %v511 = vpack.c.b16 %v379, %v373
    %v512 = vpack.c.b16 %v386, %v380
    %v513 = vpack.c.b16 %v387, %v381
    %v514 = vpack.c.b16 %v388, %v382
    %v515 = vpack.c.b16 %v389, %v383
    %v516 = vpack.c.b16 %v390, %v384
    %v517 = vpack.c.b16 %v391, %v385
    %v518 = vpack.c.b16 %v398, %v392
    %v519 = vpack.c.b16 %v399, %v393
    %v520 = vpack.c.b16 %v400, %v394
    %v521 = vpack.c.b16 %v401, %v395
    %v522 = vpack.c.b16 %v402, %v396
    %v523 = vpack.c.b16 %v403, %v397
    %v524 = vpack.c.b16 %v410, %v404
    %v525 = vpack.c.b16 %v411, %v405
    %v526 = vpack.c.b16 %v412, %v406
    %v527 = vpack.c.b16 %v413, %v407
    %v528 = vpack.c.b16 %v414, %v408
    %v529 = vpack.c.b16 %v415, %v409
    %v530 = vpack.c.b16 %v422, %v416
    %v531 = vpack.c.b16 %v423, %v417
    %v532 = vpack.c.b16 %v424, %v418
    %v533 = vpack.c.b16 %v425, %v419
    %v534 = vpack.c.b16 %v426, %v420
    %v535 = vpack.c.b16 %v427, %v421
    %v536 = vpack.c.b16 %v434, %v428
    %v537 = vpack.c.b16 %v435, %v429
    %v538 = vpack.c.b16 %v436, %v430
    %v539 = vpack.c.b16 %v437, %v431
    %v540 = vpack.c.b16 %v438, %v432
    %v541 = vpack.c.b16 %v439, %v433
    %v542 = vpack.c.b16 %v446, %v440
    %v543 = vpack.c.b16 %v447, %v441
    %v544 = vpack.c.b16 %v448, %v442
    %v545 = vpack.c.b16 %v449, %v443
    %v546 = vpack.c.b16 %v450, %v444
    %v547 = vpack.c.b16 %v451, %v445
    %644 = vmatprep.subr.bf16.mxu0 %v453
    %645 = vmatpush1.bf16.msra.mxu0 %v452
    %646 = vmatprep.subr.bf16.mxu0 %v459
    %647 = vmatpush1.bf16.msra.mxu0 %v458
    %648 = vmatprep.subr.bf16.mxu0 %v465
    %649 = vmatpush1.bf16.msra.mxu0 %v464
    %650 = vmatprep.subr.bf16.mxu0 %v471
    %651 = vmatpush1.bf16.msra.mxu0 %v470
    %652 = vmatprep.subr.bf16.mxu0 %v477
    %653 = vmatpush1.bf16.msra.mxu0 %v476
    %654 = vmatprep.subr.bf16.mxu0 %v483
    %655 = vmatpush1.bf16.msra.mxu0 %v482
    %656 = vmatprep.subr.bf16.mxu0 %v489
    %657 = vmatpush1.bf16.msra.mxu0 %v488
    %658 = vmatprep.subr.bf16.mxu0 %v495
    %659 = vmatpush1.bf16.msra.mxu0 %v494
    %660 = vmatprep.subr.bf16.mxu0 %v501
    %661 = vmatpush1.bf16.msra.mxu0 %v500
    %662 = vmatprep.subr.bf16.mxu0 %v507
    %663 = vmatpush1.bf16.msra.mxu0 %v506
    %664 = vmatprep.subr.bf16.mxu0 %v513
    %665 = vmatpush1.bf16.msra.mxu0 %v512
    %666 = vmatprep.subr.bf16.mxu0 %v519
    %667 = vmatpush1.bf16.msra.mxu0 %v518
    %668 = vmatprep.subr.bf16.mxu0 %v525
    %669 = vmatpush1.bf16.msra.mxu0 %v524
    %670 = vmatprep.subr.bf16.mxu0 %v531
    %671 = vmatpush1.bf16.msra.mxu0 %v530
    %672 = vmatprep.subr.bf16.mxu0 %v537
    %673 = vmatpush1.bf16.msra.mxu0 %v536
    %674 = vmatprep.subr.bf16.mxu0 %v543
    %675 = vmatpush1.bf16.msra.mxu0 %v542
    %676 = vmatprep.mubr.bf16.mxu0 %v161
    %677 = vmatmul.mubr.bf16.gmra.mrb[0].mxu0 %v160
    %v678 = vpop.f32.mrb[0].mxu0
    %v679 = vadd.f32 0.0, %v678
    %v680 = vpop.f32.mrb[0].mxu0
    %v681 = vadd.f32 0.0, %v680
    %v682 = vpop.f32.mrb[0].mxu0
    %v683 = vadd.f32 0.0, %v682
    %v684 = vpop.f32.mrb[0].mxu0
    %v685 = vadd.f32 0.0, %v684
    %686 = vdwg.mxu0
    %687 = vmatprep.subr.bf16.mxu0 %v455
    %688 = vmatpush1.bf16.msra.mxu0 %v454
    %689 = vmatprep.subr.bf16.mxu0 %v461
    %690 = vmatpush1.bf16.msra.mxu0 %v460
    %691 = vmatprep.subr.bf16.mxu0 %v467
    %692 = vmatpush1.bf16.msra.mxu0 %v466
    %693 = vmatprep.subr.bf16.mxu0 %v473
    %694 = vmatpush1.bf16.msra.mxu0 %v472
    %695 = vmatprep.subr.bf16.mxu0 %v479
    %696 = vmatpush1.bf16.msra.mxu0 %v478
    %697 = vmatprep.subr.bf16.mxu0 %v485
    %698 = vmatpush1.bf16.msra.mxu0 %v484
    %699 = vmatprep.subr.bf16.mxu0 %v491
    %700 = vmatpush1.bf16.msra.mxu0 %v490
    %701 = vmatprep.subr.bf16.mxu0 %v497
    %702 = vmatpush1.bf16.msra.mxu0 %v496
    %703 = vmatprep.subr.bf16.mxu0 %v503
    %704 = vmatpush1.bf16.msra.mxu0 %v502
    %705 = vmatprep.subr.bf16.mxu0 %v509
    %706 = vmatpush1.bf16.msra.mxu0 %v508
    %707 = vmatprep.subr.bf16.mxu0 %v515
    %708 = vmatpush1.bf16.msra.mxu0 %v514
    %709 = vmatprep.subr.bf16.mxu0 %v521
    %710 = vmatpush1.bf16.msra.mxu0 %v520
    %711 = vmatprep.subr.bf16.mxu0 %v527
    %712 = vmatpush1.bf16.msra.mxu0 %v526
    %713 = vmatprep.subr.bf16.mxu0 %v533
    %714 = vmatpush1.bf16.msra.mxu0 %v532
    %715 = vmatprep.subr.bf16.mxu0 %v539
    %716 = vmatpush1.bf16.msra.mxu0 %v538
    %717 = vmatprep.subr.bf16.mxu0 %v545
    %718 = vmatpush1.bf16.msra.mxu0 %v544
    %719 = vmatprep.mubr.bf16.mxu0 %v161
    %720 = vmatmul.mubr.bf16.gmra.mrb[0].mxu0 %v160
    %v721 = vpop.f32.mrb[0].mxu0
    %v722 = vadd.f32 0.0, %v721
    %v723 = vpop.f32.mrb[0].mxu0
    %v724 = vadd.f32 0.0, %v723
    %v725 = vpop.f32.mrb[0].mxu0
    %v726 = vadd.f32 0.0, %v725
    %v727 = vpop.f32.mrb[0].mxu0
    %v728 = vadd.f32 0.0, %v727
    %729 = vdwg.mxu0
    %730 = vmatprep.subr.bf16.mxu0 %v457
    %731 = vmatpush1.bf16.msra.mxu0 %v456
    %732 = vmatprep.subr.bf16.mxu0 %v463
    %733 = vmatpush1.bf16.msra.mxu0 %v462
    %734 = vmatprep.subr.bf16.mxu0 %v469
    %735 = vmatpush1.bf16.msra.mxu0 %v468
    %736 = vmatprep.subr.bf16.mxu0 %v475
    %737 = vmatpush1.bf16.msra.mxu0 %v474
    %738 = vmatprep.subr.bf16.mxu0 %v481
    %739 = vmatpush1.bf16.msra.mxu0 %v480
    %740 = vmatprep.subr.bf16.mxu0 %v487
    %741 = vmatpush1.bf16.msra.mxu0 %v486
    %742 = vmatprep.subr.bf16.mxu0 %v493
    %743 = vmatpush1.bf16.msra.mxu0 %v492
    %744 = vmatprep.subr.bf16.mxu0 %v499
    %745 = vmatpush1.bf16.msra.mxu0 %v498
    %746 = vmatprep.subr.bf16.mxu0 %v505
    %747 = vmatpush1.bf16.msra.mxu0 %v504
    %748 = vmatprep.subr.bf16.mxu0 %v511
    %749 = vmatpush1.bf16.msra.mxu0 %v510
    %750 = vmatprep.subr.bf16.mxu0 %v517
    %751 = vmatpush1.bf16.msra.mxu0 %v516
    %752 = vmatprep.subr.bf16.mxu0 %v523
    %753 = vmatpush1.bf16.msra.mxu0 %v522
    %754 = vmatprep.subr.bf16.mxu0 %v529
    %755 = vmatpush1.bf16.msra.mxu0 %v528
    %756 = vmatprep.subr.bf16.mxu0 %v535
    %757 = vmatpush1.bf16.msra.mxu0 %v534
    %758 = vmatprep.subr.bf16.mxu0 %v541
    %759 = vmatpush1.bf16.msra.mxu0 %v540
    %760 = vmatprep.subr.bf16.mxu0 %v547
    %761 = vmatpush1.bf16.msra.mxu0 %v546
    %762 = vmatprep.mubr.bf16.mxu0 %v161
    %763 = vmatmul.mubr.bf16.gmra.mrb[0].mxu0 %v160
    %v764 = vpop.f32.mrb[0].mxu0
    %v765 = vadd.f32 0.0, %v764
    %v766 = vpop.f32.mrb[0].mxu0
    %v767 = vadd.f32 0.0, %v766
    %v768 = vpop.f32.mrb[0].mxu0
    %v769 = vadd.f32 0.0, %v768
    %v770 = vpop.f32.mrb[0].mxu0
    %v771 = vadd.f32 0.0, %v770
    %772 = vdwg.mxu0
    %v773 = vpack.c.bf16 %v683, %v679
    %v774 = vpack.c.bf16 %v685, %v681
    %v775 = vpack.c.bf16 %v726, %v722
    %v776 = vpack.c.bf16 %v728, %v724
    %v777 = vpack.c.bf16 %v769, %v765
    %v778 = vpack.c.bf16 %v771, %v767
    %v779 = vld [vmem:[%s3] sm:$0xff]
    %v780 = vld [vmem:[%s3 + $0x8] sm:$0xff]
    %v781 = vld [vmem:[%s3 + $0x10] sm:$0xff]
    %v782 = vld [vmem:[%s3 + $0x18] sm:$0xff]
    %v783 = vld [vmem:[%s3 + $0x20] sm:$0xff]
    %v784 = vld [vmem:[%s3 + $0x28] sm:$0xff]
    %v785 = vld [vmem:[%s3 + $0x30] sm:$0xff]
    %v786 = vld [vmem:[%s3 + $0x38] sm:$0xff]
    %v787 = vld [vmem:[%s3 + $0x40] sm:$0xff]
    %v788 = vld [vmem:[%s3 + $0x48] sm:$0xff]
    %v789 = vld [vmem:[%s3 + $0x50] sm:$0xff]
    %v790 = vld [vmem:[%s3 + $0x58] sm:$0xff]
    %v791 = vld [vmem:[%s3 + $0x60] sm:$0xff]
    %v792 = vld [vmem:[%s3 + $0x68] sm:$0xff]
    %v793 = vld [vmem:[%s3 + $0x70] sm:$0xff]
    %v794 = vld [vmem:[%s3 + $0x78] sm:$0xff]
    %v795 = vld [vmem:[%s3 + $0x80] sm:$0xff]
    %v796 = vld [vmem:[%s3 + $0x88] sm:$0xff]
    %v797 = vld [vmem:[%s3 + $0x90] sm:$0xff]
    %v798 = vld [vmem:[%s3 + $0x98] sm:$0xff]
    %v799 = vld [vmem:[%s3 + $0xa0] sm:$0xff]
    %v800 = vld [vmem:[%s3 + $0xa8] sm:$0xff]
    %v801 = vld [vmem:[%s3 + $0xb0] sm:$0xff]
    %v802 = vld [vmem:[%s3 + $0xb8] sm:$0xff]
    %v803 = vld [vmem:[%s3 + $0xc0] sm:$0xff]
    %v804 = vld [vmem:[%s3 + $0xc8] sm:$0xff]
    %v805 = vld [vmem:[%s3 + $0xd0] sm:$0xff]
    %v806 = vld [vmem:[%s3 + $0xd8] sm:$0xff]
    %v807 = vld [vmem:[%s3 + $0xe0] sm:$0xff]
    %v808 = vld [vmem:[%s3 + $0xe8] sm:$0xff]
    %v809 = vld [vmem:[%s3 + $0xf0] sm:$0xff]
    %v810 = vld [vmem:[%s3 + $0xf8] sm:$0xff]
    %v811 = vld [vmem:[%s3 + $0x100] sm:$0xff]
    %v812 = vld [vmem:[%s3 + $0x108] sm:$0xff]
    %v813 = vld [vmem:[%s3 + $0x110] sm:$0xff]
    %v814 = vld [vmem:[%s3 + $0x118] sm:$0xff]
    %v815 = vld [vmem:[%s3 + $0x120] sm:$0xff]
    %v816 = vld [vmem:[%s3 + $0x128] sm:$0xff]
    %v817 = vld [vmem:[%s3 + $0x130] sm:$0xff]
    %v818 = vld [vmem:[%s3 + $0x138] sm:$0xff]
    %v819 = vld [vmem:[%s3 + $0x140] sm:$0xff]
    %v820 = vld [vmem:[%s3 + $0x148] sm:$0xff]
    %v821 = vld [vmem:[%s3 + $0x150] sm:$0xff]
    %v822 = vld [vmem:[%s3 + $0x158] sm:$0xff]
    %v823 = vld [vmem:[%s3 + $0x160] sm:$0xff]
    %v824 = vld [vmem:[%s3 + $0x168] sm:$0xff]
    %v825 = vld [vmem:[%s3 + $0x170] sm:$0xff]
    %v826 = vld [vmem:[%s3 + $0x178] sm:$0xff]
    %v827 = vld [vmem:[%s3 + $0x180] sm:$0xff]
    %v828 = vld [vmem:[%s3 + $0x188] sm:$0xff]
    %v829 = vld [vmem:[%s3 + $0x190] sm:$0xff]
    %v830 = vld [vmem:[%s3 + $0x198] sm:$0xff]
    %v831 = vld [vmem:[%s3 + $0x1a0] sm:$0xff]
    %v832 = vld [vmem:[%s3 + $0x1a8] sm:$0xff]
    %v833 = vld [vmem:[%s3 + $0x1b0] sm:$0xff]
    %v834 = vld [vmem:[%s3 + $0x1b8] sm:$0xff]
    %v835 = vld [vmem:[%s3 + $0x1c0] sm:$0xff]
    %v836 = vld [vmem:[%s3 + $0x1c8] sm:$0xff]
    %v837 = vld [vmem:[%s3 + $0x1d0] sm:$0xff]
    %v838 = vld [vmem:[%s3 + $0x1d8] sm:$0xff]
    %v839 = vld [vmem:[%s3 + $0x1e0] sm:$0xff]
    %v840 = vld [vmem:[%s3 + $0x1e8] sm:$0xff]
    %v841 = vld [vmem:[%s3 + $0x1f0] sm:$0xff]
    %v842 = vld [vmem:[%s3 + $0x1f8] sm:$0xff]
    %v843 = vld [vmem:[%s3 + $0x200] sm:$0xff]
    %v844 = vld [vmem:[%s3 + $0x208] sm:$0xff]
    %v845 = vld [vmem:[%s3 + $0x210] sm:$0xff]
    %v846 = vld [vmem:[%s3 + $0x218] sm:$0xff]
    %v847 = vld [vmem:[%s3 + $0x220] sm:$0xff]
    %v848 = vld [vmem:[%s3 + $0x228] sm:$0xff]
    %v849 = vld [vmem:[%s3 + $0x230] sm:$0xff]
    %v850 = vld [vmem:[%s3 + $0x238] sm:$0xff]
    %v851 = vld [vmem:[%s3 + $0x240] sm:$0xff]
    %v852 = vld [vmem:[%s3 + $0x248] sm:$0xff]
    %v853 = vld [vmem:[%s3 + $0x250] sm:$0xff]
    %v854 = vld [vmem:[%s3 + $0x258] sm:$0xff]
    %v855 = vld [vmem:[%s3 + $0x260] sm:$0xff]
    %v856 = vld [vmem:[%s3 + $0x268] sm:$0xff]
    %v857 = vld [vmem:[%s3 + $0x270] sm:$0xff]
    %v858 = vld [vmem:[%s3 + $0x278] sm:$0xff]
    %v859 = vld [vmem:[%s3 + $0x280] sm:$0xff]
    %v860 = vld [vmem:[%s3 + $0x288] sm:$0xff]
    %v861 = vld [vmem:[%s3 + $0x290] sm:$0xff]
    %v862 = vld [vmem:[%s3 + $0x298] sm:$0xff]
    %v863 = vld [vmem:[%s3 + $0x2a0] sm:$0xff]
    %v864 = vld [vmem:[%s3 + $0x2a8] sm:$0xff]
    %v865 = vld [vmem:[%s3 + $0x2b0] sm:$0xff]
    %v866 = vld [vmem:[%s3 + $0x2b8] sm:$0xff]
    %v867 = vld [vmem:[%s3 + $0x2c0] sm:$0xff]
    %v868 = vld [vmem:[%s3 + $0x2c8] sm:$0xff]
    %v869 = vld [vmem:[%s3 + $0x2d0] sm:$0xff]
    %v870 = vld [vmem:[%s3 + $0x2d8] sm:$0xff]
    %v871 = vld [vmem:[%s3 + $0x2e0] sm:$0xff]
    %v872 = vld [vmem:[%s3 + $0x2e8] sm:$0xff]
    %v873 = vld [vmem:[%s3 + $0x2f0] sm:$0xff]
    %v874 = vld [vmem:[%s3 + $0x2f8] sm:$0xff]
    %v875 = vld [vmem:[%s3 + $0x300] sm:$0xff]
    %v876 = vld [vmem:[%s3 + $0x308] sm:$0xff]
    %v877 = vld [vmem:[%s3 + $0x310] sm:$0xff]
    %v878 = vld [vmem:[%s3 + $0x318] sm:$0xff]
    %v879 = vld [vmem:[%s3 + $0x320] sm:$0xff]
    %v880 = vld [vmem:[%s3 + $0x328] sm:$0xff]
    %v881 = vld [vmem:[%s3 + $0x330] sm:$0xff]
    %v882 = vld [vmem:[%s3 + $0x338] sm:$0xff]
    %v883 = vld [vmem:[%s3 + $0x340] sm:$0xff]
    %v884 = vld [vmem:[%s3 + $0x348] sm:$0xff]
    %v885 = vld [vmem:[%s3 + $0x350] sm:$0xff]
    %v886 = vld [vmem:[%s3 + $0x358] sm:$0xff]
    %v887 = vld [vmem:[%s3 + $0x360] sm:$0xff]
    %v888 = vld [vmem:[%s3 + $0x368] sm:$0xff]
    %v889 = vld [vmem:[%s3 + $0x370] sm:$0xff]
    %v890 = vld [vmem:[%s3 + $0x378] sm:$0xff]
    %v891 = vld [vmem:[%s3 + $0x380] sm:$0xff]
    %v892 = vld [vmem:[%s3 + $0x388] sm:$0xff]
    %v893 = vld [vmem:[%s3 + $0x390] sm:$0xff]
    %v894 = vld [vmem:[%s3 + $0x398] sm:$0xff]
    %v895 = vld [vmem:[%s3 + $0x3a0] sm:$0xff]
    %v896 = vld [vmem:[%s3 + $0x3a8] sm:$0xff]
    %v897 = vld [vmem:[%s3 + $0x3b0] sm:$0xff]
    %v898 = vld [vmem:[%s3 + $0x3b8] sm:$0xff]
    %v899 = vld [vmem:[%s3 + $0x3c0] sm:$0xff]
    %v900 = vld [vmem:[%s3 + $0x3c8] sm:$0xff]
    %v901 = vld [vmem:[%s3 + $0x3d0] sm:$0xff]
    %v902 = vld [vmem:[%s3 + $0x3d8] sm:$0xff]
    %v903 = vld [vmem:[%s3 + $0x3e0] sm:$0xff]
    %v904 = vld [vmem:[%s3 + $0x3e8] sm:$0xff]
    %v905 = vld [vmem:[%s3 + $0x3f0] sm:$0xff]
    %v906 = vld [vmem:[%s3 + $0x3f8] sm:$0xff]
    %v907 = vld [vmem:[%s3 + $0x400] sm:$0xff]
    %v908 = vld [vmem:[%s3 + $0x408] sm:$0xff]
    %v909 = vld [vmem:[%s3 + $0x410] sm:$0xff]
    %v910 = vld [vmem:[%s3 + $0x418] sm:$0xff]
    %v911 = vld [vmem:[%s3 + $0x420] sm:$0xff]
    %v912 = vld [vmem:[%s3 + $0x428] sm:$0xff]
    %v913 = vld [vmem:[%s3 + $0x430] sm:$0xff]
    %v914 = vld [vmem:[%s3 + $0x438] sm:$0xff]
    %v915 = vld [vmem:[%s3 + $0x440] sm:$0xff]
    %v916 = vld [vmem:[%s3 + $0x448] sm:$0xff]
    %v917 = vld [vmem:[%s3 + $0x450] sm:$0xff]
    %v918 = vld [vmem:[%s3 + $0x458] sm:$0xff]
    %v919 = vld [vmem:[%s3 + $0x460] sm:$0xff]
    %v920 = vld [vmem:[%s3 + $0x468] sm:$0xff]
    %v921 = vld [vmem:[%s3 + $0x470] sm:$0xff]
    %v922 = vld [vmem:[%s3 + $0x478] sm:$0xff]
    %v923 = vld [vmem:[%s3 + $0x480] sm:$0xff]
    %v924 = vld [vmem:[%s3 + $0x488] sm:$0xff]
    %v925 = vld [vmem:[%s3 + $0x490] sm:$0xff]
    %v926 = vld [vmem:[%s3 + $0x498] sm:$0xff]
    %v927 = vld [vmem:[%s3 + $0x4a0] sm:$0xff]
    %v928 = vld [vmem:[%s3 + $0x4a8] sm:$0xff]
    %v929 = vld [vmem:[%s3 + $0x4b0] sm:$0xff]
    %v930 = vld [vmem:[%s3 + $0x4b8] sm:$0xff]
    %v931 = vld [vmem:[%s3 + $0x4c0] sm:$0xff]
    %v932 = vld [vmem:[%s3 + $0x4c8] sm:$0xff]
    %v933 = vld [vmem:[%s3 + $0x4d0] sm:$0xff]
    %v934 = vld [vmem:[%s3 + $0x4d8] sm:$0xff]
    %v935 = vld [vmem:[%s3 + $0x4e0] sm:$0xff]
    %v936 = vld [vmem:[%s3 + $0x4e8] sm:$0xff]
    %v937 = vld [vmem:[%s3 + $0x4f0] sm:$0xff]
    %v938 = vld [vmem:[%s3 + $0x4f8] sm:$0xff]
    %v939 = vld [vmem:[%s3 + $0x500] sm:$0xff]
    %v940 = vld [vmem:[%s3 + $0x508] sm:$0xff]
    %v941 = vld [vmem:[%s3 + $0x510] sm:$0xff]
    %v942 = vld [vmem:[%s3 + $0x518] sm:$0xff]
    %v943 = vld [vmem:[%s3 + $0x520] sm:$0xff]
    %v944 = vld [vmem:[%s3 + $0x528] sm:$0xff]
    %v945 = vld [vmem:[%s3 + $0x530] sm:$0xff]
    %v946 = vld [vmem:[%s3 + $0x538] sm:$0xff]
    %v947 = vld [vmem:[%s3 + $0x540] sm:$0xff]
    %v948 = vld [vmem:[%s3 + $0x548] sm:$0xff]
    %v949 = vld [vmem:[%s3 + $0x550] sm:$0xff]
    %v950 = vld [vmem:[%s3 + $0x558] sm:$0xff]
    %v951 = vld [vmem:[%s3 + $0x560] sm:$0xff]
    %v952 = vld [vmem:[%s3 + $0x568] sm:$0xff]
    %v953 = vld [vmem:[%s3 + $0x570] sm:$0xff]
    %v954 = vld [vmem:[%s3 + $0x578] sm:$0xff]
    %v955 = vld [vmem:[%s3 + $0x580] sm:$0xff]
    %v956 = vld [vmem:[%s3 + $0x588] sm:$0xff]
    %v957 = vld [vmem:[%s3 + $0x590] sm:$0xff]
    %v958 = vld [vmem:[%s3 + $0x598] sm:$0xff]
    %v959 = vld [vmem:[%s3 + $0x5a0] sm:$0xff]
    %v960 = vld [vmem:[%s3 + $0x5a8] sm:$0xff]
    %v961 = vld [vmem:[%s3 + $0x5b0] sm:$0xff]
    %v962 = vld [vmem:[%s3 + $0x5b8] sm:$0xff]
    %v963 = vld [vmem:[%s3 + $0x5c0] sm:$0xff]
    %v964 = vld [vmem:[%s3 + $0x5c8] sm:$0xff]
    %v965 = vld [vmem:[%s3 + $0x5d0] sm:$0xff]
    %v966 = vld [vmem:[%s3 + $0x5d8] sm:$0xff]
    %v967 = vld [vmem:[%s3 + $0x5e0] sm:$0xff]
    %v968 = vld [vmem:[%s3 + $0x5e8] sm:$0xff]
    %v969 = vld [vmem:[%s3 + $0x5f0] sm:$0xff]
    %v970 = vld [vmem:[%s3 + $0x5f8] sm:$0xff]
    %v971 = vld [vmem:[%s3 + $0x600] sm:$0xff]
    %v972 = vld [vmem:[%s3 + $0x608] sm:$0xff]
    %v973 = vld [vmem:[%s3 + $0x610] sm:$0xff]
    %v974 = vld [vmem:[%s3 + $0x618] sm:$0xff]
    %v975 = vld [vmem:[%s3 + $0x620] sm:$0xff]
    %v976 = vld [vmem:[%s3 + $0x628] sm:$0xff]
    %v977 = vld [vmem:[%s3 + $0x630] sm:$0xff]
    %v978 = vld [vmem:[%s3 + $0x638] sm:$0xff]
    %v979 = vld [vmem:[%s3 + $0x640] sm:$0xff]
    %v980 = vld [vmem:[%s3 + $0x648] sm:$0xff]
    %v981 = vld [vmem:[%s3 + $0x650] sm:$0xff]
    %v982 = vld [vmem:[%s3 + $0x658] sm:$0xff]
    %v983 = vld [vmem:[%s3 + $0x660] sm:$0xff]
    %v984 = vld [vmem:[%s3 + $0x668] sm:$0xff]
    %v985 = vld [vmem:[%s3 + $0x670] sm:$0xff]
    %v986 = vld [vmem:[%s3 + $0x678] sm:$0xff]
    %v987 = vld [vmem:[%s3 + $0x680] sm:$0xff]
    %v988 = vld [vmem:[%s3 + $0x688] sm:$0xff]
    %v989 = vld [vmem:[%s3 + $0x690] sm:$0xff]
    %v990 = vld [vmem:[%s3 + $0x698] sm:$0xff]
    %v991 = vld [vmem:[%s3 + $0x6a0] sm:$0xff]
    %v992 = vld [vmem:[%s3 + $0x6a8] sm:$0xff]
    %v993 = vld [vmem:[%s3 + $0x6b0] sm:$0xff]
    %v994 = vld [vmem:[%s3 + $0x6b8] sm:$0xff]
    %v995 = vld [vmem:[%s3 + $0x6c0] sm:$0xff]
    %v996 = vld [vmem:[%s3 + $0x6c8] sm:$0xff]
    %v997 = vld [vmem:[%s3 + $0x6d0] sm:$0xff]
    %v998 = vld [vmem:[%s3 + $0x6d8] sm:$0xff]
    %v999 = vld [vmem:[%s3 + $0x6e0] sm:$0xff]
    %v1000 = vld [vmem:[%s3 + $0x6e8] sm:$0xff]
    %v1001 = vld [vmem:[%s3 + $0x6f0] sm:$0xff]
    %v1002 = vld [vmem:[%s3 + $0x6f8] sm:$0xff]
    %v1003 = vld [vmem:[%s3 + $0x700] sm:$0xff]
    %v1004 = vld [vmem:[%s3 + $0x708] sm:$0xff]
    %v1005 = vld [vmem:[%s3 + $0x710] sm:$0xff]
    %v1006 = vld [vmem:[%s3 + $0x718] sm:$0xff]
    %v1007 = vld [vmem:[%s3 + $0x720] sm:$0xff]
    %v1008 = vld [vmem:[%s3 + $0x728] sm:$0xff]
    %v1009 = vld [vmem:[%s3 + $0x730] sm:$0xff]
    %v1010 = vld [vmem:[%s3 + $0x738] sm:$0xff]
    %v1011 = vld [vmem:[%s3 + $0x740] sm:$0xff]
    %v1012 = vld [vmem:[%s3 + $0x748] sm:$0xff]
    %v1013 = vld [vmem:[%s3 + $0x750] sm:$0xff]
    %v1014 = vld [vmem:[%s3 + $0x758] sm:$0xff]
    %v1015 = vld [vmem:[%s3 + $0x760] sm:$0xff]
    %v1016 = vld [vmem:[%s3 + $0x768] sm:$0xff]
    %v1017 = vld [vmem:[%s3 + $0x770] sm:$0xff]
    %v1018 = vld [vmem:[%s3 + $0x778] sm:$0xff]
    %v1019 = vld [vmem:[%s3 + $0x780] sm:$0xff]
    %v1020 = vld [vmem:[%s3 + $0x788] sm:$0xff]
    %v1021 = vld [vmem:[%s3 + $0x790] sm:$0xff]
    %v1022 = vld [vmem:[%s3 + $0x798] sm:$0xff]
    %v1023 = vld [vmem:[%s3 + $0x7a0] sm:$0xff]
    %v1024 = vld [vmem:[%s3 + $0x7a8] sm:$0xff]
    %v1025 = vld [vmem:[%s3 + $0x7b0] sm:$0xff]
    %v1026 = vld [vmem:[%s3 + $0x7b8] sm:$0xff]
    %v1027 = vld [vmem:[%s3 + $0x7c0] sm:$0xff]
    %v1028 = vld [vmem:[%s3 + $0x7c8] sm:$0xff]
    %v1029 = vld [vmem:[%s3 + $0x7d0] sm:$0xff]
    %v1030 = vld [vmem:[%s3 + $0x7d8] sm:$0xff]
    %v1031 = vld [vmem:[%s3 + $0x7e0] sm:$0xff]
    %v1032 = vld [vmem:[%s3 + $0x7e8] sm:$0xff]
    %v1033 = vld [vmem:[%s3 + $0x7f0] sm:$0xff]
    %v1034 = vld [vmem:[%s3 + $0x7f8] sm:$0xff]
    %v1035 = vld [vmem:[%s3 + $0x800] sm:$0xff]
    %v1036 = vld [vmem:[%s3 + $0x808] sm:$0xff]
    %v1037 = vld [vmem:[%s3 + $0x810] sm:$0xff]
    %v1038 = vld [vmem:[%s3 + $0x818] sm:$0xff]
    %v1039 = vld [vmem:[%s3 + $0x820] sm:$0xff]
    %v1040 = vld [vmem:[%s3 + $0x828] sm:$0xff]
    %v1041 = vld [vmem:[%s3 + $0x830] sm:$0xff]
    %v1042 = vld [vmem:[%s3 + $0x838] sm:$0xff]
    %v1043 = vld [vmem:[%s3 + $0x840] sm:$0xff]
    %v1044 = vld [vmem:[%s3 + $0x848] sm:$0xff]
    %v1045 = vld [vmem:[%s3 + $0x850] sm:$0xff]
    %v1046 = vld [vmem:[%s3 + $0x858] sm:$0xff]
    %v1047 = vld [vmem:[%s3 + $0x860] sm:$0xff]
    %v1048 = vld [vmem:[%s3 + $0x868] sm:$0xff]
    %v1049 = vld [vmem:[%s3 + $0x870] sm:$0xff]
    %v1050 = vld [vmem:[%s3 + $0x878] sm:$0xff]
    %v1051 = vld [vmem:[%s3 + $0x880] sm:$0xff]
    %v1052 = vld [vmem:[%s3 + $0x888] sm:$0xff]
    %v1053 = vld [vmem:[%s3 + $0x890] sm:$0xff]
    %v1054 = vld [vmem:[%s3 + $0x898] sm:$0xff]
    %v1055 = vld [vmem:[%s3 + $0x8a0] sm:$0xff]
    %v1056 = vld [vmem:[%s3 + $0x8a8] sm:$0xff]
    %v1057 = vld [vmem:[%s3 + $0x8b0] sm:$0xff]
    %v1058 = vld [vmem:[%s3 + $0x8b8] sm:$0xff]
    %v1059 = vld [vmem:[%s3 + $0x8c0] sm:$0xff]
    %v1060 = vld [vmem:[%s3 + $0x8c8] sm:$0xff]
    %v1061 = vld [vmem:[%s3 + $0x8d0] sm:$0xff]
    %v1062 = vld [vmem:[%s3 + $0x8d8] sm:$0xff]
    %v1063 = vld [vmem:[%s3 + $0x8e0] sm:$0xff]
    %v1064 = vld [vmem:[%s3 + $0x8e8] sm:$0xff]
    %v1065 = vld [vmem:[%s3 + $0x8f0] sm:$0xff]
    %v1066 = vld [vmem:[%s3 + $0x8f8] sm:$0xff]
    %v1067 = vld [vmem:[%s4] sm:$0x3f]
    %v1069 = vlaneseq
    %v1070 = vshrl.u32 %v1069, 7
    %v1071 = vsub.s32 0, %v1070
    %v1072 = vrot.slane %v1067, %v1071
    %v1073 = vlaneseq
    %v1074 = vshrl.u32 %v1073, 7
    %v1075 = vsub.s32 1, %v1074
    %v1076 = vrot.slane %v1067, %v1075
    %v1077 = vlaneseq
    %v1078 = vshrl.u32 %v1077, 7
    %v1079 = vsub.s32 2, %v1078
    %v1080 = vrot.slane %v1067, %v1079
    %v1081 = vlaneseq
    %v1082 = vshrl.u32 %v1081, 7
    %v1083 = vsub.s32 3, %v1082
    %v1084 = vrot.slane %v1067, %v1083
    %v1085 = vlaneseq
    %v1086 = vshrl.u32 %v1085, 7
    %v1087 = vsub.s32 4, %v1086
    %v1088 = vrot.slane %v1067, %v1087
    %v1089 = vlaneseq
    %v1090 = vshrl.u32 %v1089, 7
    %v1091 = vsub.s32 5, %v1090
    %v1092 = vrot.slane %v1067, %v1091
    %v1387 = vunpack.c.l.b16 %v779
    %v1388 = vunpack.c.h.b16 %v779
    %v1389 = vunpack.c.l.b16 %v780
    %v1390 = vunpack.c.h.b16 %v780
    %v1391 = vunpack.c.l.b16 %v781
    %v1392 = vunpack.c.h.b16 %v781
    %v1393 = vunpack.c.l.b16 %v782
    %v1394 = vunpack.c.h.b16 %v782
    %v1395 = vunpack.c.l.b16 %v783
    %v1396 = vunpack.c.h.b16 %v783
    %v1397 = vunpack.c.l.b16 %v784
    %v1398 = vunpack.c.h.b16 %v784
    %v1399 = vunpack.c.l.b16 %v785
    %v1400 = vunpack.c.h.b16 %v785
    %v1401 = vunpack.c.l.b16 %v786
    %v1402 = vunpack.c.h.b16 %v786
    %v1403 = vunpack.c.l.b16 %v787
    %v1404 = vunpack.c.h.b16 %v787
    %v1405 = vunpack.c.l.b16 %v788
    %v1406 = vunpack.c.h.b16 %v788
    %v1407 = vunpack.c.l.b16 %v789
    %v1408 = vunpack.c.h.b16 %v789
    %v1409 = vunpack.c.l.b16 %v790
    %v1410 = vunpack.c.h.b16 %v790
    %v1411 = vunpack.c.l.b16 %v791
    %v1412 = vunpack.c.h.b16 %v791
    %v1413 = vunpack.c.l.b16 %v792
    %v1414 = vunpack.c.h.b16 %v792
    %v1415 = vunpack.c.l.b16 %v793
    %v1416 = vunpack.c.h.b16 %v793
    %v1417 = vunpack.c.l.b16 %v794
    %v1418 = vunpack.c.h.b16 %v794
    %v1419 = vunpack.c.l.b16 %v795
    %v1420 = vunpack.c.h.b16 %v795
    %v1421 = vunpack.c.l.b16 %v796
    %v1422 = vunpack.c.h.b16 %v796
    %v1423 = vunpack.c.l.b16 %v797
    %v1424 = vunpack.c.h.b16 %v797
    %v1425 = vunpack.c.l.b16 %v798
    %v1426 = vunpack.c.h.b16 %v798
    %v1427 = vunpack.c.l.b16 %v799
    %v1428 = vunpack.c.h.b16 %v799
    %v1429 = vunpack.c.l.b16 %v800
    %v1430 = vunpack.c.h.b16 %v800
    %v1431 = vunpack.c.l.b16 %v801
    %v1432 = vunpack.c.h.b16 %v801
    %v1433 = vunpack.c.l.b16 %v802
    %v1434 = vunpack.c.h.b16 %v802
    %v1435 = vunpack.c.l.b16 %v803
    %v1436 = vunpack.c.h.b16 %v803
    %v1437 = vunpack.c.l.b16 %v804
    %v1438 = vunpack.c.h.b16 %v804
    %v1439 = vunpack.c.l.b16 %v805
    %v1440 = vunpack.c.h.b16 %v805
    %v1441 = vunpack.c.l.b16 %v806
    %v1442 = vunpack.c.h.b16 %v806
    %v1443 = vunpack.c.l.b16 %v807
    %v1444 = vunpack.c.h.b16 %v807
    %v1445 = vunpack.c.l.b16 %v808
    %v1446 = vunpack.c.h.b16 %v808
    %v1447 = vunpack.c.l.b16 %v809
    %v1448 = vunpack.c.h.b16 %v809
    %v1449 = vunpack.c.l.b16 %v810
    %v1450 = vunpack.c.h.b16 %v810
    %v1451 = vunpack.c.l.b16 %v811
    %v1452 = vunpack.c.h.b16 %v811
    %v1453 = vunpack.c.l.b16 %v812
    %v1454 = vunpack.c.h.b16 %v812
    %v1455 = vunpack.c.l.b16 %v813
    %v1456 = vunpack.c.h.b16 %v813
    %v1457 = vunpack.c.l.b16 %v814
    %v1458 = vunpack.c.h.b16 %v814
    %v1459 = vunpack.c.l.b16 %v815
    %v1460 = vunpack.c.h.b16 %v815
    %v1461 = vunpack.c.l.b16 %v816
    %v1462 = vunpack.c.h.b16 %v816
    %v1463 = vunpack.c.l.b16 %v817
    %v1464 = vunpack.c.h.b16 %v817
    %v1465 = vunpack.c.l.b16 %v818
    %v1466 = vunpack.c.h.b16 %v818
    %v1467 = vunpack.c.l.b16 %v819
    %v1468 = vunpack.c.h.b16 %v819
    %v1469 = vunpack.c.l.b16 %v820
    %v1470 = vunpack.c.h.b16 %v820
    %v1471 = vunpack.c.l.b16 %v821
    %v1472 = vunpack.c.h.b16 %v821
    %v1473 = vunpack.c.l.b16 %v822
    %v1474 = vunpack.c.h.b16 %v822
    %v1475 = vunpack.c.l.b16 %v823
    %v1476 = vunpack.c.h.b16 %v823
    %v1477 = vunpack.c.l.b16 %v824
    %v1478 = vunpack.c.h.b16 %v824
    %v1479 = vunpack.c.l.b16 %v825
    %v1480 = vunpack.c.h.b16 %v825
    %v1481 = vunpack.c.l.b16 %v826
    %v1482 = vunpack.c.h.b16 %v826
    %v1483 = vunpack.c.l.b16 %v827
    %v1484 = vunpack.c.h.b16 %v827
    %v1485 = vunpack.c.l.b16 %v828
    %v1486 = vunpack.c.h.b16 %v828
    %v1487 = vunpack.c.l.b16 %v829
    %v1488 = vunpack.c.h.b16 %v829
    %v1489 = vunpack.c.l.b16 %v830
    %v1490 = vunpack.c.h.b16 %v830
    %v1491 = vunpack.c.l.b16 %v831
    %v1492 = vunpack.c.h.b16 %v831
    %v1493 = vunpack.c.l.b16 %v832
    %v1494 = vunpack.c.h.b16 %v832
    %v1495 = vunpack.c.l.b16 %v833
    %v1496 = vunpack.c.h.b16 %v833
    %v1497 = vunpack.c.l.b16 %v834
    %v1498 = vunpack.c.h.b16 %v834
    %v1499 = vunpack.c.l.b16 %v835
    %v1500 = vunpack.c.h.b16 %v835
    %v1501 = vunpack.c.l.b16 %v836
    %v1502 = vunpack.c.h.b16 %v836
    %v1503 = vunpack.c.l.b16 %v837
    %v1504 = vunpack.c.h.b16 %v837
    %v1505 = vunpack.c.l.b16 %v838
    %v1506 = vunpack.c.h.b16 %v838
    %v1507 = vunpack.c.l.b16 %v839
    %v1508 = vunpack.c.h.b16 %v839
    %v1509 = vunpack.c.l.b16 %v840
    %v1510 = vunpack.c.h.b16 %v840
    %v1511 = vunpack.c.l.b16 %v841
    %v1512 = vunpack.c.h.b16 %v841
    %v1513 = vunpack.c.l.b16 %v842
    %v1514 = vunpack.c.h.b16 %v842
    %v1515 = vunpack.c.l.b16 %v843
    %v1516 = vunpack.c.h.b16 %v843
    %v1517 = vunpack.c.l.b16 %v844
    %v1518 = vunpack.c.h.b16 %v844
    %v1519 = vunpack.c.l.b16 %v845
    %v1520 = vunpack.c.h.b16 %v845
    %v1521 = vunpack.c.l.b16 %v846
    %v1522 = vunpack.c.h.b16 %v846
    %v1523 = vunpack.c.l.b16 %v847
    %v1524 = vunpack.c.h.b16 %v847
    %v1525 = vunpack.c.l.b16 %v848
    %v1526 = vunpack.c.h.b16 %v848
    %v1527 = vunpack.c.l.b16 %v849
    %v1528 = vunpack.c.h.b16 %v849
    %v1529 = vunpack.c.l.b16 %v850
    %v1530 = vunpack.c.h.b16 %v850
    %v1531 = vunpack.c.l.b16 %v851
    %v1532 = vunpack.c.h.b16 %v851
    %v1533 = vunpack.c.l.b16 %v852
    %v1534 = vunpack.c.h.b16 %v852
    %v1535 = vunpack.c.l.b16 %v853
    %v1536 = vunpack.c.h.b16 %v853
    %v1537 = vunpack.c.l.b16 %v854
    %v1538 = vunpack.c.h.b16 %v854
    %v1539 = vunpack.c.l.b16 %v855
    %v1540 = vunpack.c.h.b16 %v855
    %v1541 = vunpack.c.l.b16 %v856
    %v1542 = vunpack.c.h.b16 %v856
    %v1543 = vunpack.c.l.b16 %v857
    %v1544 = vunpack.c.h.b16 %v857
    %v1545 = vunpack.c.l.b16 %v858
    %v1546 = vunpack.c.h.b16 %v858
    %v1547 = vunpack.c.l.b16 %v859
    %v1548 = vunpack.c.h.b16 %v859
    %v1549 = vunpack.c.l.b16 %v860
    %v1550 = vunpack.c.h.b16 %v860
    %v1551 = vunpack.c.l.b16 %v861
    %v1552 = vunpack.c.h.b16 %v861
    %v1553 = vunpack.c.l.b16 %v862
    %v1554 = vunpack.c.h.b16 %v862
    %v1555 = vunpack.c.l.b16 %v863
    %v1556 = vunpack.c.h.b16 %v863
    %v1557 = vunpack.c.l.b16 %v864
    %v1558 = vunpack.c.h.b16 %v864
    %v1559 = vunpack.c.l.b16 %v865
    %v1560 = vunpack.c.h.b16 %v865
    %v1561 = vunpack.c.l.b16 %v866
    %v1562 = vunpack.c.h.b16 %v866
    %v1563 = vunpack.c.l.b16 %v867
    %v1564 = vunpack.c.h.b16 %v867
    %v1565 = vunpack.c.l.b16 %v868
    %v1566 = vunpack.c.h.b16 %v868
    %v1567 = vunpack.c.l.b16 %v869
    %v1568 = vunpack.c.h.b16 %v869
    %v1569 = vunpack.c.l.b16 %v870
    %v1570 = vunpack.c.h.b16 %v870
    %v1571 = vunpack.c.l.b16 %v871
    %v1572 = vunpack.c.h.b16 %v871
    %v1573 = vunpack.c.l.b16 %v872
    %v1574 = vunpack.c.h.b16 %v872
    %v1575 = vunpack.c.l.b16 %v873
    %v1576 = vunpack.c.h.b16 %v873
    %v1577 = vunpack.c.l.b16 %v874
    %v1578 = vunpack.c.h.b16 %v874
    %v1579 = vunpack.c.l.b16 %v875
    %v1580 = vunpack.c.h.b16 %v875
    %v1581 = vunpack.c.l.b16 %v876
    %v1582 = vunpack.c.h.b16 %v876
    %v1583 = vunpack.c.l.b16 %v877
    %v1584 = vunpack.c.h.b16 %v877
    %v1585 = vunpack.c.l.b16 %v878
    %v1586 = vunpack.c.h.b16 %v878
    %v1587 = vunpack.c.l.b16 %v879
    %v1588 = vunpack.c.h.b16 %v879
    %v1589 = vunpack.c.l.b16 %v880
    %v1590 = vunpack.c.h.b16 %v880
    %v1591 = vunpack.c.l.b16 %v881
    %v1592 = vunpack.c.h.b16 %v881
    %v1593 = vunpack.c.l.b16 %v882
    %v1594 = vunpack.c.h.b16 %v882
    %v1595 = vunpack.c.l.b16 %v883
    %v1596 = vunpack.c.h.b16 %v883
    %v1597 = vunpack.c.l.b16 %v884
    %v1598 = vunpack.c.h.b16 %v884
    %v1599 = vunpack.c.l.b16 %v885
    %v1600 = vunpack.c.h.b16 %v885
    %v1601 = vunpack.c.l.b16 %v886
    %v1602 = vunpack.c.h.b16 %v886
    %v1603 = vunpack.c.l.b16 %v887
    %v1604 = vunpack.c.h.b16 %v887
    %v1605 = vunpack.c.l.b16 %v888
    %v1606 = vunpack.c.h.b16 %v888
    %v1607 = vunpack.c.l.b16 %v889
    %v1608 = vunpack.c.h.b16 %v889
    %v1609 = vunpack.c.l.b16 %v890
    %v1610 = vunpack.c.h.b16 %v890
    %v1611 = vunpack.c.l.b16 %v891
    %v1612 = vunpack.c.h.b16 %v891
    %v1613 = vunpack.c.l.b16 %v892
    %v1614 = vunpack.c.h.b16 %v892
    %v1615 = vunpack.c.l.b16 %v893
    %v1616 = vunpack.c.h.b16 %v893
    %v1617 = vunpack.c.l.b16 %v894
    %v1618 = vunpack.c.h.b16 %v894
    %v1619 = vunpack.c.l.b16 %v895
    %v1620 = vunpack.c.h.b16 %v895
    %v1621 = vunpack.c.l.b16 %v896
    %v1622 = vunpack.c.h.b16 %v896
    %v1623 = vunpack.c.l.b16 %v897
    %v1624 = vunpack.c.h.b16 %v897
    %v1625 = vunpack.c.l.b16 %v898
    %v1626 = vunpack.c.h.b16 %v898
    %v1627 = vunpack.c.l.b16 %v899
    %v1628 = vunpack.c.h.b16 %v899
    %v1629 = vunpack.c.l.b16 %v900
    %v1630 = vunpack.c.h.b16 %v900
    %v1631 = vunpack.c.l.b16 %v901
    %v1632 = vunpack.c.h.b16 %v901
    %v1633 = vunpack.c.l.b16 %v902
    %v1634 = vunpack.c.h.b16 %v902
    %v1635 = vunpack.c.l.b16 %v903
    %v1636 = vunpack.c.h.b16 %v903
    %v1637 = vunpack.c.l.b16 %v904
    %v1638 = vunpack.c.h.b16 %v904
    %v1639 = vunpack.c.l.b16 %v905
    %v1640 = vunpack.c.h.b16 %v905
    %v1641 = vunpack.c.l.b16 %v906
    %v1642 = vunpack.c.h.b16 %v906
    %v1643 = vunpack.c.l.b16 %v907
    %v1644 = vunpack.c.h.b16 %v907
    %v1645 = vunpack.c.l.b16 %v908
    %v1646 = vunpack.c.h.b16 %v908
    %v1647 = vunpack.c.l.b16 %v909
    %v1648 = vunpack.c.h.b16 %v909
    %v1649 = vunpack.c.l.b16 %v910
    %v1650 = vunpack.c.h.b16 %v910
    %v1651 = vunpack.c.l.b16 %v911
    %v1652 = vunpack.c.h.b16 %v911
    %v1653 = vunpack.c.l.b16 %v912
    %v1654 = vunpack.c.h.b16 %v912
    %v1655 = vunpack.c.l.b16 %v913
    %v1656 = vunpack.c.h.b16 %v913
    %v1657 = vunpack.c.l.b16 %v914
    %v1658 = vunpack.c.h.b16 %v914
    %v1659 = vunpack.c.l.b16 %v915
    %v1660 = vunpack.c.h.b16 %v915
    %v1661 = vunpack.c.l.b16 %v916
    %v1662 = vunpack.c.h.b16 %v916
    %v1663 = vunpack.c.l.b16 %v917
    %v1664 = vunpack.c.h.b16 %v917
    %v1665 = vunpack.c.l.b16 %v918
    %v1666 = vunpack.c.h.b16 %v918
    %v1667 = vunpack.c.l.b16 %v919
    %v1668 = vunpack.c.h.b16 %v919
    %v1669 = vunpack.c.l.b16 %v920
    %v1670 = vunpack.c.h.b16 %v920
    %v1671 = vunpack.c.l.b16 %v921
    %v1672 = vunpack.c.h.b16 %v921
    %v1673 = vunpack.c.l.b16 %v922
    %v1674 = vunpack.c.h.b16 %v922
    %v1675 = vunpack.c.l.b16 %v923
    %v1676 = vunpack.c.h.b16 %v923
    %v1677 = vunpack.c.l.b16 %v924
    %v1678 = vunpack.c.h.b16 %v924
    %v1679 = vunpack.c.l.b16 %v925
    %v1680 = vunpack.c.h.b16 %v925
    %v1681 = vunpack.c.l.b16 %v926
    %v1682 = vunpack.c.h.b16 %v926
    %v1683 = vunpack.c.l.b16 %v927
    %v1684 = vunpack.c.h.b16 %v927
    %v1685 = vunpack.c.l.b16 %v928
    %v1686 = vunpack.c.h.b16 %v928
    %v1687 = vunpack.c.l.b16 %v929
    %v1688 = vunpack.c.h.b16 %v929
    %v1689 = vunpack.c.l.b16 %v930
    %v1690 = vunpack.c.h.b16 %v930
    %v1691 = vunpack.c.l.b16 %v931
    %v1692 = vunpack.c.h.b16 %v931
    %v1693 = vunpack.c.l.b16 %v932
    %v1694 = vunpack.c.h.b16 %v932
    %v1695 = vunpack.c.l.b16 %v933
    %v1696 = vunpack.c.h.b16 %v933
    %v1697 = vunpack.c.l.b16 %v934
    %v1698 = vunpack.c.h.b16 %v934
    %v1699 = vunpack.c.l.b16 %v935
    %v1700 = vunpack.c.h.b16 %v935
    %v1701 = vunpack.c.l.b16 %v936
    %v1702 = vunpack.c.h.b16 %v936
    %v1703 = vunpack.c.l.b16 %v937
    %v1704 = vunpack.c.h.b16 %v937
    %v1705 = vunpack.c.l.b16 %v938
    %v1706 = vunpack.c.h.b16 %v938
    %v1707 = vunpack.c.l.b16 %v939
    %v1708 = vunpack.c.h.b16 %v939
    %v1709 = vunpack.c.l.b16 %v940
    %v1710 = vunpack.c.h.b16 %v940
    %v1711 = vunpack.c.l.b16 %v941
    %v1712 = vunpack.c.h.b16 %v941
    %v1713 = vunpack.c.l.b16 %v942
    %v1714 = vunpack.c.h.b16 %v942
    %v1715 = vunpack.c.l.b16 %v943
    %v1716 = vunpack.c.h.b16 %v943
    %v1717 = vunpack.c.l.b16 %v944
    %v1718 = vunpack.c.h.b16 %v944
    %v1719 = vunpack.c.l.b16 %v945
    %v1720 = vunpack.c.h.b16 %v945
    %v1721 = vunpack.c.l.b16 %v946
    %v1722 = vunpack.c.h.b16 %v946
    %v1723 = vunpack.c.l.b16 %v947
    %v1724 = vunpack.c.h.b16 %v947
    %v1725 = vunpack.c.l.b16 %v948
    %v1726 = vunpack.c.h.b16 %v948
    %v1727 = vunpack.c.l.b16 %v949
    %v1728 = vunpack.c.h.b16 %v949
    %v1729 = vunpack.c.l.b16 %v950
    %v1730 = vunpack.c.h.b16 %v950
    %v1731 = vunpack.c.l.b16 %v951
    %v1732 = vunpack.c.h.b16 %v951
    %v1733 = vunpack.c.l.b16 %v952
    %v1734 = vunpack.c.h.b16 %v952
    %v1735 = vunpack.c.l.b16 %v953
    %v1736 = vunpack.c.h.b16 %v953
    %v1737 = vunpack.c.l.b16 %v954
    %v1738 = vunpack.c.h.b16 %v954
    %v1739 = vunpack.c.l.b16 %v955
    %v1740 = vunpack.c.h.b16 %v955
    %v1741 = vunpack.c.l.b16 %v956
    %v1742 = vunpack.c.h.b16 %v956
    %v1743 = vunpack.c.l.b16 %v957
    %v1744 = vunpack.c.h.b16 %v957
    %v1745 = vunpack.c.l.b16 %v958
    %v1746 = vunpack.c.h.b16 %v958
    %v1747 = vunpack.c.l.b16 %v959
    %v1748 = vunpack.c.h.b16 %v959
    %v1749 = vunpack.c.l.b16 %v960
    %v1750 = vunpack.c.h.b16 %v960
    %v1751 = vunpack.c.l.b16 %v961
    %v1752 = vunpack.c.h.b16 %v961
    %v1753 = vunpack.c.l.b16 %v962
    %v1754 = vunpack.c.h.b16 %v962
    %v1755 = vunpack.c.l.b16 %v963
    %v1756 = vunpack.c.h.b16 %v963
    %v1757 = vunpack.c.l.b16 %v964
    %v1758 = vunpack.c.h.b16 %v964
    %v1759 = vunpack.c.l.b16 %v965
    %v1760 = vunpack.c.h.b16 %v965
    %v1761 = vunpack.c.l.b16 %v966
    %v1762 = vunpack.c.h.b16 %v966
    %v1763 = vunpack.c.l.b16 %v967
    %v1764 = vunpack.c.h.b16 %v967
    %v1765 = vunpack.c.l.b16 %v968
    %v1766 = vunpack.c.h.b16 %v968
    %v1767 = vunpack.c.l.b16 %v969
    %v1768 = vunpack.c.h.b16 %v969
    %v1769 = vunpack.c.l.b16 %v970
    %v1770 = vunpack.c.h.b16 %v970
    %v1771 = vunpack.c.l.b16 %v971
    %v1772 = vunpack.c.h.b16 %v971
    %v1773 = vunpack.c.l.b16 %v972
    %v1774 = vunpack.c.h.b16 %v972
    %v1775 = vunpack.c.l.b16 %v973
    %v1776 = vunpack.c.h.b16 %v973
    %v1777 = vunpack.c.l.b16 %v974
    %v1778 = vunpack.c.h.b16 %v974
    %v1779 = vunpack.c.l.b16 %v975
    %v1780 = vunpack.c.h.b16 %v975
    %v1781 = vunpack.c.l.b16 %v976
    %v1782 = vunpack.c.h.b16 %v976
    %v1783 = vunpack.c.l.b16 %v977
    %v1784 = vunpack.c.h.b16 %v977
    %v1785 = vunpack.c.l.b16 %v978
    %v1786 = vunpack.c.h.b16 %v978
    %v1787 = vunpack.c.l.b16 %v979
    %v1788 = vunpack.c.h.b16 %v979
    %v1789 = vunpack.c.l.b16 %v980
    %v1790 = vunpack.c.h.b16 %v980
    %v1791 = vunpack.c.l.b16 %v981
    %v1792 = vunpack.c.h.b16 %v981
    %v1793 = vunpack.c.l.b16 %v982
    %v1794 = vunpack.c.h.b16 %v982
    %v1795 = vunpack.c.l.b16 %v983
    %v1796 = vunpack.c.h.b16 %v983
    %v1797 = vunpack.c.l.b16 %v984
    %v1798 = vunpack.c.h.b16 %v984
    %v1799 = vunpack.c.l.b16 %v985
    %v1800 = vunpack.c.h.b16 %v985
    %v1801 = vunpack.c.l.b16 %v986
    %v1802 = vunpack.c.h.b16 %v986
    %v1803 = vunpack.c.l.b16 %v987
    %v1804 = vunpack.c.h.b16 %v987
    %v1805 = vunpack.c.l.b16 %v988
    %v1806 = vunpack.c.h.b16 %v988
    %v1807 = vunpack.c.l.b16 %v989
    %v1808 = vunpack.c.h.b16 %v989
    %v1809 = vunpack.c.l.b16 %v990
    %v1810 = vunpack.c.h.b16 %v990
    %v1811 = vunpack.c.l.b16 %v991
    %v1812 = vunpack.c.h.b16 %v991
    %v1813 = vunpack.c.l.b16 %v992
    %v1814 = vunpack.c.h.b16 %v992
    %v1815 = vunpack.c.l.b16 %v993
    %v1816 = vunpack.c.h.b16 %v993
    %v1817 = vunpack.c.l.b16 %v994
    %v1818 = vunpack.c.h.b16 %v994
    %v1819 = vunpack.c.l.b16 %v995
    %v1820 = vunpack.c.h.b16 %v995
    %v1821 = vunpack.c.l.b16 %v996
    %v1822 = vunpack.c.h.b16 %v996
    %v1823 = vunpack.c.l.b16 %v997
    %v1824 = vunpack.c.h.b16 %v997
    %v1825 = vunpack.c.l.b16 %v998
    %v1826 = vunpack.c.h.b16 %v998
    %v1827 = vunpack.c.l.b16 %v999
    %v1828 = vunpack.c.h.b16 %v999
    %v1829 = vunpack.c.l.b16 %v1000
    %v1830 = vunpack.c.h.b16 %v1000
    %v1831 = vunpack.c.l.b16 %v1001
    %v1832 = vunpack.c.h.b16 %v1001
    %v1833 = vunpack.c.l.b16 %v1002
    %v1834 = vunpack.c.h.b16 %v1002
    %v1835 = vunpack.c.l.b16 %v1003
    %v1836 = vunpack.c.h.b16 %v1003
    %v1837 = vunpack.c.l.b16 %v1004
    %v1838 = vunpack.c.h.b16 %v1004
    %v1839 = vunpack.c.l.b16 %v1005
    %v1840 = vunpack.c.h.b16 %v1005
    %v1841 = vunpack.c.l.b16 %v1006
    %v1842 = vunpack.c.h.b16 %v1006
    %v1843 = vunpack.c.l.b16 %v1007
    %v1844 = vunpack.c.h.b16 %v1007
    %v1845 = vunpack.c.l.b16 %v1008
    %v1846 = vunpack.c.h.b16 %v1008
    %v1847 = vunpack.c.l.b16 %v1009
    %v1848 = vunpack.c.h.b16 %v1009
    %v1849 = vunpack.c.l.b16 %v1010
    %v1850 = vunpack.c.h.b16 %v1010
    %v1851 = vunpack.c.l.b16 %v1011
    %v1852 = vunpack.c.h.b16 %v1011
    %v1853 = vunpack.c.l.b16 %v1012
    %v1854 = vunpack.c.h.b16 %v1012
    %v1855 = vunpack.c.l.b16 %v1013
    %v1856 = vunpack.c.h.b16 %v1013
    %v1857 = vunpack.c.l.b16 %v1014
    %v1858 = vunpack.c.h.b16 %v1014
    %v1859 = vunpack.c.l.b16 %v1015
    %v1860 = vunpack.c.h.b16 %v1015
    %v1861 = vunpack.c.l.b16 %v1016
    %v1862 = vunpack.c.h.b16 %v1016
    %v1863 = vunpack.c.l.b16 %v1017
    %v1864 = vunpack.c.h.b16 %v1017
    %v1865 = vunpack.c.l.b16 %v1018
    %v1866 = vunpack.c.h.b16 %v1018
    %v1867 = vunpack.c.l.b16 %v1019
    %v1868 = vunpack.c.h.b16 %v1019
    %v1869 = vunpack.c.l.b16 %v1020
    %v1870 = vunpack.c.h.b16 %v1020
    %v1871 = vunpack.c.l.b16 %v1021
    %v1872 = vunpack.c.h.b16 %v1021
    %v1873 = vunpack.c.l.b16 %v1022
    %v1874 = vunpack.c.h.b16 %v1022
    %v1875 = vunpack.c.l.b16 %v1023
    %v1876 = vunpack.c.h.b16 %v1023
    %v1877 = vunpack.c.l.b16 %v1024
    %v1878 = vunpack.c.h.b16 %v1024
    %v1879 = vunpack.c.l.b16 %v1025
    %v1880 = vunpack.c.h.b16 %v1025
    %v1881 = vunpack.c.l.b16 %v1026
    %v1882 = vunpack.c.h.b16 %v1026
    %v1883 = vunpack.c.l.b16 %v1027
    %v1884 = vunpack.c.h.b16 %v1027
    %v1885 = vunpack.c.l.b16 %v1028
    %v1886 = vunpack.c.h.b16 %v1028
    %v1887 = vunpack.c.l.b16 %v1029
    %v1888 = vunpack.c.h.b16 %v1029
    %v1889 = vunpack.c.l.b16 %v1030
    %v1890 = vunpack.c.h.b16 %v1030
    %v1891 = vunpack.c.l.b16 %v1031
    %v1892 = vunpack.c.h.b16 %v1031
    %v1893 = vunpack.c.l.b16 %v1032
    %v1894 = vunpack.c.h.b16 %v1032
    %v1895 = vunpack.c.l.b16 %v1033
    %v1896 = vunpack.c.h.b16 %v1033
    %v1897 = vunpack.c.l.b16 %v1034
    %v1898 = vunpack.c.h.b16 %v1034
    %v1899 = vunpack.c.l.b16 %v1035
    %v1900 = vunpack.c.h.b16 %v1035
    %v1901 = vunpack.c.l.b16 %v1036
    %v1902 = vunpack.c.h.b16 %v1036
    %v1903 = vunpack.c.l.b16 %v1037
    %v1904 = vunpack.c.h.b16 %v1037
    %v1905 = vunpack.c.l.b16 %v1038
    %v1906 = vunpack.c.h.b16 %v1038
    %v1907 = vunpack.c.l.b16 %v1039
    %v1908 = vunpack.c.h.b16 %v1039
    %v1909 = vunpack.c.l.b16 %v1040
    %v1910 = vunpack.c.h.b16 %v1040
    %v1911 = vunpack.c.l.b16 %v1041
    %v1912 = vunpack.c.h.b16 %v1041
    %v1913 = vunpack.c.l.b16 %v1042
    %v1914 = vunpack.c.h.b16 %v1042
    %v1915 = vunpack.c.l.b16 %v1043
    %v1916 = vunpack.c.h.b16 %v1043
    %v1917 = vunpack.c.l.b16 %v1044
    %v1918 = vunpack.c.h.b16 %v1044
    %v1919 = vunpack.c.l.b16 %v1045
    %v1920 = vunpack.c.h.b16 %v1045
    %v1921 = vunpack.c.l.b16 %v1046
    %v1922 = vunpack.c.h.b16 %v1046
    %v1923 = vunpack.c.l.b16 %v1047
    %v1924 = vunpack.c.h.b16 %v1047
    %v1925 = vunpack.c.l.b16 %v1048
    %v1926 = vunpack.c.h.b16 %v1048
    %v1927 = vunpack.c.l.b16 %v1049
    %v1928 = vunpack.c.h.b16 %v1049
    %v1929 = vunpack.c.l.b16 %v1050
    %v1930 = vunpack.c.h.b16 %v1050
    %v1931 = vunpack.c.l.b16 %v1051
    %v1932 = vunpack.c.h.b16 %v1051
    %v1933 = vunpack.c.l.b16 %v1052
    %v1934 = vunpack.c.h.b16 %v1052
    %v1935 = vunpack.c.l.b16 %v1053
    %v1936 = vunpack.c.h.b16 %v1053
    %v1937 = vunpack.c.l.b16 %v1054
    %v1938 = vunpack.c.h.b16 %v1054
    %v1939 = vunpack.c.l.b16 %v1055
    %v1940 = vunpack.c.h.b16 %v1055
    %v1941 = vunpack.c.l.b16 %v1056
    %v1942 = vunpack.c.h.b16 %v1056
    %v1943 = vunpack.c.l.b16 %v1057
    %v1944 = vunpack.c.h.b16 %v1057
    %v1945 = vunpack.c.l.b16 %v1058
    %v1946 = vunpack.c.h.b16 %v1058
    %v1947 = vunpack.c.l.b16 %v1059
    %v1948 = vunpack.c.h.b16 %v1059
    %v1949 = vunpack.c.l.b16 %v1060
    %v1950 = vunpack.c.h.b16 %v1060
    %v1951 = vunpack.c.l.b16 %v1061
    %v1952 = vunpack.c.h.b16 %v1061
    %v1953 = vunpack.c.l.b16 %v1062
    %v1954 = vunpack.c.h.b16 %v1062
    %v1955 = vunpack.c.l.b16 %v1063
    %v1956 = vunpack.c.h.b16 %v1063
    %v1957 = vunpack.c.l.b16 %v1064
    %v1958 = vunpack.c.h.b16 %v1064
    %v1959 = vunpack.c.l.b16 %v1065
    %v1960 = vunpack.c.h.b16 %v1065
    %v1961 = vunpack.c.l.b16 %v1066
    %v1962 = vunpack.c.h.b16 %v1066
    %v1963 = vpack.c.b16 %v1393, %v1387
    %v1964 = vpack.c.b16 %v1394, %v1388
    %v1965 = vpack.c.b16 %v1395, %v1389
    %v1966 = vpack.c.b16 %v1396, %v1390
    %v1967 = vpack.c.b16 %v1397, %v1391
    %v1968 = vpack.c.b16 %v1398, %v1392
    %v1969 = vpack.c.b16 %v1405, %v1399
    %v1970 = vpack.c.b16 %v1406, %v1400
    %v1971 = vpack.c.b16 %v1407, %v1401
    %v1972 = vpack.c.b16 %v1408, %v1402
    %v1973 = vpack.c.b16 %v1409, %v1403
    %v1974 = vpack.c.b16 %v1410, %v1404
    %v1975 = vpack.c.b16 %v1417, %v1411
    %v1976 = vpack.c.b16 %v1418, %v1412
    %v1977 = vpack.c.b16 %v1419, %v1413
    %v1978 = vpack.c.b16 %v1420, %v1414
    %v1979 = vpack.c.b16 %v1421, %v1415
    %v1980 = vpack.c.b16 %v1422, %v1416
    %v1981 = vpack.c.b16 %v1429, %v1423
    %v1982 = vpack.c.b16 %v1430, %v1424
    %v1983 = vpack.c.b16 %v1431, %v1425
    %v1984 = vpack.c.b16 %v1432, %v1426
    %v1985 = vpack.c.b16 %v1433, %v1427
    %v1986 = vpack.c.b16 %v1434, %v1428
    %v1987 = vpack.c.b16 %v1441, %v1435
    %v1988 = vpack.c.b16 %v1442, %v1436
    %v1989 = vpack.c.b16 %v1443, %v1437
    %v1990 = vpack.c.b16 %v1444, %v1438
    %v1991 = vpack.c.b16 %v1445, %v1439
    %v1992 = vpack.c.b16 %v1446, %v1440
    %v1993 = vpack.c.b16 %v1453, %v1447
    %v1994 = vpack.c.b16 %v1454, %v1448
    %v1995 = vpack.c.b16 %v1455, %v1449
    %v1996 = vpack.c.b16 %v1456, %v1450
    %v1997 = vpack.c.b16 %v1457, %v1451
    %v1998 = vpack.c.b16 %v1458, %v1452
    %v1999 = vpack.c.b16 %v1465, %v1459
    %v2000 = vpack.c.b16 %v1466, %v1460
    %v2001 = vpack.c.b16 %v1467, %v1461
    %v2002 = vpack.c.b16 %v1468, %v1462
    %v2003 = vpack.c.b16 %v1469, %v1463
    %v2004 = vpack.c.b16 %v1470, %v1464
    %v2005 = vpack.c.b16 %v1477, %v1471
    %v2006 = vpack.c.b16 %v1478, %v1472
    %v2007 = vpack.c.b16 %v1479, %v1473
    %v2008 = vpack.c.b16 %v1480, %v1474
    %v2009 = vpack.c.b16 %v1481, %v1475
    %v2010 = vpack.c.b16 %v1482, %v1476
    %v2011 = vpack.c.b16 %v1489, %v1483
    %v2012 = vpack.c.b16 %v1490, %v1484
    %v2013 = vpack.c.b16 %v1491, %v1485
    %v2014 = vpack.c.b16 %v1492, %v1486
    %v2015 = vpack.c.b16 %v1493, %v1487
    %v2016 = vpack.c.b16 %v1494, %v1488
    %v2017 = vpack.c.b16 %v1501, %v1495
    %v2018 = vpack.c.b16 %v1502, %v1496
    %v2019 = vpack.c.b16 %v1503, %v1497
    %v2020 = vpack.c.b16 %v1504, %v1498
    %v2021 = vpack.c.b16 %v1505, %v1499
    %v2022 = vpack.c.b16 %v1506, %v1500
    %v2023 = vpack.c.b16 %v1513, %v1507
    %v2024 = vpack.c.b16 %v1514, %v1508
    %v2025 = vpack.c.b16 %v1515, %v1509
    %v2026 = vpack.c.b16 %v1516, %v1510
    %v2027 = vpack.c.b16 %v1517, %v1511
    %v2028 = vpack.c.b16 %v1518, %v1512
    %v2029 = vpack.c.b16 %v1525, %v1519
    %v2030 = vpack.c.b16 %v1526, %v1520
    %v2031 = vpack.c.b16 %v1527, %v1521
    %v2032 = vpack.c.b16 %v1528, %v1522
    %v2033 = vpack.c.b16 %v1529, %v1523
    %v2034 = vpack.c.b16 %v1530, %v1524
    %v2035 = vpack.c.b16 %v1537, %v1531
    %v2036 = vpack.c.b16 %v1538, %v1532
    %v2037 = vpack.c.b16 %v1539, %v1533
    %v2038 = vpack.c.b16 %v1540, %v1534
    %v2039 = vpack.c.b16 %v1541, %v1535
    %v2040 = vpack.c.b16 %v1542, %v1536
    %v2041 = vpack.c.b16 %v1549, %v1543
    %v2042 = vpack.c.b16 %v1550, %v1544
    %v2043 = vpack.c.b16 %v1551, %v1545
    %v2044 = vpack.c.b16 %v1552, %v1546
    %v2045 = vpack.c.b16 %v1553, %v1547
    %v2046 = vpack.c.b16 %v1554, %v1548
    %v2047 = vpack.c.b16 %v1561, %v1555
    %v2048 = vpack.c.b16 %v1562, %v1556
    %v2049 = vpack.c.b16 %v1563, %v1557
    %v2050 = vpack.c.b16 %v1564, %v1558
    %v2051 = vpack.c.b16 %v1565, %v1559
    %v2052 = vpack.c.b16 %v1566, %v1560
    %v2053 = vpack.c.b16 %v1573, %v1567
    %v2054 = vpack.c.b16 %v1574, %v1568
    %v2055 = vpack.c.b16 %v1575, %v1569
    %v2056 = vpack.c.b16 %v1576, %v1570
    %v2057 = vpack.c.b16 %v1577, %v1571
    %v2058 = vpack.c.b16 %v1578, %v1572
    %v2059 = vpack.c.b16 %v1585, %v1579
    %v2060 = vpack.c.b16 %v1586, %v1580
    %v2061 = vpack.c.b16 %v1587, %v1581
    %v2062 = vpack.c.b16 %v1588, %v1582
    %v2063 = vpack.c.b16 %v1589, %v1583
    %v2064 = vpack.c.b16 %v1590, %v1584
    %v2065 = vpack.c.b16 %v1597, %v1591
    %v2066 = vpack.c.b16 %v1598, %v1592
    %v2067 = vpack.c.b16 %v1599, %v1593
    %v2068 = vpack.c.b16 %v1600, %v1594
    %v2069 = vpack.c.b16 %v1601, %v1595
    %v2070 = vpack.c.b16 %v1602, %v1596
    %v2071 = vpack.c.b16 %v1609, %v1603
    %v2072 = vpack.c.b16 %v1610, %v1604
    %v2073 = vpack.c.b16 %v1611, %v1605
    %v2074 = vpack.c.b16 %v1612, %v1606
    %v2075 = vpack.c.b16 %v1613, %v1607
    %v2076 = vpack.c.b16 %v1614, %v1608
    %v2077 = vpack.c.b16 %v1621, %v1615
    %v2078 = vpack.c.b16 %v1622, %v1616
    %v2079 = vpack.c.b16 %v1623, %v1617
    %v2080 = vpack.c.b16 %v1624, %v1618
    %v2081 = vpack.c.b16 %v1625, %v1619
    %v2082 = vpack.c.b16 %v1626, %v1620
    %v2083 = vpack.c.b16 %v1633, %v1627
    %v2084 = vpack.c.b16 %v1634, %v1628
    %v2085 = vpack.c.b16 %v1635, %v1629
    %v2086 = vpack.c.b16 %v1636, %v1630
    %v2087 = vpack.c.b16 %v1637, %v1631
    %v2088 = vpack.c.b16 %v1638, %v1632
    %v2089 = vpack.c.b16 %v1645, %v1639
    %v2090 = vpack.c.b16 %v1646, %v1640
    %v2091 = vpack.c.b16 %v1647, %v1641
    %v2092 = vpack.c.b16 %v1648, %v1642
    %v2093 = vpack.c.b16 %v1649, %v1643
    %v2094 = vpack.c.b16 %v1650, %v1644
    %v2095 = vpack.c.b16 %v1657, %v1651
    %v2096 = vpack.c.b16 %v1658, %v1652
    %v2097 = vpack.c.b16 %v1659, %v1653
    %v2098 = vpack.c.b16 %v1660, %v1654
    %v2099 = vpack.c.b16 %v1661, %v1655
    %v2100 = vpack.c.b16 %v1662, %v1656
    %v2101 = vpack.c.b16 %v1669, %v1663
    %v2102 = vpack.c.b16 %v1670, %v1664
    %v2103 = vpack.c.b16 %v1671, %v1665
    %v2104 = vpack.c.b16 %v1672, %v1666
    %v2105 = vpack.c.b16 %v1673, %v1667
    %v2106 = vpack.c.b16 %v1674, %v1668
    %v2107 = vpack.c.b16 %v1681, %v1675
    %v2108 = vpack.c.b16 %v1682, %v1676
    %v2109 = vpack.c.b16 %v1683, %v1677
    %v2110 = vpack.c.b16 %v1684, %v1678
    %v2111 = vpack.c.b16 %v1685, %v1679
    %v2112 = vpack.c.b16 %v1686, %v1680
    %v2113 = vpack.c.b16 %v1693, %v1687
    %v2114 = vpack.c.b16 %v1694, %v1688
    %v2115 = vpack.c.b16 %v1695, %v1689
    %v2116 = vpack.c.b16 %v1696, %v1690
    %v2117 = vpack.c.b16 %v1697, %v1691
    %v2118 = vpack.c.b16 %v1698, %v1692
    %v2119 = vpack.c.b16 %v1705, %v1699
    %v2120 = vpack.c.b16 %v1706, %v1700
    %v2121 = vpack.c.b16 %v1707, %v1701
    %v2122 = vpack.c.b16 %v1708, %v1702
    %v2123 = vpack.c.b16 %v1709, %v1703
    %v2124 = vpack.c.b16 %v1710, %v1704
    %v2125 = vpack.c.b16 %v1717, %v1711
    %v2126 = vpack.c.b16 %v1718, %v1712
    %v2127 = vpack.c.b16 %v1719, %v1713
    %v2128 = vpack.c.b16 %v1720, %v1714
    %v2129 = vpack.c.b16 %v1721, %v1715
    %v2130 = vpack.c.b16 %v1722, %v1716
    %v2131 = vpack.c.b16 %v1729, %v1723
    %v2132 = vpack.c.b16 %v1730, %v1724
    %v2133 = vpack.c.b16 %v1731, %v1725
    %v2134 = vpack.c.b16 %v1732, %v1726
    %v2135 = vpack.c.b16 %v1733, %v1727
    %v2136 = vpack.c.b16 %v1734, %v1728
    %v2137 = vpack.c.b16 %v1741, %v1735
    %v2138 = vpack.c.b16 %v1742, %v1736
    %v2139 = vpack.c.b16 %v1743, %v1737
    %v2140 = vpack.c.b16 %v1744, %v1738
    %v2141 = vpack.c.b16 %v1745, %v1739
    %v2142 = vpack.c.b16 %v1746, %v1740
    %v2143 = vpack.c.b16 %v1753, %v1747
    %v2144 = vpack.c.b16 %v1754, %v1748
    %v2145 = vpack.c.b16 %v1755, %v1749
    %v2146 = vpack.c.b16 %v1756, %v1750
    %v2147 = vpack.c.b16 %v1757, %v1751
    %v2148 = vpack.c.b16 %v1758, %v1752
    %v2149 = vpack.c.b16 %v1765, %v1759
    %v2150 = vpack.c.b16 %v1766, %v1760
    %v2151 = vpack.c.b16 %v1767, %v1761
    %v2152 = vpack.c.b16 %v1768, %v1762
    %v2153 = vpack.c.b16 %v1769, %v1763
    %v2154 = vpack.c.b16 %v1770, %v1764
    %v2155 = vpack.c.b16 %v1777, %v1771
    %v2156 = vpack.c.b16 %v1778, %v1772
    %v2157 = vpack.c.b16 %v1779, %v1773
    %v2158 = vpack.c.b16 %v1780, %v1774
    %v2159 = vpack.c.b16 %v1781, %v1775
    %v2160 = vpack.c.b16 %v1782, %v1776
    %v2161 = vpack.c.b16 %v1789, %v1783
    %v2162 = vpack.c.b16 %v1790, %v1784
    %v2163 = vpack.c.b16 %v1791, %v1785
    %v2164 = vpack.c.b16 %v1792, %v1786
    %v2165 = vpack.c.b16 %v1793, %v1787
    %v2166 = vpack.c.b16 %v1794, %v1788
    %v2167 = vpack.c.b16 %v1801, %v1795
    %v2168 = vpack.c.b16 %v1802, %v1796
    %v2169 = vpack.c.b16 %v1803, %v1797
    %v2170 = vpack.c.b16 %v1804, %v1798
    %v2171 = vpack.c.b16 %v1805, %v1799
    %v2172 = vpack.c.b16 %v1806, %v1800
    %v2173 = vpack.c.b16 %v1813, %v1807
    %v2174 = vpack.c.b16 %v1814, %v1808
    %v2175 = vpack.c.b16 %v1815, %v1809
    %v2176 = vpack.c.b16 %v1816, %v1810
    %v2177 = vpack.c.b16 %v1817, %v1811
    %v2178 = vpack.c.b16 %v1818, %v1812
    %v2179 = vpack.c.b16 %v1825, %v1819
    %v2180 = vpack.c.b16 %v1826, %v1820
    %v2181 = vpack.c.b16 %v1827, %v1821
    %v2182 = vpack.c.b16 %v1828, %v1822
    %v2183 = vpack.c.b16 %v1829, %v1823
    %v2184 = vpack.c.b16 %v1830, %v1824
    %v2185 = vpack.c.b16 %v1837, %v1831
    %v2186 = vpack.c.b16 %v1838, %v1832
    %v2187 = vpack.c.b16 %v1839, %v1833
    %v2188 = vpack.c.b16 %v1840, %v1834
    %v2189 = vpack.c.b16 %v1841, %v1835
    %v2190 = vpack.c.b16 %v1842, %v1836
    %v2191 = vpack.c.b16 %v1849, %v1843
    %v2192 = vpack.c.b16 %v1850, %v1844
    %v2193 = vpack.c.b16 %v1851, %v1845
    %v2194 = vpack.c.b16 %v1852, %v1846
    %v2195 = vpack.c.b16 %v1853, %v1847
    %v2196 = vpack.c.b16 %v1854, %v1848
    %v2197 = vpack.c.b16 %v1861, %v1855
    %v2198 = vpack.c.b16 %v1862, %v1856
    %v2199 = vpack.c.b16 %v1863, %v1857
    %v2200 = vpack.c.b16 %v1864, %v1858
    %v2201 = vpack.c.b16 %v1865, %v1859
    %v2202 = vpack.c.b16 %v1866, %v1860
    %v2203 = vpack.c.b16 %v1873, %v1867
    %v2204 = vpack.c.b16 %v1874, %v1868
    %v2205 = vpack.c.b16 %v1875, %v1869
    %v2206 = vpack.c.b16 %v1876, %v1870
    %v2207 = vpack.c.b16 %v1877, %v1871
    %v2208 = vpack.c.b16 %v1878, %v1872
    %v2209 = vpack.c.b16 %v1885, %v1879
    %v2210 = vpack.c.b16 %v1886, %v1880
    %v2211 = vpack.c.b16 %v1887, %v1881
    %v2212 = vpack.c.b16 %v1888, %v1882
    %v2213 = vpack.c.b16 %v1889, %v1883
    %v2214 = vpack.c.b16 %v1890, %v1884
    %v2215 = vpack.c.b16 %v1897, %v1891
    %v2216 = vpack.c.b16 %v1898, %v1892
    %v2217 = vpack.c.b16 %v1899, %v1893
    %v2218 = vpack.c.b16 %v1900, %v1894
    %v2219 = vpack.c.b16 %v1901, %v1895
    %v2220 = vpack.c.b16 %v1902, %v1896
    %v2221 = vpack.c.b16 %v1909, %v1903
    %v2222 = vpack.c.b16 %v1910, %v1904
    %v2223 = vpack.c.b16 %v1911, %v1905
    %v2224 = vpack.c.b16 %v1912, %v1906
    %v2225 = vpack.c.b16 %v1913, %v1907
    %v2226 = vpack.c.b16 %v1914, %v1908
    %v2227 = vpack.c.b16 %v1921, %v1915
    %v2228 = vpack.c.b16 %v1922, %v1916
    %v2229 = vpack.c.b16 %v1923, %v1917
    %v2230 = vpack.c.b16 %v1924, %v1918
    %v2231 = vpack.c.b16 %v1925, %v1919
    %v2232 = vpack.c.b16 %v1926, %v1920
    %v2233 = vpack.c.b16 %v1933, %v1927
    %v2234 = vpack.c.b16 %v1934, %v1928
    %v2235 = vpack.c.b16 %v1935, %v1929
    %v2236 = vpack.c.b16 %v1936, %v1930
    %v2237 = vpack.c.b16 %v1937, %v1931
    %v2238 = vpack.c.b16 %v1938, %v1932
    %v2239 = vpack.c.b16 %v1945, %v1939
    %v2240 = vpack.c.b16 %v1946, %v1940
    %v2241 = vpack.c.b16 %v1947, %v1941
    %v2242 = vpack.c.b16 %v1948, %v1942
    %v2243 = vpack.c.b16 %v1949, %v1943
    %v2244 = vpack.c.b16 %v1950, %v1944
    %v2245 = vpack.c.b16 %v1957, %v1951
    %v2246 = vpack.c.b16 %v1958, %v1952
    %v2247 = vpack.c.b16 %v1959, %v1953
    %v2248 = vpack.c.b16 %v1960, %v1954
    %v2249 = vpack.c.b16 %v1961, %v1955
    %v2250 = vpack.c.b16 %v1962, %v1956
    %2539 = vmatprep.subr.bf16.mxu0 %v1964
    %2540 = vmatpush1.bf16.msra.mxu0 %v1963
    %2541 = vmatprep.subr.bf16.mxu0 %v1970
    %2542 = vmatpush1.bf16.msra.mxu0 %v1969
    %2543 = vmatprep.subr.bf16.mxu0 %v1976
    %2544 = vmatpush1.bf16.msra.mxu0 %v1975
    %2545 = vmatprep.subr.bf16.mxu0 %v1982
    %2546 = vmatpush1.bf16.msra.mxu0 %v1981
    %2547 = vmatprep.subr.bf16.mxu0 %v1988
    %2548 = vmatpush1.bf16.msra.mxu0 %v1987
    %2549 = vmatprep.subr.bf16.mxu0 %v1994
    %2550 = vmatpush1.bf16.msra.mxu0 %v1993
    %2551 = vmatprep.subr.bf16.mxu0 %v2000
    %2552 = vmatpush1.bf16.msra.mxu0 %v1999
    %2553 = vmatprep.subr.bf16.mxu0 %v2006
    %2554 = vmatpush1.bf16.msra.mxu0 %v2005
    %2555 = vmatprep.subr.bf16.mxu0 %v2012
    %2556 = vmatpush1.bf16.msra.mxu0 %v2011
    %2557 = vmatprep.subr.bf16.mxu0 %v2018
    %2558 = vmatpush1.bf16.msra.mxu0 %v2017
    %2559 = vmatprep.subr.bf16.mxu0 %v2024
    %2560 = vmatpush1.bf16.msra.mxu0 %v2023
    %2561 = vmatprep.subr.bf16.mxu0 %v2030
    %2562 = vmatpush1.bf16.msra.mxu0 %v2029
    %2563 = vmatprep.subr.bf16.mxu0 %v2036
    %2564 = vmatpush1.bf16.msra.mxu0 %v2035
    %2565 = vmatprep.subr.bf16.mxu0 %v2042
    %2566 = vmatpush1.bf16.msra.mxu0 %v2041
    %2567 = vmatprep.subr.bf16.mxu0 %v2048
    %2568 = vmatpush1.bf16.msra.mxu0 %v2047
    %2569 = vmatprep.subr.bf16.mxu0 %v2054
    %2570 = vmatpush1.bf16.msra.mxu0 %v2053
    %2571 = vmatprep.mubr.bf16.mxu0 %v774
    %2572 = vmatmul.mubr.bf16.gmra.mrb[0].mxu0 %v773
    %v2573 = vpop.f32.mrb[0].mxu0
    %v2574 = vadd.f32 %v1072, %v2573
    %v2575 = vpop.f32.mrb[0].mxu0
    %v2576 = vadd.f32 %v1076, %v2575
    %v2577 = vpop.f32.mrb[0].mxu0
    %v2578 = vadd.f32 %v1072, %v2577
    %v2579 = vpop.f32.mrb[0].mxu0
    %v2580 = vadd.f32 %v1076, %v2579
    %2581 = vdwg.mxu0
    %2582 = vmatprep.subr.bf16.mxu0 %v2060
    %2583 = vmatpush1.bf16.msra.mxu0 %v2059
    %2584 = vmatprep.subr.bf16.mxu0 %v2066
    %2585 = vmatpush1.bf16.msra.mxu0 %v2065
    %2586 = vmatprep.subr.bf16.mxu0 %v2072
    %2587 = vmatpush1.bf16.msra.mxu0 %v2071
    %2588 = vmatprep.subr.bf16.mxu0 %v2078
    %2589 = vmatpush1.bf16.msra.mxu0 %v2077
    %2590 = vmatprep.subr.bf16.mxu0 %v2084
    %2591 = vmatpush1.bf16.msra.mxu0 %v2083
    %2592 = vmatprep.subr.bf16.mxu0 %v2090
    %2593 = vmatpush1.bf16.msra.mxu0 %v2089
    %2594 = vmatprep.subr.bf16.mxu0 %v2096
    %2595 = vmatpush1.bf16.msra.mxu0 %v2095
    %2596 = vmatprep.subr.bf16.mxu0 %v2102
    %2597 = vmatpush1.bf16.msra.mxu0 %v2101
    %2598 = vmatprep.subr.bf16.mxu0 %v2108
    %2599 = vmatpush1.bf16.msra.mxu0 %v2107
    %2600 = vmatprep.subr.bf16.mxu0 %v2114
    %2601 = vmatpush1.bf16.msra.mxu0 %v2113
    %2602 = vmatprep.subr.bf16.mxu0 %v2120
    %2603 = vmatpush1.bf16.msra.mxu0 %v2119
    %2604 = vmatprep.subr.bf16.mxu0 %v2126
    %2605 = vmatpush1.bf16.msra.mxu0 %v2125
    %2606 = vmatprep.subr.bf16.mxu0 %v2132
    %2607 = vmatpush1.bf16.msra.mxu0 %v2131
    %2608 = vmatprep.subr.bf16.mxu0 %v2138
    %2609 = vmatpush1.bf16.msra.mxu0 %v2137
    %2610 = vmatprep.subr.bf16.mxu0 %v2144
    %2611 = vmatpush1.bf16.msra.mxu0 %v2143
    %2612 = vmatprep.subr.bf16.mxu0 %v2150
    %2613 = vmatpush1.bf16.msra.mxu0 %v2149
    %2614 = vmatprep.mubr.bf16.mxu0 %v776
    %2615 = vmatmul.mubr.bf16.gmra.mrb[0].mxu0 %v775
    %v2616 = vpop.f32.mrb[0].mxu0
    %v2617 = vadd.f32 %v2574, %v2616
    %v2618 = vpop.f32.mrb[0].mxu0
    %v2619 = vadd.f32 %v2576, %v2618
    %v2620 = vpop.f32.mrb[0].mxu0
    %v2621 = vadd.f32 %v2578, %v2620
    %v2622 = vpop.f32.mrb[0].mxu0
    %v2623 = vadd.f32 %v2580, %v2622
    %2624 = vdwg.mxu0
    %2625 = vmatprep.subr.bf16.mxu0 %v2156
    %2626 = vmatpush1.bf16.msra.mxu0 %v2155
    %2627 = vmatprep.subr.bf16.mxu0 %v2162
    %2628 = vmatpush1.bf16.msra.mxu0 %v2161
    %2629 = vmatprep.subr.bf16.mxu0 %v2168
    %2630 = vmatpush1.bf16.msra.mxu0 %v2167
    %2631 = vmatprep.subr.bf16.mxu0 %v2174
    %2632 = vmatpush1.bf16.msra.mxu0 %v2173
    %2633 = vmatprep.subr.bf16.mxu0 %v2180
    %2634 = vmatpush1.bf16.msra.mxu0 %v2179
    %2635 = vmatprep.subr.bf16.mxu0 %v2186
    %2636 = vmatpush1.bf16.msra.mxu0 %v2185
    %2637 = vmatprep.subr.bf16.mxu0 %v2192
    %2638 = vmatpush1.bf16.msra.mxu0 %v2191
    %2639 = vmatprep.subr.bf16.mxu0 %v2198
    %2640 = vmatpush1.bf16.msra.mxu0 %v2197
    %2641 = vmatprep.subr.bf16.mxu0 %v2204
    %2642 = vmatpush1.bf16.msra.mxu0 %v2203
    %2643 = vmatprep.subr.bf16.mxu0 %v2210
    %2644 = vmatpush1.bf16.msra.mxu0 %v2209
    %2645 = vmatprep.subr.bf16.mxu0 %v2216
    %2646 = vmatpush1.bf16.msra.mxu0 %v2215
    %2647 = vmatprep.subr.bf16.mxu0 %v2222
    %2648 = vmatpush1.bf16.msra.mxu0 %v2221
    %2649 = vmatprep.subr.bf16.mxu0 %v2228
    %2650 = vmatpush1.bf16.msra.mxu0 %v2227
    %2651 = vmatprep.subr.bf16.mxu0 %v2234
    %2652 = vmatpush1.bf16.msra.mxu0 %v2233
    %2653 = vmatprep.subr.bf16.mxu0 %v2240
    %2654 = vmatpush1.bf16.msra.mxu0 %v2239
    %2655 = vmatprep.subr.bf16.mxu0 %v2246
    %2656 = vmatpush1.bf16.msra.mxu0 %v2245
    %2657 = vmatprep.mubr.bf16.mxu0 %v778
    %2658 = vmatmul.mubr.bf16.gmra.mrb[0].mxu0 %v777
    %v2659 = vpop.f32.mrb[0].mxu0
    %v2660 = vadd.f32 %v2617, %v2659
    %v2661 = vpop.f32.mrb[0].mxu0
    %v2662 = vadd.f32 %v2619, %v2661
    %v2663 = vpop.f32.mrb[0].mxu0
    %v2664 = vadd.f32 %v2621, %v2663
    %v2665 = vpop.f32.mrb[0].mxu0
    %v2666 = vadd.f32 %v2623, %v2665
    %2667 = vdwg.mxu0
    %2668 = vmatprep.subr.bf16.mxu0 %v1966
    %2669 = vmatpush1.bf16.msra.mxu0 %v1965
    %2670 = vmatprep.subr.bf16.mxu0 %v1972
    %2671 = vmatpush1.bf16.msra.mxu0 %v1971
    %2672 = vmatprep.subr.bf16.mxu0 %v1978
    %2673 = vmatpush1.bf16.msra.mxu0 %v1977
    %2674 = vmatprep.subr.bf16.mxu0 %v1984
    %2675 = vmatpush1.bf16.msra.mxu0 %v1983
    %2676 = vmatprep.subr.bf16.mxu0 %v1990
    %2677 = vmatpush1.bf16.msra.mxu0 %v1989
    %2678 = vmatprep.subr.bf16.mxu0 %v1996
    %2679 = vmatpush1.bf16.msra.mxu0 %v1995
    %2680 = vmatprep.subr.bf16.mxu0 %v2002
    %2681 = vmatpush1.bf16.msra.mxu0 %v2001
    %2682 = vmatprep.subr.bf16.mxu0 %v2008
    %2683 = vmatpush1.bf16.msra.mxu0 %v2007
    %2684 = vmatprep.subr.bf16.mxu0 %v2014
    %2685 = vmatpush1.bf16.msra.mxu0 %v2013
    %2686 = vmatprep.subr.bf16.mxu0 %v2020
    %2687 = vmatpush1.bf16.msra.mxu0 %v2019
    %2688 = vmatprep.subr.bf16.mxu0 %v2026
    %2689 = vmatpush1.bf16.msra.mxu0 %v2025
    %2690 = vmatprep.subr.bf16.mxu0 %v2032
    %2691 = vmatpush1.bf16.msra.mxu0 %v2031
    %2692 = vmatprep.subr.bf16.mxu0 %v2038
    %2693 = vmatpush1.bf16.msra.mxu0 %v2037
    %2694 = vmatprep.subr.bf16.mxu0 %v2044
    %2695 = vmatpush1.bf16.msra.mxu0 %v2043
    %2696 = vmatprep.subr.bf16.mxu0 %v2050
    %2697 = vmatpush1.bf16.msra.mxu0 %v2049
    %2698 = vmatprep.subr.bf16.mxu0 %v2056
    %2699 = vmatpush1.bf16.msra.mxu0 %v2055
    %2700 = vmatprep.mubr.bf16.mxu0 %v774
    %2701 = vmatmul.mubr.bf16.gmra.mrb[0].mxu0 %v773
    %v2702 = vpop.f32.mrb[0].mxu0
    %v2703 = vadd.f32 %v1080, %v2702
    %v2704 = vpop.f32.mrb[0].mxu0
    %v2705 = vadd.f32 %v1084, %v2704
    %v2706 = vpop.f32.mrb[0].mxu0
    %v2707 = vadd.f32 %v1080, %v2706
    %v2708 = vpop.f32.mrb[0].mxu0
    %v2709 = vadd.f32 %v1084, %v2708
    %2710 = vdwg.mxu0
    %2711 = vmatprep.subr.bf16.mxu0 %v2062
    %2712 = vmatpush1.bf16.msra.mxu0 %v2061
    %2713 = vmatprep.subr.bf16.mxu0 %v2068
    %2714 = vmatpush1.bf16.msra.mxu0 %v2067
    %2715 = vmatprep.subr.bf16.mxu0 %v2074
    %2716 = vmatpush1.bf16.msra.mxu0 %v2073
    %2717 = vmatprep.subr.bf16.mxu0 %v2080
    %2718 = vmatpush1.bf16.msra.mxu0 %v2079
    %2719 = vmatprep.subr.bf16.mxu0 %v2086
    %2720 = vmatpush1.bf16.msra.mxu0 %v2085
    %2721 = vmatprep.subr.bf16.mxu0 %v2092
    %2722 = vmatpush1.bf16.msra.mxu0 %v2091
    %2723 = vmatprep.subr.bf16.mxu0 %v2098
    %2724 = vmatpush1.bf16.msra.mxu0 %v2097
    %2725 = vmatprep.subr.bf16.mxu0 %v2104
    %2726 = vmatpush1.bf16.msra.mxu0 %v2103
    %2727 = vmatprep.subr.bf16.mxu0 %v2110
    %2728 = vmatpush1.bf16.msra.mxu0 %v2109
    %2729 = vmatprep.subr.bf16.mxu0 %v2116
    %2730 = vmatpush1.bf16.msra.mxu0 %v2115
    %2731 = vmatprep.subr.bf16.mxu0 %v2122
    %2732 = vmatpush1.bf16.msra.mxu0 %v2121
    %2733 = vmatprep.subr.bf16.mxu0 %v2128
    %2734 = vmatpush1.bf16.msra.mxu0 %v2127
    %2735 = vmatprep.subr.bf16.mxu0 %v2134
    %2736 = vmatpush1.bf16.msra.mxu0 %v2133
    %2737 = vmatprep.subr.bf16.mxu0 %v2140
    %2738 = vmatpush1.bf16.msra.mxu0 %v2139
    %2739 = vmatprep.subr.bf16.mxu0 %v2146
    %2740 = vmatpush1.bf16.msra.mxu0 %v2145
    %2741 = vmatprep.subr.bf16.mxu0 %v2152
    %2742 = vmatpush1.bf16.msra.mxu0 %v2151
    %2743 = vmatprep.mubr.bf16.mxu0 %v776
    %2744 = vmatmul.mubr.bf16.gmra.mrb[0].mxu0 %v775
    %v2745 = vpop.f32.mrb[0].mxu0
    %v2746 = vadd.f32 %v2703, %v2745
    %v2747 = vpop.f32.mrb[0].mxu0
    %v2748 = vadd.f32 %v2705, %v2747
    %v2749 = vpop.f32.mrb[0].mxu0
    %v2750 = vadd.f32 %v2707, %v2749
    %v2751 = vpop.f32.mrb[0].mxu0
    %v2752 = vadd.f32 %v2709, %v2751
    %2753 = vdwg.mxu0
    %2754 = vmatprep.subr.bf16.mxu0 %v2158
    %2755 = vmatpush1.bf16.msra.mxu0 %v2157
    %2756 = vmatprep.subr.bf16.mxu0 %v2164
    %2757 = vmatpush1.bf16.msra.mxu0 %v2163
    %2758 = vmatprep.subr.bf16.mxu0 %v2170
    %2759 = vmatpush1.bf16.msra.mxu0 %v2169
    %2760 = vmatprep.subr.bf16.mxu0 %v2176
    %2761 = vmatpush1.bf16.msra.mxu0 %v2175
    %2762 = vmatprep.subr.bf16.mxu0 %v2182
    %2763 = vmatpush1.bf16.msra.mxu0 %v2181
    %2764 = vmatprep.subr.bf16.mxu0 %v2188
    %2765 = vmatpush1.bf16.msra.mxu0 %v2187
    %2766 = vmatprep.subr.bf16.mxu0 %v2194
    %2767 = vmatpush1.bf16.msra.mxu0 %v2193
    %2768 = vmatprep.subr.bf16.mxu0 %v2200
    %2769 = vmatpush1.bf16.msra.mxu0 %v2199
    %2770 = vmatprep.subr.bf16.mxu0 %v2206
    %2771 = vmatpush1.bf16.msra.mxu0 %v2205
    %2772 = vmatprep.subr.bf16.mxu0 %v2212
    %2773 = vmatpush1.bf16.msra.mxu0 %v2211
    %2774 = vmatprep.subr.bf16.mxu0 %v2218
    %2775 = vmatpush1.bf16.msra.mxu0 %v2217
    %2776 = vmatprep.subr.bf16.mxu0 %v2224
    %2777 = vmatpush1.bf16.msra.mxu0 %v2223
    %2778 = vmatprep.subr.bf16.mxu0 %v2230
    %2779 = vmatpush1.bf16.msra.mxu0 %v2229
    %2780 = vmatprep.subr.bf16.mxu0 %v2236
    %2781 = vmatpush1.bf16.msra.mxu0 %v2235
    %2782 = vmatprep.subr.bf16.mxu0 %v2242
    %2783 = vmatpush1.bf16.msra.mxu0 %v2241
    %2784 = vmatprep.subr.bf16.mxu0 %v2248
    %2785 = vmatpush1.bf16.msra.mxu0 %v2247
    %2786 = vmatprep.mubr.bf16.mxu0 %v778
    %2787 = vmatmul.mubr.bf16.gmra.mrb[0].mxu0 %v777
    %v2788 = vpop.f32.mrb[0].mxu0
    %v2789 = vadd.f32 %v2746, %v2788
    %v2790 = vpop.f32.mrb[0].mxu0
    %v2791 = vadd.f32 %v2748, %v2790
    %v2792 = vpop.f32.mrb[0].mxu0
    %v2793 = vadd.f32 %v2750, %v2792
    %v2794 = vpop.f32.mrb[0].mxu0
    %v2795 = vadd.f32 %v2752, %v2794
    %2796 = vdwg.mxu0
    %2797 = vmatprep.subr.bf16.mxu0 %v1968
    %2798 = vmatpush1.bf16.msra.mxu0 %v1967
    %2799 = vmatprep.subr.bf16.mxu0 %v1974
    %2800 = vmatpush1.bf16.msra.mxu0 %v1973
    %2801 = vmatprep.subr.bf16.mxu0 %v1980
    %2802 = vmatpush1.bf16.msra.mxu0 %v1979
    %2803 = vmatprep.subr.bf16.mxu0 %v1986
    %2804 = vmatpush1.bf16.msra.mxu0 %v1985
    %2805 = vmatprep.subr.bf16.mxu0 %v1992
    %2806 = vmatpush1.bf16.msra.mxu0 %v1991
    %2807 = vmatprep.subr.bf16.mxu0 %v1998
    %2808 = vmatpush1.bf16.msra.mxu0 %v1997
    %2809 = vmatprep.subr.bf16.mxu0 %v2004
    %2810 = vmatpush1.bf16.msra.mxu0 %v2003
    %2811 = vmatprep.subr.bf16.mxu0 %v2010
    %2812 = vmatpush1.bf16.msra.mxu0 %v2009
    %2813 = vmatprep.subr.bf16.mxu0 %v2016
    %2814 = vmatpush1.bf16.msra.mxu0 %v2015
    %2815 = vmatprep.subr.bf16.mxu0 %v2022
    %2816 = vmatpush1.bf16.msra.mxu0 %v2021
    %2817 = vmatprep.subr.bf16.mxu0 %v2028
    %2818 = vmatpush1.bf16.msra.mxu0 %v2027
    %2819 = vmatprep.subr.bf16.mxu0 %v2034
    %2820 = vmatpush1.bf16.msra.mxu0 %v2033
    %2821 = vmatprep.subr.bf16.mxu0 %v2040
    %2822 = vmatpush1.bf16.msra.mxu0 %v2039
    %2823 = vmatprep.subr.bf16.mxu0 %v2046
    %2824 = vmatpush1.bf16.msra.mxu0 %v2045
    %2825 = vmatprep.subr.bf16.mxu0 %v2052
    %2826 = vmatpush1.bf16.msra.mxu0 %v2051
    %2827 = vmatprep.subr.bf16.mxu0 %v2058
    %2828 = vmatpush1.bf16.msra.mxu0 %v2057
    %2829 = vmatprep.mubr.bf16.mxu0 %v774
    %2830 = vmatmul.mubr.bf16.gmra.mrb[0].mxu0 %v773
    %v2831 = vpop.f32.mrb[0].mxu0
    %v2832 = vadd.f32 %v1088, %v2831
    %v2833 = vpop.f32.mrb[0].mxu0
    %v2834 = vadd.f32 %v1092, %v2833
    %v2835 = vpop.f32.mrb[0].mxu0
    %v2836 = vadd.f32 %v1088, %v2835
    %v2837 = vpop.f32.mrb[0].mxu0
    %v2838 = vadd.f32 %v1092, %v2837
    %2839 = vdwg.mxu0
    %2840 = vmatprep.subr.bf16.mxu0 %v2064
    %2841 = vmatpush1.bf16.msra.mxu0 %v2063
    %2842 = vmatprep.subr.bf16.mxu0 %v2070
    %2843 = vmatpush1.bf16.msra.mxu0 %v2069
    %2844 = vmatprep.subr.bf16.mxu0 %v2076
    %2845 = vmatpush1.bf16.msra.mxu0 %v2075
    %2846 = vmatprep.subr.bf16.mxu0 %v2082
    %2847 = vmatpush1.bf16.msra.mxu0 %v2081
    %2848 = vmatprep.subr.bf16.mxu0 %v2088
    %2849 = vmatpush1.bf16.msra.mxu0 %v2087
    %2850 = vmatprep.subr.bf16.mxu0 %v2094
    %2851 = vmatpush1.bf16.msra.mxu0 %v2093
    %2852 = vmatprep.subr.bf16.mxu0 %v2100
    %2853 = vmatpush1.bf16.msra.mxu0 %v2099
    %2854 = vmatprep.subr.bf16.mxu0 %v2106
    %2855 = vmatpush1.bf16.msra.mxu0 %v2105
    %2856 = vmatprep.subr.bf16.mxu0 %v2112
    %2857 = vmatpush1.bf16.msra.mxu0 %v2111
    %2858 = vmatprep.subr.bf16.mxu0 %v2118
    %2859 = vmatpush1.bf16.msra.mxu0 %v2117
    %2860 = vmatprep.subr.bf16.mxu0 %v2124
    %2861 = vmatpush1.bf16.msra.mxu0 %v2123
    %2862 = vmatprep.subr.bf16.mxu0 %v2130
    %2863 = vmatpush1.bf16.msra.mxu0 %v2129
    %2864 = vmatprep.subr.bf16.mxu0 %v2136
    %2865 = vmatpush1.bf16.msra.mxu0 %v2135
    %2866 = vmatprep.subr.bf16.mxu0 %v2142
    %2867 = vmatpush1.bf16.msra.mxu0 %v2141
    %2868 = vmatprep.subr.bf16.mxu0 %v2148
    %2869 = vmatpush1.bf16.msra.mxu0 %v2147
    %2870 = vmatprep.subr.bf16.mxu0 %v2154
    %2871 = vmatpush1.bf16.msra.mxu0 %v2153
    %2872 = vmatprep.mubr.bf16.mxu0 %v776
    %2873 = vmatmul.mubr.bf16.gmra.mrb[0].mxu0 %v775
    %v2874 = vpop.f32.mrb[0].mxu0
    %v2875 = vadd.f32 %v2832, %v2874
    %v2876 = vpop.f32.mrb[0].mxu0
    %v2877 = vadd.f32 %v2834, %v2876
    %v2878 = vpop.f32.mrb[0].mxu0
    %v2879 = vadd.f32 %v2836, %v2878
    %v2880 = vpop.f32.mrb[0].mxu0
    %v2881 = vadd.f32 %v2838, %v2880
    %2882 = vdwg.mxu0
    %2883 = vmatprep.subr.bf16.mxu0 %v2160
    %2884 = vmatpush1.bf16.msra.mxu0 %v2159
    %2885 = vmatprep.subr.bf16.mxu0 %v2166
    %2886 = vmatpush1.bf16.msra.mxu0 %v2165
    %2887 = vmatprep.subr.bf16.mxu0 %v2172
    %2888 = vmatpush1.bf16.msra.mxu0 %v2171
    %2889 = vmatprep.subr.bf16.mxu0 %v2178
    %2890 = vmatpush1.bf16.msra.mxu0 %v2177
    %2891 = vmatprep.subr.bf16.mxu0 %v2184
    %2892 = vmatpush1.bf16.msra.mxu0 %v2183
    %2893 = vmatprep.subr.bf16.mxu0 %v2190
    %2894 = vmatpush1.bf16.msra.mxu0 %v2189
    %2895 = vmatprep.subr.bf16.mxu0 %v2196
    %2896 = vmatpush1.bf16.msra.mxu0 %v2195
    %2897 = vmatprep.subr.bf16.mxu0 %v2202
    %2898 = vmatpush1.bf16.msra.mxu0 %v2201
    %2899 = vmatprep.subr.bf16.mxu0 %v2208
    %2900 = vmatpush1.bf16.msra.mxu0 %v2207
    %2901 = vmatprep.subr.bf16.mxu0 %v2214
    %2902 = vmatpush1.bf16.msra.mxu0 %v2213
    %2903 = vmatprep.subr.bf16.mxu0 %v2220
    %2904 = vmatpush1.bf16.msra.mxu0 %v2219
    %2905 = vmatprep.subr.bf16.mxu0 %v2226
    %2906 = vmatpush1.bf16.msra.mxu0 %v2225
    %2907 = vmatprep.subr.bf16.mxu0 %v2232
    %2908 = vmatpush1.bf16.msra.mxu0 %v2231
    %2909 = vmatprep.subr.bf16.mxu0 %v2238
    %2910 = vmatpush1.bf16.msra.mxu0 %v2237
    %2911 = vmatprep.subr.bf16.mxu0 %v2244
    %2912 = vmatpush1.bf16.msra.mxu0 %v2243
    %2913 = vmatprep.subr.bf16.mxu0 %v2250
    %2914 = vmatpush1.bf16.msra.mxu0 %v2249
    %2915 = vmatprep.mubr.bf16.mxu0 %v778
    %2916 = vmatmul.mubr.bf16.gmra.mrb[0].mxu0 %v777
    %v2917 = vpop.f32.mrb[0].mxu0
    %v2918 = vadd.f32 %v2875, %v2917
    %v2919 = vpop.f32.mrb[0].mxu0
    %v2920 = vadd.f32 %v2877, %v2919
    %v2921 = vpop.f32.mrb[0].mxu0
    %v2922 = vadd.f32 %v2879, %v2921
    %v2923 = vpop.f32.mrb[0].mxu0
    %v2924 = vadd.f32 %v2881, %v2923
    %2925 = vdwg.mxu0
    %v2926 = vtanh.pop %v2660
    %v2927 = vtanh.pop %v2662
    %v2928 = vtanh.pop %v2789
    %v2929 = vtanh.pop %v2791
    %v2930 = vtanh.pop %v2918
    %v2931 = vtanh.pop %v2920
    %v2932 = vtanh.pop %v2664
    %v2933 = vtanh.pop %v2666
    %v2934 = vtanh.pop %v2793
    %v2935 = vtanh.pop %v2795
    %v2936 = vtanh.pop %v2922
    %v2937 = vtanh.pop %v2924
    %2938 = vst [vmem:[#allocation3] sm:$0xff] %v2926
    %2939 = vst [vmem:[#allocation3 + $0x8] sm:$0xff] %v2927
    %2940 = vst [vmem:[#allocation3 + $0x10] sm:$0xff] %v2928
    %2941 = vst [vmem:[#allocation3 + $0x18] sm:$0xff] %v2929
    %2942 = vst [vmem:[#allocation3 + $0x20] sm:$0xff] %v2930
    %2943 = vst [vmem:[#allocation3 + $0x28] sm:$0xff] %v2931
    %2944 = vst [vmem:[#allocation3 + $0x30] sm:$0xff] %v2932
    %2945 = vst [vmem:[#allocation3 + $0x38] sm:$0xff] %v2933
    %2946 = vst [vmem:[#allocation3 + $0x40] sm:$0xff] %v2934
    %2947 = vst [vmem:[#allocation3 + $0x48] sm:$0xff] %v2935
    %2948 = vst [vmem:[#allocation3 + $0x50] sm:$0xff] %v2936
    %2949 = vst [vmem:[#allocation3 + $0x58] sm:$0xff] %v2937
    %v2950 = vld [vmem:[%s2] sm:$0xff]
    %v2951 = vld [vmem:[%s2 + $0x8] sm:$0xff]
    %v2952 = vld [vmem:[%s2 + $0x10] sm:$0xff]
    %v2953 = vld [vmem:[%s2 + $0x18] sm:$0xff]
    %v2954 = vld [vmem:[%s2 + $0x20] sm:$0xff]
    %v2955 = vld [vmem:[%s2 + $0x28] sm:$0xff]
    %v2956 = vld [vmem:[%s5] sm:$0xff]
    %v2957 = vld [vmem:[%s5 + $0x8] sm:$0xff]
    %v2958 = vld [vmem:[%s5 + $0x10] sm:$0xff]
    %v2959 = vld [vmem:[%s5 + $0x18] sm:$0xff]
    %v2960 = vld [vmem:[%s5 + $0x20] sm:$0xff]
    %v2961 = vld [vmem:[%s5 + $0x28] sm:$0xff]
    %v2962 = vld [vmem:[%s5 + $0x30] sm:$0xff]
    %v2963 = vld [vmem:[%s5 + $0x38] sm:$0xff]
    %v2964 = vld [vmem:[%s5 + $0x40] sm:$0xff]
    %v2965 = vld [vmem:[%s5 + $0x48] sm:$0xff]
    %v2966 = vld [vmem:[%s5 + $0x50] sm:$0xff]
    %v2967 = vld [vmem:[%s5 + $0x58] sm:$0xff]
    %v2968 = vld [vmem:[%s5 + $0x60] sm:$0xff]
    %v2969 = vld [vmem:[%s5 + $0x68] sm:$0xff]
    %v2970 = vld [vmem:[%s5 + $0x70] sm:$0xff]
    %v2971 = vld [vmem:[%s5 + $0x78] sm:$0xff]
    %v2972 = vld [vmem:[%s5 + $0x80] sm:$0xff]
    %v2973 = vld [vmem:[%s5 + $0x88] sm:$0xff]
    %v2974 = vld [vmem:[%s5 + $0x90] sm:$0xff]
    %v2975 = vld [vmem:[%s5 + $0x98] sm:$0xff]
    %v2976 = vld [vmem:[%s5 + $0xa0] sm:$0xff]
    %v2977 = vld [vmem:[%s5 + $0xa8] sm:$0xff]
    %v2978 = vld [vmem:[%s5 + $0xb0] sm:$0xff]
    %v2979 = vld [vmem:[%s5 + $0xb8] sm:$0xff]
    %v2980 = vld [vmem:[%s5 + $0xc0] sm:$0xff]
    %v2981 = vld [vmem:[%s5 + $0xc8] sm:$0xff]
    %v2982 = vld [vmem:[%s5 + $0xd0] sm:$0xff]
    %v2983 = vld [vmem:[%s5 + $0xd8] sm:$0xff]
    %v2984 = vld [vmem:[%s5 + $0xe0] sm:$0xff]
    %v2985 = vld [vmem:[%s5 + $0xe8] sm:$0xff]
    %v2986 = vld [vmem:[%s5 + $0xf0] sm:$0xff]
    %v2987 = vld [vmem:[%s5 + $0xf8] sm:$0xff]
    %v2988 = vld [vmem:[%s5 + $0x100] sm:$0xff]
    %v2989 = vld [vmem:[%s5 + $0x108] sm:$0xff]
    %v2990 = vld [vmem:[%s5 + $0x110] sm:$0xff]
    %v2991 = vld [vmem:[%s5 + $0x118] sm:$0xff]
    %v2992 = vld [vmem:[%s5 + $0x120] sm:$0xff]
    %v2993 = vld [vmem:[%s5 + $0x128] sm:$0xff]
    %v2994 = vld [vmem:[%s5 + $0x130] sm:$0xff]
    %v2995 = vld [vmem:[%s5 + $0x138] sm:$0xff]
    %v2996 = vld [vmem:[%s5 + $0x140] sm:$0xff]
    %v2997 = vld [vmem:[%s5 + $0x148] sm:$0xff]
    %v2998 = vld [vmem:[%s5 + $0x150] sm:$0xff]
    %v2999 = vld [vmem:[%s5 + $0x158] sm:$0xff]
    %v3000 = vld [vmem:[%s5 + $0x160] sm:$0xff]
    %v3001 = vld [vmem:[%s5 + $0x168] sm:$0xff]
    %v3002 = vld [vmem:[%s5 + $0x170] sm:$0xff]
    %v3003 = vld [vmem:[%s5 + $0x178] sm:$0xff]
    %v3004 = vld [vmem:[%s5 + $0x180] sm:$0xff]
    %v3005 = vld [vmem:[%s5 + $0x188] sm:$0xff]
    %v3006 = vld [vmem:[%s5 + $0x190] sm:$0xff]
    %v3007 = vld [vmem:[%s5 + $0x198] sm:$0xff]
    %v3008 = vld [vmem:[%s5 + $0x1a0] sm:$0xff]
    %v3009 = vld [vmem:[%s5 + $0x1a8] sm:$0xff]
    %v3010 = vld [vmem:[%s5 + $0x1b0] sm:$0xff]
    %v3011 = vld [vmem:[%s5 + $0x1b8] sm:$0xff]
    %v3012 = vld [vmem:[%s5 + $0x1c0] sm:$0xff]
    %v3013 = vld [vmem:[%s5 + $0x1c8] sm:$0xff]
    %v3014 = vld [vmem:[%s5 + $0x1d0] sm:$0xff]
    %v3015 = vld [vmem:[%s5 + $0x1d8] sm:$0xff]
    %v3016 = vld [vmem:[%s5 + $0x1e0] sm:$0xff]
    %v3017 = vld [vmem:[%s5 + $0x1e8] sm:$0xff]
    %v3018 = vld [vmem:[%s5 + $0x1f0] sm:$0xff]
    %v3019 = vld [vmem:[%s5 + $0x1f8] sm:$0xff]
    %v3020 = vld [vmem:[%s5 + $0x200] sm:$0xff]
    %v3021 = vld [vmem:[%s5 + $0x208] sm:$0xff]
    %v3022 = vld [vmem:[%s5 + $0x210] sm:$0xff]
    %v3023 = vld [vmem:[%s5 + $0x218] sm:$0xff]
    %v3024 = vld [vmem:[%s5 + $0x220] sm:$0xff]
    %v3025 = vld [vmem:[%s5 + $0x228] sm:$0xff]
    %v3026 = vld [vmem:[%s5 + $0x230] sm:$0xff]
    %v3027 = vld [vmem:[%s5 + $0x238] sm:$0xff]
    %v3028 = vld [vmem:[%s5 + $0x240] sm:$0xff]
    %v3029 = vld [vmem:[%s5 + $0x248] sm:$0xff]
    %v3030 = vld [vmem:[%s5 + $0x250] sm:$0xff]
    %v3031 = vld [vmem:[%s5 + $0x258] sm:$0xff]
    %v3032 = vld [vmem:[%s5 + $0x260] sm:$0xff]
    %v3033 = vld [vmem:[%s5 + $0x268] sm:$0xff]
    %v3034 = vld [vmem:[%s5 + $0x270] sm:$0xff]
    %v3035 = vld [vmem:[%s5 + $0x278] sm:$0xff]
    %v3036 = vld [vmem:[%s5 + $0x280] sm:$0xff]
    %v3037 = vld [vmem:[%s5 + $0x288] sm:$0xff]
    %v3038 = vld [vmem:[%s5 + $0x290] sm:$0xff]
    %v3039 = vld [vmem:[%s5 + $0x298] sm:$0xff]
    %v3040 = vld [vmem:[%s5 + $0x2a0] sm:$0xff]
    %v3041 = vld [vmem:[%s5 + $0x2a8] sm:$0xff]
    %v3042 = vld [vmem:[%s5 + $0x2b0] sm:$0xff]
    %v3043 = vld [vmem:[%s5 + $0x2b8] sm:$0xff]
    %v3044 = vld [vmem:[%s5 + $0x2c0] sm:$0xff]
    %v3045 = vld [vmem:[%s5 + $0x2c8] sm:$0xff]
    %v3046 = vld [vmem:[%s5 + $0x2d0] sm:$0xff]
    %v3047 = vld [vmem:[%s5 + $0x2d8] sm:$0xff]
    %v3048 = vld [vmem:[%s5 + $0x2e0] sm:$0xff]
    %v3049 = vld [vmem:[%s5 + $0x2e8] sm:$0xff]
    %v3050 = vld [vmem:[%s5 + $0x2f0] sm:$0xff]
    %v3051 = vld [vmem:[%s5 + $0x2f8] sm:$0xff]
    %v3052 = vld [vmem:[%s5 + $0x300] sm:$0xff]
    %v3053 = vld [vmem:[%s5 + $0x308] sm:$0xff]
    %v3054 = vld [vmem:[%s5 + $0x310] sm:$0xff]
    %v3055 = vld [vmem:[%s5 + $0x318] sm:$0xff]
    %v3056 = vld [vmem:[%s5 + $0x320] sm:$0xff]
    %v3057 = vld [vmem:[%s5 + $0x328] sm:$0xff]
    %v3058 = vld [vmem:[%s5 + $0x330] sm:$0xff]
    %v3059 = vld [vmem:[%s5 + $0x338] sm:$0xff]
    %v3060 = vld [vmem:[%s5 + $0x340] sm:$0xff]
    %v3061 = vld [vmem:[%s5 + $0x348] sm:$0xff]
    %v3062 = vld [vmem:[%s5 + $0x350] sm:$0xff]
    %v3063 = vld [vmem:[%s5 + $0x358] sm:$0xff]
    %v3064 = vld [vmem:[%s5 + $0x360] sm:$0xff]
    %v3065 = vld [vmem:[%s5 + $0x368] sm:$0xff]
    %v3066 = vld [vmem:[%s5 + $0x370] sm:$0xff]
    %v3067 = vld [vmem:[%s5 + $0x378] sm:$0xff]
    %v3068 = vld [vmem:[%s5 + $0x380] sm:$0xff]
    %v3069 = vld [vmem:[%s5 + $0x388] sm:$0xff]
    %v3070 = vld [vmem:[%s5 + $0x390] sm:$0xff]
    %v3071 = vld [vmem:[%s5 + $0x398] sm:$0xff]
    %v3072 = vld [vmem:[%s5 + $0x3a0] sm:$0xff]
    %v3073 = vld [vmem:[%s5 + $0x3a8] sm:$0xff]
    %v3074 = vld [vmem:[%s5 + $0x3b0] sm:$0xff]
    %v3075 = vld [vmem:[%s5 + $0x3b8] sm:$0xff]
    %v3076 = vld [vmem:[%s5 + $0x3c0] sm:$0xff]
    %v3077 = vld [vmem:[%s5 + $0x3c8] sm:$0xff]
    %v3078 = vld [vmem:[%s5 + $0x3d0] sm:$0xff]
    %v3079 = vld [vmem:[%s5 + $0x3d8] sm:$0xff]
    %v3080 = vld [vmem:[%s5 + $0x3e0] sm:$0xff]
    %v3081 = vld [vmem:[%s5 + $0x3e8] sm:$0xff]
    %v3082 = vld [vmem:[%s5 + $0x3f0] sm:$0xff]
    %v3083 = vld [vmem:[%s5 + $0x3f8] sm:$0xff]
    %v3084 = vld [vmem:[%s5 + $0x400] sm:$0xff]
    %v3085 = vld [vmem:[%s5 + $0x408] sm:$0xff]
    %v3086 = vld [vmem:[%s5 + $0x410] sm:$0xff]
    %v3087 = vld [vmem:[%s5 + $0x418] sm:$0xff]
    %v3088 = vld [vmem:[%s5 + $0x420] sm:$0xff]
    %v3089 = vld [vmem:[%s5 + $0x428] sm:$0xff]
    %v3090 = vld [vmem:[%s5 + $0x430] sm:$0xff]
    %v3091 = vld [vmem:[%s5 + $0x438] sm:$0xff]
    %v3092 = vld [vmem:[%s5 + $0x440] sm:$0xff]
    %v3093 = vld [vmem:[%s5 + $0x448] sm:$0xff]
    %v3094 = vld [vmem:[%s5 + $0x450] sm:$0xff]
    %v3095 = vld [vmem:[%s5 + $0x458] sm:$0xff]
    %v3096 = vld [vmem:[%s5 + $0x460] sm:$0xff]
    %v3097 = vld [vmem:[%s5 + $0x468] sm:$0xff]
    %v3098 = vld [vmem:[%s5 + $0x470] sm:$0xff]
    %v3099 = vld [vmem:[%s5 + $0x478] sm:$0xff]
    %v3100 = vld [vmem:[%s5 + $0x480] sm:$0xff]
    %v3101 = vld [vmem:[%s5 + $0x488] sm:$0xff]
    %v3102 = vld [vmem:[%s5 + $0x490] sm:$0xff]
    %v3103 = vld [vmem:[%s5 + $0x498] sm:$0xff]
    %v3104 = vld [vmem:[%s5 + $0x4a0] sm:$0xff]
    %v3105 = vld [vmem:[%s5 + $0x4a8] sm:$0xff]
    %v3106 = vld [vmem:[%s5 + $0x4b0] sm:$0xff]
    %v3107 = vld [vmem:[%s5 + $0x4b8] sm:$0xff]
    %v3108 = vld [vmem:[%s5 + $0x4c0] sm:$0xff]
    %v3109 = vld [vmem:[%s5 + $0x4c8] sm:$0xff]
    %v3110 = vld [vmem:[%s5 + $0x4d0] sm:$0xff]
    %v3111 = vld [vmem:[%s5 + $0x4d8] sm:$0xff]
    %v3112 = vld [vmem:[%s5 + $0x4e0] sm:$0xff]
    %v3113 = vld [vmem:[%s5 + $0x4e8] sm:$0xff]
    %v3114 = vld [vmem:[%s5 + $0x4f0] sm:$0xff]
    %v3115 = vld [vmem:[%s5 + $0x4f8] sm:$0xff]
    %v3116 = vld [vmem:[%s5 + $0x500] sm:$0xff]
    %v3117 = vld [vmem:[%s5 + $0x508] sm:$0xff]
    %v3118 = vld [vmem:[%s5 + $0x510] sm:$0xff]
    %v3119 = vld [vmem:[%s5 + $0x518] sm:$0xff]
    %v3120 = vld [vmem:[%s5 + $0x520] sm:$0xff]
    %v3121 = vld [vmem:[%s5 + $0x528] sm:$0xff]
    %v3122 = vld [vmem:[%s5 + $0x530] sm:$0xff]
    %v3123 = vld [vmem:[%s5 + $0x538] sm:$0xff]
    %v3124 = vld [vmem:[%s5 + $0x540] sm:$0xff]
    %v3125 = vld [vmem:[%s5 + $0x548] sm:$0xff]
    %v3126 = vld [vmem:[%s5 + $0x550] sm:$0xff]
    %v3127 = vld [vmem:[%s5 + $0x558] sm:$0xff]
    %v3128 = vld [vmem:[%s5 + $0x560] sm:$0xff]
    %v3129 = vld [vmem:[%s5 + $0x568] sm:$0xff]
    %v3130 = vld [vmem:[%s5 + $0x570] sm:$0xff]
    %v3131 = vld [vmem:[%s5 + $0x578] sm:$0xff]
    %v3132 = vld [vmem:[%s5 + $0x580] sm:$0xff]
    %v3133 = vld [vmem:[%s5 + $0x588] sm:$0xff]
    %v3134 = vld [vmem:[%s5 + $0x590] sm:$0xff]
    %v3135 = vld [vmem:[%s5 + $0x598] sm:$0xff]
    %v3136 = vld [vmem:[%s5 + $0x5a0] sm:$0xff]
    %v3137 = vld [vmem:[%s5 + $0x5a8] sm:$0xff]
    %v3138 = vld [vmem:[%s5 + $0x5b0] sm:$0xff]
    %v3139 = vld [vmem:[%s5 + $0x5b8] sm:$0xff]
    %v3140 = vld [vmem:[%s5 + $0x5c0] sm:$0xff]
    %v3141 = vld [vmem:[%s5 + $0x5c8] sm:$0xff]
    %v3142 = vld [vmem:[%s5 + $0x5d0] sm:$0xff]
    %v3143 = vld [vmem:[%s5 + $0x5d8] sm:$0xff]
    %v3144 = vld [vmem:[%s5 + $0x5e0] sm:$0xff]
    %v3145 = vld [vmem:[%s5 + $0x5e8] sm:$0xff]
    %v3146 = vld [vmem:[%s5 + $0x5f0] sm:$0xff]
    %v3147 = vld [vmem:[%s5 + $0x5f8] sm:$0xff]
    %v3148 = vld [vmem:[%s5 + $0x600] sm:$0xff]
    %v3149 = vld [vmem:[%s5 + $0x608] sm:$0xff]
    %v3150 = vld [vmem:[%s5 + $0x610] sm:$0xff]
    %v3151 = vld [vmem:[%s5 + $0x618] sm:$0xff]
    %v3152 = vld [vmem:[%s5 + $0x620] sm:$0xff]
    %v3153 = vld [vmem:[%s5 + $0x628] sm:$0xff]
    %v3154 = vld [vmem:[%s5 + $0x630] sm:$0xff]
    %v3155 = vld [vmem:[%s5 + $0x638] sm:$0xff]
    %v3156 = vld [vmem:[%s5 + $0x640] sm:$0xff]
    %v3157 = vld [vmem:[%s5 + $0x648] sm:$0xff]
    %v3158 = vld [vmem:[%s5 + $0x650] sm:$0xff]
    %v3159 = vld [vmem:[%s5 + $0x658] sm:$0xff]
    %v3160 = vld [vmem:[%s5 + $0x660] sm:$0xff]
    %v3161 = vld [vmem:[%s5 + $0x668] sm:$0xff]
    %v3162 = vld [vmem:[%s5 + $0x670] sm:$0xff]
    %v3163 = vld [vmem:[%s5 + $0x678] sm:$0xff]
    %v3164 = vld [vmem:[%s5 + $0x680] sm:$0xff]
    %v3165 = vld [vmem:[%s5 + $0x688] sm:$0xff]
    %v3166 = vld [vmem:[%s5 + $0x690] sm:$0xff]
    %v3167 = vld [vmem:[%s5 + $0x698] sm:$0xff]
    %v3168 = vld [vmem:[%s5 + $0x6a0] sm:$0xff]
    %v3169 = vld [vmem:[%s5 + $0x6a8] sm:$0xff]
    %v3170 = vld [vmem:[%s5 + $0x6b0] sm:$0xff]
    %v3171 = vld [vmem:[%s5 + $0x6b8] sm:$0xff]
    %v3172 = vld [vmem:[%s5 + $0x6c0] sm:$0xff]
    %v3173 = vld [vmem:[%s5 + $0x6c8] sm:$0xff]
    %v3174 = vld [vmem:[%s5 + $0x6d0] sm:$0xff]
    %v3175 = vld [vmem:[%s5 + $0x6d8] sm:$0xff]
    %v3176 = vld [vmem:[%s5 + $0x6e0] sm:$0xff]
    %v3177 = vld [vmem:[%s5 + $0x6e8] sm:$0xff]
    %v3178 = vld [vmem:[%s5 + $0x6f0] sm:$0xff]
    %v3179 = vld [vmem:[%s5 + $0x6f8] sm:$0xff]
    %v3180 = vld [vmem:[%s5 + $0x700] sm:$0xff]
    %v3181 = vld [vmem:[%s5 + $0x708] sm:$0xff]
    %v3182 = vld [vmem:[%s5 + $0x710] sm:$0xff]
    %v3183 = vld [vmem:[%s5 + $0x718] sm:$0xff]
    %v3184 = vld [vmem:[%s5 + $0x720] sm:$0xff]
    %v3185 = vld [vmem:[%s5 + $0x728] sm:$0xff]
    %v3186 = vld [vmem:[%s5 + $0x730] sm:$0xff]
    %v3187 = vld [vmem:[%s5 + $0x738] sm:$0xff]
    %v3188 = vld [vmem:[%s5 + $0x740] sm:$0xff]
    %v3189 = vld [vmem:[%s5 + $0x748] sm:$0xff]
    %v3190 = vld [vmem:[%s5 + $0x750] sm:$0xff]
    %v3191 = vld [vmem:[%s5 + $0x758] sm:$0xff]
    %v3192 = vld [vmem:[%s5 + $0x760] sm:$0xff]
    %v3193 = vld [vmem:[%s5 + $0x768] sm:$0xff]
    %v3194 = vld [vmem:[%s5 + $0x770] sm:$0xff]
    %v3195 = vld [vmem:[%s5 + $0x778] sm:$0xff]
    %v3196 = vld [vmem:[%s5 + $0x780] sm:$0xff]
    %v3197 = vld [vmem:[%s5 + $0x788] sm:$0xff]
    %v3198 = vld [vmem:[%s5 + $0x790] sm:$0xff]
    %v3199 = vld [vmem:[%s5 + $0x798] sm:$0xff]
    %v3200 = vld [vmem:[%s5 + $0x7a0] sm:$0xff]
    %v3201 = vld [vmem:[%s5 + $0x7a8] sm:$0xff]
    %v3202 = vld [vmem:[%s5 + $0x7b0] sm:$0xff]
    %v3203 = vld [vmem:[%s5 + $0x7b8] sm:$0xff]
    %v3204 = vld [vmem:[%s5 + $0x7c0] sm:$0xff]
    %v3205 = vld [vmem:[%s5 + $0x7c8] sm:$0xff]
    %v3206 = vld [vmem:[%s5 + $0x7d0] sm:$0xff]
    %v3207 = vld [vmem:[%s5 + $0x7d8] sm:$0xff]
    %v3208 = vld [vmem:[%s5 + $0x7e0] sm:$0xff]
    %v3209 = vld [vmem:[%s5 + $0x7e8] sm:$0xff]
    %v3210 = vld [vmem:[%s5 + $0x7f0] sm:$0xff]
    %v3211 = vld [vmem:[%s5 + $0x7f8] sm:$0xff]
    %v3212 = vld [vmem:[%s5 + $0x800] sm:$0xff]
    %v3213 = vld [vmem:[%s5 + $0x808] sm:$0xff]
    %v3214 = vld [vmem:[%s5 + $0x810] sm:$0xff]
    %v3215 = vld [vmem:[%s5 + $0x818] sm:$0xff]
    %v3216 = vld [vmem:[%s5 + $0x820] sm:$0xff]
    %v3217 = vld [vmem:[%s5 + $0x828] sm:$0xff]
    %v3218 = vld [vmem:[%s5 + $0x830] sm:$0xff]
    %v3219 = vld [vmem:[%s5 + $0x838] sm:$0xff]
    %v3220 = vld [vmem:[%s5 + $0x840] sm:$0xff]
    %v3221 = vld [vmem:[%s5 + $0x848] sm:$0xff]
    %v3222 = vld [vmem:[%s5 + $0x850] sm:$0xff]
    %v3223 = vld [vmem:[%s5 + $0x858] sm:$0xff]
    %v3224 = vld [vmem:[%s5 + $0x860] sm:$0xff]
    %v3225 = vld [vmem:[%s5 + $0x868] sm:$0xff]
    %v3226 = vld [vmem:[%s5 + $0x870] sm:$0xff]
    %v3227 = vld [vmem:[%s5 + $0x878] sm:$0xff]
    %v3228 = vld [vmem:[%s5 + $0x880] sm:$0xff]
    %v3229 = vld [vmem:[%s5 + $0x888] sm:$0xff]
    %v3230 = vld [vmem:[%s5 + $0x890] sm:$0xff]
    %v3231 = vld [vmem:[%s5 + $0x898] sm:$0xff]
    %v3232 = vld [vmem:[%s5 + $0x8a0] sm:$0xff]
    %v3233 = vld [vmem:[%s5 + $0x8a8] sm:$0xff]
    %v3234 = vld [vmem:[%s5 + $0x8b0] sm:$0xff]
    %v3235 = vld [vmem:[%s5 + $0x8b8] sm:$0xff]
    %v3236 = vld [vmem:[%s5 + $0x8c0] sm:$0xff]
    %v3237 = vld [vmem:[%s5 + $0x8c8] sm:$0xff]
    %v3238 = vld [vmem:[%s5 + $0x8d0] sm:$0xff]
    %v3239 = vld [vmem:[%s5 + $0x8d8] sm:$0xff]
    %v3240 = vld [vmem:[%s5 + $0x8e0] sm:$0xff]
    %v3241 = vld [vmem:[%s5 + $0x8e8] sm:$0xff]
    %v3242 = vld [vmem:[%s5 + $0x8f0] sm:$0xff]
    %v3243 = vld [vmem:[%s5 + $0x8f8] sm:$0xff]
    %v3244 = vld [vmem:[%s6] sm:$0x3f]
    %v3246 = vlaneseq
    %v3247 = vshrl.u32 %v3246, 7
    %v3248 = vsub.s32 0, %v3247
    %v3249 = vrot.slane %v3244, %v3248
    %v3250 = vlaneseq
    %v3251 = vshrl.u32 %v3250, 7
    %v3252 = vsub.s32 1, %v3251
    %v3253 = vrot.slane %v3244, %v3252
    %v3254 = vlaneseq
    %v3255 = vshrl.u32 %v3254, 7
    %v3256 = vsub.s32 2, %v3255
    %v3257 = vrot.slane %v3244, %v3256
    %v3258 = vlaneseq
    %v3259 = vshrl.u32 %v3258, 7
    %v3260 = vsub.s32 3, %v3259
    %v3261 = vrot.slane %v3244, %v3260
    %v3262 = vlaneseq
    %v3263 = vshrl.u32 %v3262, 7
    %v3264 = vsub.s32 4, %v3263
    %v3265 = vrot.slane %v3244, %v3264
    %v3266 = vlaneseq
    %v3267 = vshrl.u32 %v3266, 7
    %v3268 = vsub.s32 5, %v3267
    %v3269 = vrot.slane %v3244, %v3268
    %v3282 = vunpack.c.l.b16 %v2950
    %v3283 = vunpack.c.h.b16 %v2950
    %v3284 = vunpack.c.l.b16 %v2951
    %v3285 = vunpack.c.h.b16 %v2951
    %v3286 = vunpack.c.l.b16 %v2952
    %v3287 = vunpack.c.h.b16 %v2952
    %v3288 = vunpack.c.l.b16 %v2953
    %v3289 = vunpack.c.h.b16 %v2953
    %v3290 = vunpack.c.l.b16 %v2954
    %v3291 = vunpack.c.h.b16 %v2954
    %v3292 = vunpack.c.l.b16 %v2955
    %v3293 = vunpack.c.h.b16 %v2955
    %v3294 = vpack.c.b16 %v3288, %v3282
    %v3295 = vpack.c.b16 %v3289, %v3283
    %v3296 = vpack.c.b16 %v3290, %v3284
    %v3297 = vpack.c.b16 %v3291, %v3285
    %v3298 = vpack.c.b16 %v3292, %v3286
    %v3299 = vpack.c.b16 %v3293, %v3287
    %v3594 = vunpack.c.l.b16 %v2956
    %v3595 = vunpack.c.h.b16 %v2956
    %v3596 = vunpack.c.l.b16 %v2957
    %v3597 = vunpack.c.h.b16 %v2957
    %v3598 = vunpack.c.l.b16 %v2958
    %v3599 = vunpack.c.h.b16 %v2958
    %v3600 = vunpack.c.l.b16 %v2959
    %v3601 = vunpack.c.h.b16 %v2959
    %v3602 = vunpack.c.l.b16 %v2960
    %v3603 = vunpack.c.h.b16 %v2960
    %v3604 = vunpack.c.l.b16 %v2961
    %v3605 = vunpack.c.h.b16 %v2961
    %v3606 = vunpack.c.l.b16 %v2962
    %v3607 = vunpack.c.h.b16 %v2962
    %v3608 = vunpack.c.l.b16 %v2963
    %v3609 = vunpack.c.h.b16 %v2963
    %v3610 = vunpack.c.l.b16 %v2964
    %v3611 = vunpack.c.h.b16 %v2964
    %v3612 = vunpack.c.l.b16 %v2965
    %v3613 = vunpack.c.h.b16 %v2965
    %v3614 = vunpack.c.l.b16 %v2966
    %v3615 = vunpack.c.h.b16 %v2966
    %v3616 = vunpack.c.l.b16 %v2967
    %v3617 = vunpack.c.h.b16 %v2967
    %v3618 = vunpack.c.l.b16 %v2968
    %v3619 = vunpack.c.h.b16 %v2968
    %v3620 = vunpack.c.l.b16 %v2969
    %v3621 = vunpack.c.h.b16 %v2969
    %v3622 = vunpack.c.l.b16 %v2970
    %v3623 = vunpack.c.h.b16 %v2970
    %v3624 = vunpack.c.l.b16 %v2971
    %v3625 = vunpack.c.h.b16 %v2971
    %v3626 = vunpack.c.l.b16 %v2972
    %v3627 = vunpack.c.h.b16 %v2972
    %v3628 = vunpack.c.l.b16 %v2973
    %v3629 = vunpack.c.h.b16 %v2973
    %v3630 = vunpack.c.l.b16 %v2974
    %v3631 = vunpack.c.h.b16 %v2974
    %v3632 = vunpack.c.l.b16 %v2975
    %v3633 = vunpack.c.h.b16 %v2975
    %v3634 = vunpack.c.l.b16 %v2976
    %v3635 = vunpack.c.h.b16 %v2976
    %v3636 = vunpack.c.l.b16 %v2977
    %v3637 = vunpack.c.h.b16 %v2977
    %v3638 = vunpack.c.l.b16 %v2978
    %v3639 = vunpack.c.h.b16 %v2978
    %v3640 = vunpack.c.l.b16 %v2979
    %v3641 = vunpack.c.h.b16 %v2979
    %v3642 = vunpack.c.l.b16 %v2980
    %v3643 = vunpack.c.h.b16 %v2980
    %v3644 = vunpack.c.l.b16 %v2981
    %v3645 = vunpack.c.h.b16 %v2981
    %v3646 = vunpack.c.l.b16 %v2982
    %v3647 = vunpack.c.h.b16 %v2982
    %v3648 = vunpack.c.l.b16 %v2983
    %v3649 = vunpack.c.h.b16 %v2983
    %v3650 = vunpack.c.l.b16 %v2984
    %v3651 = vunpack.c.h.b16 %v2984
    %v3652 = vunpack.c.l.b16 %v2985
    %v3653 = vunpack.c.h.b16 %v2985
    %v3654 = vunpack.c.l.b16 %v2986
    %v3655 = vunpack.c.h.b16 %v2986
    %v3656 = vunpack.c.l.b16 %v2987
    %v3657 = vunpack.c.h.b16 %v2987
    %v3658 = vunpack.c.l.b16 %v2988
    %v3659 = vunpack.c.h.b16 %v2988
    %v3660 = vunpack.c.l.b16 %v2989
    %v3661 = vunpack.c.h.b16 %v2989
    %v3662 = vunpack.c.l.b16 %v2990
    %v3663 = vunpack.c.h.b16 %v2990
    %v3664 = vunpack.c.l.b16 %v2991
    %v3665 = vunpack.c.h.b16 %v2991
    %v3666 = vunpack.c.l.b16 %v2992
    %v3667 = vunpack.c.h.b16 %v2992
    %v3668 = vunpack.c.l.b16 %v2993
    %v3669 = vunpack.c.h.b16 %v2993
    %v3670 = vunpack.c.l.b16 %v2994
    %v3671 = vunpack.c.h.b16 %v2994
    %v3672 = vunpack.c.l.b16 %v2995
    %v3673 = vunpack.c.h.b16 %v2995
    %v3674 = vunpack.c.l.b16 %v2996
    %v3675 = vunpack.c.h.b16 %v2996
    %v3676 = vunpack.c.l.b16 %v2997
    %v3677 = vunpack.c.h.b16 %v2997
    %v3678 = vunpack.c.l.b16 %v2998
    %v3679 = vunpack.c.h.b16 %v2998
    %v3680 = vunpack.c.l.b16 %v2999
    %v3681 = vunpack.c.h.b16 %v2999
    %v3682 = vunpack.c.l.b16 %v3000
    %v3683 = vunpack.c.h.b16 %v3000
    %v3684 = vunpack.c.l.b16 %v3001
    %v3685 = vunpack.c.h.b16 %v3001
    %v3686 = vunpack.c.l.b16 %v3002
    %v3687 = vunpack.c.h.b16 %v3002
    %v3688 = vunpack.c.l.b16 %v3003
    %v3689 = vunpack.c.h.b16 %v3003
    %v3690 = vunpack.c.l.b16 %v3004
    %v3691 = vunpack.c.h.b16 %v3004
    %v3692 = vunpack.c.l.b16 %v3005
    %v3693 = vunpack.c.h.b16 %v3005
    %v3694 = vunpack.c.l.b16 %v3006
    %v3695 = vunpack.c.h.b16 %v3006
    %v3696 = vunpack.c.l.b16 %v3007
    %v3697 = vunpack.c.h.b16 %v3007
    %v3698 = vunpack.c.l.b16 %v3008
    %v3699 = vunpack.c.h.b16 %v3008
    %v3700 = vunpack.c.l.b16 %v3009
    %v3701 = vunpack.c.h.b16 %v3009
    %v3702 = vunpack.c.l.b16 %v3010
    %v3703 = vunpack.c.h.b16 %v3010
    %v3704 = vunpack.c.l.b16 %v3011
    %v3705 = vunpack.c.h.b16 %v3011
    %v3706 = vunpack.c.l.b16 %v3012
    %v3707 = vunpack.c.h.b16 %v3012
    %v3708 = vunpack.c.l.b16 %v3013
    %v3709 = vunpack.c.h.b16 %v3013
    %v3710 = vunpack.c.l.b16 %v3014
    %v3711 = vunpack.c.h.b16 %v3014
    %v3712 = vunpack.c.l.b16 %v3015
    %v3713 = vunpack.c.h.b16 %v3015
    %v3714 = vunpack.c.l.b16 %v3016
    %v3715 = vunpack.c.h.b16 %v3016
    %v3716 = vunpack.c.l.b16 %v3017
    %v3717 = vunpack.c.h.b16 %v3017
    %v3718 = vunpack.c.l.b16 %v3018
    %v3719 = vunpack.c.h.b16 %v3018
    %v3720 = vunpack.c.l.b16 %v3019
    %v3721 = vunpack.c.h.b16 %v3019
    %v3722 = vunpack.c.l.b16 %v3020
    %v3723 = vunpack.c.h.b16 %v3020
    %v3724 = vunpack.c.l.b16 %v3021
    %v3725 = vunpack.c.h.b16 %v3021
    %v3726 = vunpack.c.l.b16 %v3022
    %v3727 = vunpack.c.h.b16 %v3022
    %v3728 = vunpack.c.l.b16 %v3023
    %v3729 = vunpack.c.h.b16 %v3023
    %v3730 = vunpack.c.l.b16 %v3024
    %v3731 = vunpack.c.h.b16 %v3024
    %v3732 = vunpack.c.l.b16 %v3025
    %v3733 = vunpack.c.h.b16 %v3025
    %v3734 = vunpack.c.l.b16 %v3026
    %v3735 = vunpack.c.h.b16 %v3026
    %v3736 = vunpack.c.l.b16 %v3027
    %v3737 = vunpack.c.h.b16 %v3027
    %v3738 = vunpack.c.l.b16 %v3028
    %v3739 = vunpack.c.h.b16 %v3028
    %v3740 = vunpack.c.l.b16 %v3029
    %v3741 = vunpack.c.h.b16 %v3029
    %v3742 = vunpack.c.l.b16 %v3030
    %v3743 = vunpack.c.h.b16 %v3030
    %v3744 = vunpack.c.l.b16 %v3031
    %v3745 = vunpack.c.h.b16 %v3031
    %v3746 = vunpack.c.l.b16 %v3032
    %v3747 = vunpack.c.h.b16 %v3032
    %v3748 = vunpack.c.l.b16 %v3033
    %v3749 = vunpack.c.h.b16 %v3033
    %v3750 = vunpack.c.l.b16 %v3034
    %v3751 = vunpack.c.h.b16 %v3034
    %v3752 = vunpack.c.l.b16 %v3035
    %v3753 = vunpack.c.h.b16 %v3035
    %v3754 = vunpack.c.l.b16 %v3036
    %v3755 = vunpack.c.h.b16 %v3036
    %v3756 = vunpack.c.l.b16 %v3037
    %v3757 = vunpack.c.h.b16 %v3037
    %v3758 = vunpack.c.l.b16 %v3038
    %v3759 = vunpack.c.h.b16 %v3038
    %v3760 = vunpack.c.l.b16 %v3039
    %v3761 = vunpack.c.h.b16 %v3039
    %v3762 = vunpack.c.l.b16 %v3040
    %v3763 = vunpack.c.h.b16 %v3040
    %v3764 = vunpack.c.l.b16 %v3041
    %v3765 = vunpack.c.h.b16 %v3041
    %v3766 = vunpack.c.l.b16 %v3042
    %v3767 = vunpack.c.h.b16 %v3042
    %v3768 = vunpack.c.l.b16 %v3043
    %v3769 = vunpack.c.h.b16 %v3043
    %v3770 = vunpack.c.l.b16 %v3044
    %v3771 = vunpack.c.h.b16 %v3044
    %v3772 = vunpack.c.l.b16 %v3045
    %v3773 = vunpack.c.h.b16 %v3045
    %v3774 = vunpack.c.l.b16 %v3046
    %v3775 = vunpack.c.h.b16 %v3046
    %v3776 = vunpack.c.l.b16 %v3047
    %v3777 = vunpack.c.h.b16 %v3047
    %v3778 = vunpack.c.l.b16 %v3048
    %v3779 = vunpack.c.h.b16 %v3048
    %v3780 = vunpack.c.l.b16 %v3049
    %v3781 = vunpack.c.h.b16 %v3049
    %v3782 = vunpack.c.l.b16 %v3050
    %v3783 = vunpack.c.h.b16 %v3050
    %v3784 = vunpack.c.l.b16 %v3051
    %v3785 = vunpack.c.h.b16 %v3051
    %v3786 = vunpack.c.l.b16 %v3052
    %v3787 = vunpack.c.h.b16 %v3052
    %v3788 = vunpack.c.l.b16 %v3053
    %v3789 = vunpack.c.h.b16 %v3053
    %v3790 = vunpack.c.l.b16 %v3054
    %v3791 = vunpack.c.h.b16 %v3054
    %v3792 = vunpack.c.l.b16 %v3055
    %v3793 = vunpack.c.h.b16 %v3055
    %v3794 = vunpack.c.l.b16 %v3056
    %v3795 = vunpack.c.h.b16 %v3056
    %v3796 = vunpack.c.l.b16 %v3057
    %v3797 = vunpack.c.h.b16 %v3057
    %v3798 = vunpack.c.l.b16 %v3058
    %v3799 = vunpack.c.h.b16 %v3058
    %v3800 = vunpack.c.l.b16 %v3059
    %v3801 = vunpack.c.h.b16 %v3059
    %v3802 = vunpack.c.l.b16 %v3060
    %v3803 = vunpack.c.h.b16 %v3060
    %v3804 = vunpack.c.l.b16 %v3061
    %v3805 = vunpack.c.h.b16 %v3061
    %v3806 = vunpack.c.l.b16 %v3062
    %v3807 = vunpack.c.h.b16 %v3062
    %v3808 = vunpack.c.l.b16 %v3063
    %v3809 = vunpack.c.h.b16 %v3063
    %v3810 = vunpack.c.l.b16 %v3064
    %v3811 = vunpack.c.h.b16 %v3064
    %v3812 = vunpack.c.l.b16 %v3065
    %v3813 = vunpack.c.h.b16 %v3065
    %v3814 = vunpack.c.l.b16 %v3066
    %v3815 = vunpack.c.h.b16 %v3066
    %v3816 = vunpack.c.l.b16 %v3067
    %v3817 = vunpack.c.h.b16 %v3067
    %v3818 = vunpack.c.l.b16 %v3068
    %v3819 = vunpack.c.h.b16 %v3068
    %v3820 = vunpack.c.l.b16 %v3069
    %v3821 = vunpack.c.h.b16 %v3069
    %v3822 = vunpack.c.l.b16 %v3070
    %v3823 = vunpack.c.h.b16 %v3070
    %v3824 = vunpack.c.l.b16 %v3071
    %v3825 = vunpack.c.h.b16 %v3071
    %v3826 = vunpack.c.l.b16 %v3072
    %v3827 = vunpack.c.h.b16 %v3072
    %v3828 = vunpack.c.l.b16 %v3073
    %v3829 = vunpack.c.h.b16 %v3073
    %v3830 = vunpack.c.l.b16 %v3074
    %v3831 = vunpack.c.h.b16 %v3074
    %v3832 = vunpack.c.l.b16 %v3075
    %v3833 = vunpack.c.h.b16 %v3075
    %v3834 = vunpack.c.l.b16 %v3076
    %v3835 = vunpack.c.h.b16 %v3076
    %v3836 = vunpack.c.l.b16 %v3077
    %v3837 = vunpack.c.h.b16 %v3077
    %v3838 = vunpack.c.l.b16 %v3078
    %v3839 = vunpack.c.h.b16 %v3078
    %v3840 = vunpack.c.l.b16 %v3079
    %v3841 = vunpack.c.h.b16 %v3079
    %v3842 = vunpack.c.l.b16 %v3080
    %v3843 = vunpack.c.h.b16 %v3080
    %v3844 = vunpack.c.l.b16 %v3081
    %v3845 = vunpack.c.h.b16 %v3081
    %v3846 = vunpack.c.l.b16 %v3082
    %v3847 = vunpack.c.h.b16 %v3082
    %v3848 = vunpack.c.l.b16 %v3083
    %v3849 = vunpack.c.h.b16 %v3083
    %v3850 = vunpack.c.l.b16 %v3084
    %v3851 = vunpack.c.h.b16 %v3084
    %v3852 = vunpack.c.l.b16 %v3085
    %v3853 = vunpack.c.h.b16 %v3085
    %v3854 = vunpack.c.l.b16 %v3086
    %v3855 = vunpack.c.h.b16 %v3086
    %v3856 = vunpack.c.l.b16 %v3087
    %v3857 = vunpack.c.h.b16 %v3087
    %v3858 = vunpack.c.l.b16 %v3088
    %v3859 = vunpack.c.h.b16 %v3088
    %v3860 = vunpack.c.l.b16 %v3089
    %v3861 = vunpack.c.h.b16 %v3089
    %v3862 = vunpack.c.l.b16 %v3090
    %v3863 = vunpack.c.h.b16 %v3090
    %v3864 = vunpack.c.l.b16 %v3091
    %v3865 = vunpack.c.h.b16 %v3091
    %v3866 = vunpack.c.l.b16 %v3092
    %v3867 = vunpack.c.h.b16 %v3092
    %v3868 = vunpack.c.l.b16 %v3093
    %v3869 = vunpack.c.h.b16 %v3093
    %v3870 = vunpack.c.l.b16 %v3094
    %v3871 = vunpack.c.h.b16 %v3094
    %v3872 = vunpack.c.l.b16 %v3095
    %v3873 = vunpack.c.h.b16 %v3095
    %v3874 = vunpack.c.l.b16 %v3096
    %v3875 = vunpack.c.h.b16 %v3096
    %v3876 = vunpack.c.l.b16 %v3097
    %v3877 = vunpack.c.h.b16 %v3097
    %v3878 = vunpack.c.l.b16 %v3098
    %v3879 = vunpack.c.h.b16 %v3098
    %v3880 = vunpack.c.l.b16 %v3099
    %v3881 = vunpack.c.h.b16 %v3099
    %v3882 = vunpack.c.l.b16 %v3100
    %v3883 = vunpack.c.h.b16 %v3100
    %v3884 = vunpack.c.l.b16 %v3101
    %v3885 = vunpack.c.h.b16 %v3101
    %v3886 = vunpack.c.l.b16 %v3102
    %v3887 = vunpack.c.h.b16 %v3102
    %v3888 = vunpack.c.l.b16 %v3103
    %v3889 = vunpack.c.h.b16 %v3103
    %v3890 = vunpack.c.l.b16 %v3104
    %v3891 = vunpack.c.h.b16 %v3104
    %v3892 = vunpack.c.l.b16 %v3105
    %v3893 = vunpack.c.h.b16 %v3105
    %v3894 = vunpack.c.l.b16 %v3106
    %v3895 = vunpack.c.h.b16 %v3106
    %v3896 = vunpack.c.l.b16 %v3107
    %v3897 = vunpack.c.h.b16 %v3107
    %v3898 = vunpack.c.l.b16 %v3108
    %v3899 = vunpack.c.h.b16 %v3108
    %v3900 = vunpack.c.l.b16 %v3109
    %v3901 = vunpack.c.h.b16 %v3109
    %v3902 = vunpack.c.l.b16 %v3110
    %v3903 = vunpack.c.h.b16 %v3110
    %v3904 = vunpack.c.l.b16 %v3111
    %v3905 = vunpack.c.h.b16 %v3111
    %v3906 = vunpack.c.l.b16 %v3112
    %v3907 = vunpack.c.h.b16 %v3112
    %v3908 = vunpack.c.l.b16 %v3113
    %v3909 = vunpack.c.h.b16 %v3113
    %v3910 = vunpack.c.l.b16 %v3114
    %v3911 = vunpack.c.h.b16 %v3114
    %v3912 = vunpack.c.l.b16 %v3115
    %v3913 = vunpack.c.h.b16 %v3115
    %v3914 = vunpack.c.l.b16 %v3116
    %v3915 = vunpack.c.h.b16 %v3116
    %v3916 = vunpack.c.l.b16 %v3117
    %v3917 = vunpack.c.h.b16 %v3117
    %v3918 = vunpack.c.l.b16 %v3118
    %v3919 = vunpack.c.h.b16 %v3118
    %v3920 = vunpack.c.l.b16 %v3119
    %v3921 = vunpack.c.h.b16 %v3119
    %v3922 = vunpack.c.l.b16 %v3120
    %v3923 = vunpack.c.h.b16 %v3120
    %v3924 = vunpack.c.l.b16 %v3121
    %v3925 = vunpack.c.h.b16 %v3121
    %v3926 = vunpack.c.l.b16 %v3122
    %v3927 = vunpack.c.h.b16 %v3122
    %v3928 = vunpack.c.l.b16 %v3123
    %v3929 = vunpack.c.h.b16 %v3123
    %v3930 = vunpack.c.l.b16 %v3124
    %v3931 = vunpack.c.h.b16 %v3124
    %v3932 = vunpack.c.l.b16 %v3125
    %v3933 = vunpack.c.h.b16 %v3125
    %v3934 = vunpack.c.l.b16 %v3126
    %v3935 = vunpack.c.h.b16 %v3126
    %v3936 = vunpack.c.l.b16 %v3127
    %v3937 = vunpack.c.h.b16 %v3127
    %v3938 = vunpack.c.l.b16 %v3128
    %v3939 = vunpack.c.h.b16 %v3128
    %v3940 = vunpack.c.l.b16 %v3129
    %v3941 = vunpack.c.h.b16 %v3129
    %v3942 = vunpack.c.l.b16 %v3130
    %v3943 = vunpack.c.h.b16 %v3130
    %v3944 = vunpack.c.l.b16 %v3131
    %v3945 = vunpack.c.h.b16 %v3131
    %v3946 = vunpack.c.l.b16 %v3132
    %v3947 = vunpack.c.h.b16 %v3132
    %v3948 = vunpack.c.l.b16 %v3133
    %v3949 = vunpack.c.h.b16 %v3133
    %v3950 = vunpack.c.l.b16 %v3134
    %v3951 = vunpack.c.h.b16 %v3134
    %v3952 = vunpack.c.l.b16 %v3135
    %v3953 = vunpack.c.h.b16 %v3135
    %v3954 = vunpack.c.l.b16 %v3136
    %v3955 = vunpack.c.h.b16 %v3136
    %v3956 = vunpack.c.l.b16 %v3137
    %v3957 = vunpack.c.h.b16 %v3137
    %v3958 = vunpack.c.l.b16 %v3138
    %v3959 = vunpack.c.h.b16 %v3138
    %v3960 = vunpack.c.l.b16 %v3139
    %v3961 = vunpack.c.h.b16 %v3139
    %v3962 = vunpack.c.l.b16 %v3140
    %v3963 = vunpack.c.h.b16 %v3140
    %v3964 = vunpack.c.l.b16 %v3141
    %v3965 = vunpack.c.h.b16 %v3141
    %v3966 = vunpack.c.l.b16 %v3142
    %v3967 = vunpack.c.h.b16 %v3142
    %v3968 = vunpack.c.l.b16 %v3143
    %v3969 = vunpack.c.h.b16 %v3143
    %v3970 = vunpack.c.l.b16 %v3144
    %v3971 = vunpack.c.h.b16 %v3144
    %v3972 = vunpack.c.l.b16 %v3145
    %v3973 = vunpack.c.h.b16 %v3145
    %v3974 = vunpack.c.l.b16 %v3146
    %v3975 = vunpack.c.h.b16 %v3146
    %v3976 = vunpack.c.l.b16 %v3147
    %v3977 = vunpack.c.h.b16 %v3147
    %v3978 = vunpack.c.l.b16 %v3148
    %v3979 = vunpack.c.h.b16 %v3148
    %v3980 = vunpack.c.l.b16 %v3149
    %v3981 = vunpack.c.h.b16 %v3149
    %v3982 = vunpack.c.l.b16 %v3150
    %v3983 = vunpack.c.h.b16 %v3150
    %v3984 = vunpack.c.l.b16 %v3151
    %v3985 = vunpack.c.h.b16 %v3151
    %v3986 = vunpack.c.l.b16 %v3152
    %v3987 = vunpack.c.h.b16 %v3152
    %v3988 = vunpack.c.l.b16 %v3153
    %v3989 = vunpack.c.h.b16 %v3153
    %v3990 = vunpack.c.l.b16 %v3154
    %v3991 = vunpack.c.h.b16 %v3154
    %v3992 = vunpack.c.l.b16 %v3155
    %v3993 = vunpack.c.h.b16 %v3155
    %v3994 = vunpack.c.l.b16 %v3156
    %v3995 = vunpack.c.h.b16 %v3156
    %v3996 = vunpack.c.l.b16 %v3157
    %v3997 = vunpack.c.h.b16 %v3157
    %v3998 = vunpack.c.l.b16 %v3158
    %v3999 = vunpack.c.h.b16 %v3158
    %v4000 = vunpack.c.l.b16 %v3159
    %v4001 = vunpack.c.h.b16 %v3159
    %v4002 = vunpack.c.l.b16 %v3160
    %v4003 = vunpack.c.h.b16 %v3160
    %v4004 = vunpack.c.l.b16 %v3161
    %v4005 = vunpack.c.h.b16 %v3161
    %v4006 = vunpack.c.l.b16 %v3162
    %v4007 = vunpack.c.h.b16 %v3162
    %v4008 = vunpack.c.l.b16 %v3163
    %v4009 = vunpack.c.h.b16 %v3163
    %v4010 = vunpack.c.l.b16 %v3164
    %v4011 = vunpack.c.h.b16 %v3164
    %v4012 = vunpack.c.l.b16 %v3165
    %v4013 = vunpack.c.h.b16 %v3165
    %v4014 = vunpack.c.l.b16 %v3166
    %v4015 = vunpack.c.h.b16 %v3166
    %v4016 = vunpack.c.l.b16 %v3167
    %v4017 = vunpack.c.h.b16 %v3167
    %v4018 = vunpack.c.l.b16 %v3168
    %v4019 = vunpack.c.h.b16 %v3168
    %v4020 = vunpack.c.l.b16 %v3169
    %v4021 = vunpack.c.h.b16 %v3169
    %v4022 = vunpack.c.l.b16 %v3170
    %v4023 = vunpack.c.h.b16 %v3170
    %v4024 = vunpack.c.l.b16 %v3171
    %v4025 = vunpack.c.h.b16 %v3171
    %v4026 = vunpack.c.l.b16 %v3172
    %v4027 = vunpack.c.h.b16 %v3172
    %v4028 = vunpack.c.l.b16 %v3173
    %v4029 = vunpack.c.h.b16 %v3173
    %v4030 = vunpack.c.l.b16 %v3174
    %v4031 = vunpack.c.h.b16 %v3174
    %v4032 = vunpack.c.l.b16 %v3175
    %v4033 = vunpack.c.h.b16 %v3175
    %v4034 = vunpack.c.l.b16 %v3176
    %v4035 = vunpack.c.h.b16 %v3176
    %v4036 = vunpack.c.l.b16 %v3177
    %v4037 = vunpack.c.h.b16 %v3177
    %v4038 = vunpack.c.l.b16 %v3178
    %v4039 = vunpack.c.h.b16 %v3178
    %v4040 = vunpack.c.l.b16 %v3179
    %v4041 = vunpack.c.h.b16 %v3179
    %v4042 = vunpack.c.l.b16 %v3180
    %v4043 = vunpack.c.h.b16 %v3180
    %v4044 = vunpack.c.l.b16 %v3181
    %v4045 = vunpack.c.h.b16 %v3181
    %v4046 = vunpack.c.l.b16 %v3182
    %v4047 = vunpack.c.h.b16 %v3182
    %v4048 = vunpack.c.l.b16 %v3183
    %v4049 = vunpack.c.h.b16 %v3183
    %v4050 = vunpack.c.l.b16 %v3184
    %v4051 = vunpack.c.h.b16 %v3184
    %v4052 = vunpack.c.l.b16 %v3185
    %v4053 = vunpack.c.h.b16 %v3185
    %v4054 = vunpack.c.l.b16 %v3186
    %v4055 = vunpack.c.h.b16 %v3186
    %v4056 = vunpack.c.l.b16 %v3187
    %v4057 = vunpack.c.h.b16 %v3187
    %v4058 = vunpack.c.l.b16 %v3188
    %v4059 = vunpack.c.h.b16 %v3188
    %v4060 = vunpack.c.l.b16 %v3189
    %v4061 = vunpack.c.h.b16 %v3189
    %v4062 = vunpack.c.l.b16 %v3190
    %v4063 = vunpack.c.h.b16 %v3190
    %v4064 = vunpack.c.l.b16 %v3191
    %v4065 = vunpack.c.h.b16 %v3191
    %v4066 = vunpack.c.l.b16 %v3192
    %v4067 = vunpack.c.h.b16 %v3192
    %v4068 = vunpack.c.l.b16 %v3193
    %v4069 = vunpack.c.h.b16 %v3193
    %v4070 = vunpack.c.l.b16 %v3194
    %v4071 = vunpack.c.h.b16 %v3194
    %v4072 = vunpack.c.l.b16 %v3195
    %v4073 = vunpack.c.h.b16 %v3195
    %v4074 = vunpack.c.l.b16 %v3196
    %v4075 = vunpack.c.h.b16 %v3196
    %v4076 = vunpack.c.l.b16 %v3197
    %v4077 = vunpack.c.h.b16 %v3197
    %v4078 = vunpack.c.l.b16 %v3198
    %v4079 = vunpack.c.h.b16 %v3198
    %v4080 = vunpack.c.l.b16 %v3199
    %v4081 = vunpack.c.h.b16 %v3199
    %v4082 = vunpack.c.l.b16 %v3200
    %v4083 = vunpack.c.h.b16 %v3200
    %v4084 = vunpack.c.l.b16 %v3201
    %v4085 = vunpack.c.h.b16 %v3201
    %v4086 = vunpack.c.l.b16 %v3202
    %v4087 = vunpack.c.h.b16 %v3202
    %v4088 = vunpack.c.l.b16 %v3203
    %v4089 = vunpack.c.h.b16 %v3203
    %v4090 = vunpack.c.l.b16 %v3204
    %v4091 = vunpack.c.h.b16 %v3204
    %v4092 = vunpack.c.l.b16 %v3205
    %v4093 = vunpack.c.h.b16 %v3205
    %v4094 = vunpack.c.l.b16 %v3206
    %v4095 = vunpack.c.h.b16 %v3206
    %v4096 = vunpack.c.l.b16 %v3207
    %v4097 = vunpack.c.h.b16 %v3207
    %v4098 = vunpack.c.l.b16 %v3208
    %v4099 = vunpack.c.h.b16 %v3208
    %v4100 = vunpack.c.l.b16 %v3209
    %v4101 = vunpack.c.h.b16 %v3209
    %v4102 = vunpack.c.l.b16 %v3210
    %v4103 = vunpack.c.h.b16 %v3210
    %v4104 = vunpack.c.l.b16 %v3211
    %v4105 = vunpack.c.h.b16 %v3211
    %v4106 = vunpack.c.l.b16 %v3212
    %v4107 = vunpack.c.h.b16 %v3212
    %v4108 = vunpack.c.l.b16 %v3213
    %v4109 = vunpack.c.h.b16 %v3213
    %v4110 = vunpack.c.l.b16 %v3214
    %v4111 = vunpack.c.h.b16 %v3214
    %v4112 = vunpack.c.l.b16 %v3215
    %v4113 = vunpack.c.h.b16 %v3215
    %v4114 = vunpack.c.l.b16 %v3216
    %v4115 = vunpack.c.h.b16 %v3216
    %v4116 = vunpack.c.l.b16 %v3217
    %v4117 = vunpack.c.h.b16 %v3217
    %v4118 = vunpack.c.l.b16 %v3218
    %v4119 = vunpack.c.h.b16 %v3218
    %v4120 = vunpack.c.l.b16 %v3219
    %v4121 = vunpack.c.h.b16 %v3219
    %v4122 = vunpack.c.l.b16 %v3220
    %v4123 = vunpack.c.h.b16 %v3220
    %v4124 = vunpack.c.l.b16 %v3221
    %v4125 = vunpack.c.h.b16 %v3221
    %v4126 = vunpack.c.l.b16 %v3222
    %v4127 = vunpack.c.h.b16 %v3222
    %v4128 = vunpack.c.l.b16 %v3223
    %v4129 = vunpack.c.h.b16 %v3223
    %v4130 = vunpack.c.l.b16 %v3224
    %v4131 = vunpack.c.h.b16 %v3224
    %v4132 = vunpack.c.l.b16 %v3225
    %v4133 = vunpack.c.h.b16 %v3225
    %v4134 = vunpack.c.l.b16 %v3226
    %v4135 = vunpack.c.h.b16 %v3226
    %v4136 = vunpack.c.l.b16 %v3227
    %v4137 = vunpack.c.h.b16 %v3227
    %v4138 = vunpack.c.l.b16 %v3228
    %v4139 = vunpack.c.h.b16 %v3228
    %v4140 = vunpack.c.l.b16 %v3229
    %v4141 = vunpack.c.h.b16 %v3229
    %v4142 = vunpack.c.l.b16 %v3230
    %v4143 = vunpack.c.h.b16 %v3230
    %v4144 = vunpack.c.l.b16 %v3231
    %v4145 = vunpack.c.h.b16 %v3231
    %v4146 = vunpack.c.l.b16 %v3232
    %v4147 = vunpack.c.h.b16 %v3232
    %v4148 = vunpack.c.l.b16 %v3233
    %v4149 = vunpack.c.h.b16 %v3233
    %v4150 = vunpack.c.l.b16 %v3234
    %v4151 = vunpack.c.h.b16 %v3234
    %v4152 = vunpack.c.l.b16 %v3235
    %v4153 = vunpack.c.h.b16 %v3235
    %v4154 = vunpack.c.l.b16 %v3236
    %v4155 = vunpack.c.h.b16 %v3236
    %v4156 = vunpack.c.l.b16 %v3237
    %v4157 = vunpack.c.h.b16 %v3237
    %v4158 = vunpack.c.l.b16 %v3238
    %v4159 = vunpack.c.h.b16 %v3238
    %v4160 = vunpack.c.l.b16 %v3239
    %v4161 = vunpack.c.h.b16 %v3239
    %v4162 = vunpack.c.l.b16 %v3240
    %v4163 = vunpack.c.h.b16 %v3240
    %v4164 = vunpack.c.l.b16 %v3241
    %v4165 = vunpack.c.h.b16 %v3241
    %v4166 = vunpack.c.l.b16 %v3242
    %v4167 = vunpack.c.h.b16 %v3242
    %v4168 = vunpack.c.l.b16 %v3243
    %v4169 = vunpack.c.h.b16 %v3243
    %v4170 = vpack.c.b16 %v3600, %v3594
    %v4171 = vpack.c.b16 %v3601, %v3595
    %v4172 = vpack.c.b16 %v3602, %v3596
    %v4173 = vpack.c.b16 %v3603, %v3597
    %v4174 = vpack.c.b16 %v3604, %v3598
    %v4175 = vpack.c.b16 %v3605, %v3599
    %v4176 = vpack.c.b16 %v3612, %v3606
    %v4177 = vpack.c.b16 %v3613, %v3607
    %v4178 = vpack.c.b16 %v3614, %v3608
    %v4179 = vpack.c.b16 %v3615, %v3609
    %v4180 = vpack.c.b16 %v3616, %v3610
    %v4181 = vpack.c.b16 %v3617, %v3611
    %v4182 = vpack.c.b16 %v3624, %v3618
    %v4183 = vpack.c.b16 %v3625, %v3619
    %v4184 = vpack.c.b16 %v3626, %v3620
    %v4185 = vpack.c.b16 %v3627, %v3621
    %v4186 = vpack.c.b16 %v3628, %v3622
    %v4187 = vpack.c.b16 %v3629, %v3623
    %v4188 = vpack.c.b16 %v3636, %v3630
    %v4189 = vpack.c.b16 %v3637, %v3631
    %v4190 = vpack.c.b16 %v3638, %v3632
    %v4191 = vpack.c.b16 %v3639, %v3633
    %v4192 = vpack.c.b16 %v3640, %v3634
    %v4193 = vpack.c.b16 %v3641, %v3635
    %v4194 = vpack.c.b16 %v3648, %v3642
    %v4195 = vpack.c.b16 %v3649, %v3643
    %v4196 = vpack.c.b16 %v3650, %v3644
    %v4197 = vpack.c.b16 %v3651, %v3645
    %v4198 = vpack.c.b16 %v3652, %v3646
    %v4199 = vpack.c.b16 %v3653, %v3647
    %v4200 = vpack.c.b16 %v3660, %v3654
    %v4201 = vpack.c.b16 %v3661, %v3655
    %v4202 = vpack.c.b16 %v3662, %v3656
    %v4203 = vpack.c.b16 %v3663, %v3657
    %v4204 = vpack.c.b16 %v3664, %v3658
    %v4205 = vpack.c.b16 %v3665, %v3659
    %v4206 = vpack.c.b16 %v3672, %v3666
    %v4207 = vpack.c.b16 %v3673, %v3667
    %v4208 = vpack.c.b16 %v3674, %v3668
    %v4209 = vpack.c.b16 %v3675, %v3669
    %v4210 = vpack.c.b16 %v3676, %v3670
    %v4211 = vpack.c.b16 %v3677, %v3671
    %v4212 = vpack.c.b16 %v3684, %v3678
    %v4213 = vpack.c.b16 %v3685, %v3679
    %v4214 = vpack.c.b16 %v3686, %v3680
    %v4215 = vpack.c.b16 %v3687, %v3681
    %v4216 = vpack.c.b16 %v3688, %v3682
    %v4217 = vpack.c.b16 %v3689, %v3683
    %v4218 = vpack.c.b16 %v3696, %v3690
    %v4219 = vpack.c.b16 %v3697, %v3691
    %v4220 = vpack.c.b16 %v3698, %v3692
    %v4221 = vpack.c.b16 %v3699, %v3693
    %v4222 = vpack.c.b16 %v3700, %v3694
    %v4223 = vpack.c.b16 %v3701, %v3695
    %v4224 = vpack.c.b16 %v3708, %v3702
    %v4225 = vpack.c.b16 %v3709, %v3703
    %v4226 = vpack.c.b16 %v3710, %v3704
    %v4227 = vpack.c.b16 %v3711, %v3705
    %v4228 = vpack.c.b16 %v3712, %v3706
    %v4229 = vpack.c.b16 %v3713, %v3707
    %v4230 = vpack.c.b16 %v3720, %v3714
    %v4231 = vpack.c.b16 %v3721, %v3715
    %v4232 = vpack.c.b16 %v3722, %v3716
    %v4233 = vpack.c.b16 %v3723, %v3717
    %v4234 = vpack.c.b16 %v3724, %v3718
    %v4235 = vpack.c.b16 %v3725, %v3719
    %v4236 = vpack.c.b16 %v3732, %v3726
    %v4237 = vpack.c.b16 %v3733, %v3727
    %v4238 = vpack.c.b16 %v3734, %v3728
    %v4239 = vpack.c.b16 %v3735, %v3729
    %v4240 = vpack.c.b16 %v3736, %v3730
    %v4241 = vpack.c.b16 %v3737, %v3731
    %v4242 = vpack.c.b16 %v3744, %v3738
    %v4243 = vpack.c.b16 %v3745, %v3739
    %v4244 = vpack.c.b16 %v3746, %v3740
    %v4245 = vpack.c.b16 %v3747, %v3741
    %v4246 = vpack.c.b16 %v3748, %v3742
    %v4247 = vpack.c.b16 %v3749, %v3743
    %v4248 = vpack.c.b16 %v3756, %v3750
    %v4249 = vpack.c.b16 %v3757, %v3751
    %v4250 = vpack.c.b16 %v3758, %v3752
    %v4251 = vpack.c.b16 %v3759, %v3753
    %v4252 = vpack.c.b16 %v3760, %v3754
    %v4253 = vpack.c.b16 %v3761, %v3755
    %v4254 = vpack.c.b16 %v3768, %v3762
    %v4255 = vpack.c.b16 %v3769, %v3763
    %v4256 = vpack.c.b16 %v3770, %v3764
    %v4257 = vpack.c.b16 %v3771, %v3765
    %v4258 = vpack.c.b16 %v3772, %v3766
    %v4259 = vpack.c.b16 %v3773, %v3767
    %v4260 = vpack.c.b16 %v3780, %v3774
    %v4261 = vpack.c.b16 %v3781, %v3775
    %v4262 = vpack.c.b16 %v3782, %v3776
    %v4263 = vpack.c.b16 %v3783, %v3777
    %v4264 = vpack.c.b16 %v3784, %v3778
    %v4265 = vpack.c.b16 %v3785, %v3779
    %v4266 = vpack.c.b16 %v3792, %v3786
    %v4267 = vpack.c.b16 %v3793, %v3787
    %v4268 = vpack.c.b16 %v3794, %v3788
    %v4269 = vpack.c.b16 %v3795, %v3789
    %v4270 = vpack.c.b16 %v3796, %v3790
    %v4271 = vpack.c.b16 %v3797, %v3791
    %v4272 = vpack.c.b16 %v3804, %v3798
    %v4273 = vpack.c.b16 %v3805, %v3799
    %v4274 = vpack.c.b16 %v3806, %v3800
    %v4275 = vpack.c.b16 %v3807, %v3801
    %v4276 = vpack.c.b16 %v3808, %v3802
    %v4277 = vpack.c.b16 %v3809, %v3803
    %v4278 = vpack.c.b16 %v3816, %v3810
    %v4279 = vpack.c.b16 %v3817, %v3811
    %v4280 = vpack.c.b16 %v3818, %v3812
    %v4281 = vpack.c.b16 %v3819, %v3813
    %v4282 = vpack.c.b16 %v3820, %v3814
    %v4283 = vpack.c.b16 %v3821, %v3815
    %v4284 = vpack.c.b16 %v3828, %v3822
    %v4285 = vpack.c.b16 %v3829, %v3823
    %v4286 = vpack.c.b16 %v3830, %v3824
    %v4287 = vpack.c.b16 %v3831, %v3825
    %v4288 = vpack.c.b16 %v3832, %v3826
    %v4289 = vpack.c.b16 %v3833, %v3827
    %v4290 = vpack.c.b16 %v3840, %v3834
    %v4291 = vpack.c.b16 %v3841, %v3835
    %v4292 = vpack.c.b16 %v3842, %v3836
    %v4293 = vpack.c.b16 %v3843, %v3837
    %v4294 = vpack.c.b16 %v3844, %v3838
    %v4295 = vpack.c.b16 %v3845, %v3839
    %v4296 = vpack.c.b16 %v3852, %v3846
    %v4297 = vpack.c.b16 %v3853, %v3847
    %v4298 = vpack.c.b16 %v3854, %v3848
    %v4299 = vpack.c.b16 %v3855, %v3849
    %v4300 = vpack.c.b16 %v3856, %v3850
    %v4301 = vpack.c.b16 %v3857, %v3851
    %v4302 = vpack.c.b16 %v3864, %v3858
    %v4303 = vpack.c.b16 %v3865, %v3859
    %v4304 = vpack.c.b16 %v3866, %v3860
    %v4305 = vpack.c.b16 %v3867, %v3861
    %v4306 = vpack.c.b16 %v3868, %v3862
    %v4307 = vpack.c.b16 %v3869, %v3863
    %v4308 = vpack.c.b16 %v3876, %v3870
    %v4309 = vpack.c.b16 %v3877, %v3871
    %v4310 = vpack.c.b16 %v3878, %v3872
    %v4311 = vpack.c.b16 %v3879, %v3873
    %v4312 = vpack.c.b16 %v3880, %v3874
    %v4313 = vpack.c.b16 %v3881, %v3875
    %v4314 = vpack.c.b16 %v3888, %v3882
    %v4315 = vpack.c.b16 %v3889, %v3883
    %v4316 = vpack.c.b16 %v3890, %v3884
    %v4317 = vpack.c.b16 %v3891, %v3885
    %v4318 = vpack.c.b16 %v3892, %v3886
    %v4319 = vpack.c.b16 %v3893, %v3887
    %v4320 = vpack.c.b16 %v3900, %v3894
    %v4321 = vpack.c.b16 %v3901, %v3895
    %v4322 = vpack.c.b16 %v3902, %v3896
    %v4323 = vpack.c.b16 %v3903, %v3897
    %v4324 = vpack.c.b16 %v3904, %v3898
    %v4325 = vpack.c.b16 %v3905, %v3899
    %v4326 = vpack.c.b16 %v3912, %v3906
    %v4327 = vpack.c.b16 %v3913, %v3907
    %v4328 = vpack.c.b16 %v3914, %v3908
    %v4329 = vpack.c.b16 %v3915, %v3909
    %v4330 = vpack.c.b16 %v3916, %v3910
    %v4331 = vpack.c.b16 %v3917, %v3911
    %v4332 = vpack.c.b16 %v3924, %v3918
    %v4333 = vpack.c.b16 %v3925, %v3919
    %v4334 = vpack.c.b16 %v3926, %v3920
    %v4335 = vpack.c.b16 %v3927, %v3921
    %v4336 = vpack.c.b16 %v3928, %v3922
    %v4337 = vpack.c.b16 %v3929, %v3923
    %v4338 = vpack.c.b16 %v3936, %v3930
    %v4339 = vpack.c.b16 %v3937, %v3931
    %v4340 = vpack.c.b16 %v3938, %v3932
    %v4341 = vpack.c.b16 %v3939, %v3933
    %v4342 = vpack.c.b16 %v3940, %v3934
    %v4343 = vpack.c.b16 %v3941, %v3935
    %v4344 = vpack.c.b16 %v3948, %v3942
    %v4345 = vpack.c.b16 %v3949, %v3943
    %v4346 = vpack.c.b16 %v3950, %v3944
    %v4347 = vpack.c.b16 %v3951, %v3945
    %v4348 = vpack.c.b16 %v3952, %v3946
    %v4349 = vpack.c.b16 %v3953, %v3947
    %v4350 = vpack.c.b16 %v3960, %v3954
    %v4351 = vpack.c.b16 %v3961, %v3955
    %v4352 = vpack.c.b16 %v3962, %v3956
    %v4353 = vpack.c.b16 %v3963, %v3957
    %v4354 = vpack.c.b16 %v3964, %v3958
    %v4355 = vpack.c.b16 %v3965, %v3959
    %v4356 = vpack.c.b16 %v3972, %v3966
    %v4357 = vpack.c.b16 %v3973, %v3967
    %v4358 = vpack.c.b16 %v3974, %v3968
    %v4359 = vpack.c.b16 %v3975, %v3969
    %v4360 = vpack.c.b16 %v3976, %v3970
    %v4361 = vpack.c.b16 %v3977, %v3971
    %v4362 = vpack.c.b16 %v3984, %v3978
    %v4363 = vpack.c.b16 %v3985, %v3979
    %v4364 = vpack.c.b16 %v3986, %v3980
    %v4365 = vpack.c.b16 %v3987, %v3981
    %v4366 = vpack.c.b16 %v3988, %v3982
    %v4367 = vpack.c.b16 %v3989, %v3983
    %v4368 = vpack.c.b16 %v3996, %v3990
    %v4369 = vpack.c.b16 %v3997, %v3991
    %v4370 = vpack.c.b16 %v3998, %v3992
    %v4371 = vpack.c.b16 %v3999, %v3993
    %v4372 = vpack.c.b16 %v4000, %v3994
    %v4373 = vpack.c.b16 %v4001, %v3995
    %v4374 = vpack.c.b16 %v4008, %v4002
    %v4375 = vpack.c.b16 %v4009, %v4003
    %v4376 = vpack.c.b16 %v4010, %v4004
    %v4377 = vpack.c.b16 %v4011, %v4005
    %v4378 = vpack.c.b16 %v4012, %v4006
    %v4379 = vpack.c.b16 %v4013, %v4007
    %v4380 = vpack.c.b16 %v4020, %v4014
    %v4381 = vpack.c.b16 %v4021, %v4015
    %v4382 = vpack.c.b16 %v4022, %v4016
    %v4383 = vpack.c.b16 %v4023, %v4017
    %v4384 = vpack.c.b16 %v4024, %v4018
    %v4385 = vpack.c.b16 %v4025, %v4019
    %v4386 = vpack.c.b16 %v4032, %v4026
    %v4387 = vpack.c.b16 %v4033, %v4027
    %v4388 = vpack.c.b16 %v4034, %v4028
    %v4389 = vpack.c.b16 %v4035, %v4029
    %v4390 = vpack.c.b16 %v4036, %v4030
    %v4391 = vpack.c.b16 %v4037, %v4031
    %v4392 = vpack.c.b16 %v4044, %v4038
    %v4393 = vpack.c.b16 %v4045, %v4039
    %v4394 = vpack.c.b16 %v4046, %v4040
    %v4395 = vpack.c.b16 %v4047, %v4041
    %v4396 = vpack.c.b16 %v4048, %v4042
    %v4397 = vpack.c.b16 %v4049, %v4043
    %v4398 = vpack.c.b16 %v4056, %v4050
    %v4399 = vpack.c.b16 %v4057, %v4051
    %v4400 = vpack.c.b16 %v4058, %v4052
    %v4401 = vpack.c.b16 %v4059, %v4053
    %v4402 = vpack.c.b16 %v4060, %v4054
    %v4403 = vpack.c.b16 %v4061, %v4055
    %v4404 = vpack.c.b16 %v4068, %v4062
    %v4405 = vpack.c.b16 %v4069, %v4063
    %v4406 = vpack.c.b16 %v4070, %v4064
    %v4407 = vpack.c.b16 %v4071, %v4065
    %v4408 = vpack.c.b16 %v4072, %v4066
    %v4409 = vpack.c.b16 %v4073, %v4067
    %v4410 = vpack.c.b16 %v4080, %v4074
    %v4411 = vpack.c.b16 %v4081, %v4075
    %v4412 = vpack.c.b16 %v4082, %v4076
    %v4413 = vpack.c.b16 %v4083, %v4077
    %v4414 = vpack.c.b16 %v4084, %v4078
    %v4415 = vpack.c.b16 %v4085, %v4079
    %v4416 = vpack.c.b16 %v4092, %v4086
    %v4417 = vpack.c.b16 %v4093, %v4087
    %v4418 = vpack.c.b16 %v4094, %v4088
    %v4419 = vpack.c.b16 %v4095, %v4089
    %v4420 = vpack.c.b16 %v4096, %v4090
    %v4421 = vpack.c.b16 %v4097, %v4091
    %v4422 = vpack.c.b16 %v4104, %v4098
    %v4423 = vpack.c.b16 %v4105, %v4099
    %v4424 = vpack.c.b16 %v4106, %v4100
    %v4425 = vpack.c.b16 %v4107, %v4101
    %v4426 = vpack.c.b16 %v4108, %v4102
    %v4427 = vpack.c.b16 %v4109, %v4103
    %v4428 = vpack.c.b16 %v4116, %v4110
    %v4429 = vpack.c.b16 %v4117, %v4111
    %v4430 = vpack.c.b16 %v4118, %v4112
    %v4431 = vpack.c.b16 %v4119, %v4113
    %v4432 = vpack.c.b16 %v4120, %v4114
    %v4433 = vpack.c.b16 %v4121, %v4115
    %v4434 = vpack.c.b16 %v4128, %v4122
    %v4435 = vpack.c.b16 %v4129, %v4123
    %v4436 = vpack.c.b16 %v4130, %v4124
    %v4437 = vpack.c.b16 %v4131, %v4125
    %v4438 = vpack.c.b16 %v4132, %v4126
    %v4439 = vpack.c.b16 %v4133, %v4127
    %v4440 = vpack.c.b16 %v4140, %v4134
    %v4441 = vpack.c.b16 %v4141, %v4135
    %v4442 = vpack.c.b16 %v4142, %v4136
    %v4443 = vpack.c.b16 %v4143, %v4137
    %v4444 = vpack.c.b16 %v4144, %v4138
    %v4445 = vpack.c.b16 %v4145, %v4139
    %v4446 = vpack.c.b16 %v4152, %v4146
    %v4447 = vpack.c.b16 %v4153, %v4147
    %v4448 = vpack.c.b16 %v4154, %v4148
    %v4449 = vpack.c.b16 %v4155, %v4149
    %v4450 = vpack.c.b16 %v4156, %v4150
    %v4451 = vpack.c.b16 %v4157, %v4151
    %v4452 = vpack.c.b16 %v4164, %v4158
    %v4453 = vpack.c.b16 %v4165, %v4159
    %v4454 = vpack.c.b16 %v4166, %v4160
    %v4455 = vpack.c.b16 %v4167, %v4161
    %v4456 = vpack.c.b16 %v4168, %v4162
    %v4457 = vpack.c.b16 %v4169, %v4163
    %4746 = vmatprep.subr.bf16.mxu0 %v4171
    %4747 = vmatpush1.bf16.msra.mxu0 %v4170
    %4748 = vmatprep.subr.bf16.mxu0 %v4177
    %4749 = vmatpush1.bf16.msra.mxu0 %v4176
    %4750 = vmatprep.subr.bf16.mxu0 %v4183
    %4751 = vmatpush1.bf16.msra.mxu0 %v4182
    %4752 = vmatprep.subr.bf16.mxu0 %v4189
    %4753 = vmatpush1.bf16.msra.mxu0 %v4188
    %4754 = vmatprep.subr.bf16.mxu0 %v4195
    %4755 = vmatpush1.bf16.msra.mxu0 %v4194
    %4756 = vmatprep.subr.bf16.mxu0 %v4201
    %4757 = vmatpush1.bf16.msra.mxu0 %v4200
    %4758 = vmatprep.subr.bf16.mxu0 %v4207
    %4759 = vmatpush1.bf16.msra.mxu0 %v4206
    %4760 = vmatprep.subr.bf16.mxu0 %v4213
    %4761 = vmatpush1.bf16.msra.mxu0 %v4212
    %4762 = vmatprep.subr.bf16.mxu0 %v4219
    %4763 = vmatpush1.bf16.msra.mxu0 %v4218
    %4764 = vmatprep.subr.bf16.mxu0 %v4225
    %4765 = vmatpush1.bf16.msra.mxu0 %v4224
    %4766 = vmatprep.subr.bf16.mxu0 %v4231
    %4767 = vmatpush1.bf16.msra.mxu0 %v4230
    %4768 = vmatprep.subr.bf16.mxu0 %v4237
    %4769 = vmatpush1.bf16.msra.mxu0 %v4236
    %4770 = vmatprep.subr.bf16.mxu0 %v4243
    %4771 = vmatpush1.bf16.msra.mxu0 %v4242
    %4772 = vmatprep.subr.bf16.mxu0 %v4249
    %4773 = vmatpush1.bf16.msra.mxu0 %v4248
    %4774 = vmatprep.subr.bf16.mxu0 %v4255
    %4775 = vmatpush1.bf16.msra.mxu0 %v4254
    %4776 = vmatprep.subr.bf16.mxu0 %v4261
    %4777 = vmatpush1.bf16.msra.mxu0 %v4260
    %4778 = vmatprep.mubr.bf16.mxu0 %v3295
    %4779 = vmatmul.mubr.bf16.gmra.mrb[0].mxu0 %v3294
    %v4780 = vpop.f32.mrb[0].mxu0
    %v4781 = vadd.f32 %v3249, %v4780
    %v4782 = vpop.f32.mrb[0].mxu0
    %v4783 = vadd.f32 %v3253, %v4782
    %v4784 = vpop.f32.mrb[0].mxu0
    %v4785 = vadd.f32 %v3249, %v4784
    %v4786 = vpop.f32.mrb[0].mxu0
    %v4787 = vadd.f32 %v3253, %v4786
    %4788 = vdwg.mxu0
    %4789 = vmatprep.subr.bf16.mxu0 %v4267
    %4790 = vmatpush1.bf16.msra.mxu0 %v4266
    %4791 = vmatprep.subr.bf16.mxu0 %v4273
    %4792 = vmatpush1.bf16.msra.mxu0 %v4272
    %4793 = vmatprep.subr.bf16.mxu0 %v4279
    %4794 = vmatpush1.bf16.msra.mxu0 %v4278
    %4795 = vmatprep.subr.bf16.mxu0 %v4285
    %4796 = vmatpush1.bf16.msra.mxu0 %v4284
    %4797 = vmatprep.subr.bf16.mxu0 %v4291
    %4798 = vmatpush1.bf16.msra.mxu0 %v4290
    %4799 = vmatprep.subr.bf16.mxu0 %v4297
    %4800 = vmatpush1.bf16.msra.mxu0 %v4296
    %4801 = vmatprep.subr.bf16.mxu0 %v4303
    %4802 = vmatpush1.bf16.msra.mxu0 %v4302
    %4803 = vmatprep.subr.bf16.mxu0 %v4309
    %4804 = vmatpush1.bf16.msra.mxu0 %v4308
    %4805 = vmatprep.subr.bf16.mxu0 %v4315
    %4806 = vmatpush1.bf16.msra.mxu0 %v4314
    %4807 = vmatprep.subr.bf16.mxu0 %v4321
    %4808 = vmatpush1.bf16.msra.mxu0 %v4320
    %4809 = vmatprep.subr.bf16.mxu0 %v4327
    %4810 = vmatpush1.bf16.msra.mxu0 %v4326
    %4811 = vmatprep.subr.bf16.mxu0 %v4333
    %4812 = vmatpush1.bf16.msra.mxu0 %v4332
    %4813 = vmatprep.subr.bf16.mxu0 %v4339
    %4814 = vmatpush1.bf16.msra.mxu0 %v4338
    %4815 = vmatprep.subr.bf16.mxu0 %v4345
    %4816 = vmatpush1.bf16.msra.mxu0 %v4344
    %4817 = vmatprep.subr.bf16.mxu0 %v4351
    %4818 = vmatpush1.bf16.msra.mxu0 %v4350
    %4819 = vmatprep.subr.bf16.mxu0 %v4357
    %4820 = vmatpush1.bf16.msra.mxu0 %v4356
    %4821 = vmatprep.mubr.bf16.mxu0 %v3297
    %4822 = vmatmul.mubr.bf16.gmra.mrb[0].mxu0 %v3296
    %v4823 = vpop.f32.mrb[0].mxu0
    %v4824 = vadd.f32 %v4781, %v4823
    %v4825 = vpop.f32.mrb[0].mxu0
    %v4826 = vadd.f32 %v4783, %v4825
    %v4827 = vpop.f32.mrb[0].mxu0
    %v4828 = vadd.f32 %v4785, %v4827
    %v4829 = vpop.f32.mrb[0].mxu0
    %v4830 = vadd.f32 %v4787, %v4829
    %4831 = vdwg.mxu0
    %4832 = vmatprep.subr.bf16.mxu0 %v4363
    %4833 = vmatpush1.bf16.msra.mxu0 %v4362
    %4834 = vmatprep.subr.bf16.mxu0 %v4369
    %4835 = vmatpush1.bf16.msra.mxu0 %v4368
    %4836 = vmatprep.subr.bf16.mxu0 %v4375
    %4837 = vmatpush1.bf16.msra.mxu0 %v4374
    %4838 = vmatprep.subr.bf16.mxu0 %v4381
    %4839 = vmatpush1.bf16.msra.mxu0 %v4380
    %4840 = vmatprep.subr.bf16.mxu0 %v4387
    %4841 = vmatpush1.bf16.msra.mxu0 %v4386
    %4842 = vmatprep.subr.bf16.mxu0 %v4393
    %4843 = vmatpush1.bf16.msra.mxu0 %v4392
    %4844 = vmatprep.subr.bf16.mxu0 %v4399
    %4845 = vmatpush1.bf16.msra.mxu0 %v4398
    %4846 = vmatprep.subr.bf16.mxu0 %v4405
    %4847 = vmatpush1.bf16.msra.mxu0 %v4404
    %4848 = vmatprep.subr.bf16.mxu0 %v4411
    %4849 = vmatpush1.bf16.msra.mxu0 %v4410
    %4850 = vmatprep.subr.bf16.mxu0 %v4417
    %4851 = vmatpush1.bf16.msra.mxu0 %v4416
    %4852 = vmatprep.subr.bf16.mxu0 %v4423
    %4853 = vmatpush1.bf16.msra.mxu0 %v4422
    %4854 = vmatprep.subr.bf16.mxu0 %v4429
    %4855 = vmatpush1.bf16.msra.mxu0 %v4428
    %4856 = vmatprep.subr.bf16.mxu0 %v4435
    %4857 = vmatpush1.bf16.msra.mxu0 %v4434
    %4858 = vmatprep.subr.bf16.mxu0 %v4441
    %4859 = vmatpush1.bf16.msra.mxu0 %v4440
    %4860 = vmatprep.subr.bf16.mxu0 %v4447
    %4861 = vmatpush1.bf16.msra.mxu0 %v4446
    %4862 = vmatprep.subr.bf16.mxu0 %v4453
    %4863 = vmatpush1.bf16.msra.mxu0 %v4452
    %4864 = vmatprep.mubr.bf16.mxu0 %v3299
    %4865 = vmatmul.mubr.bf16.gmra.mrb[0].mxu0 %v3298
    %v4866 = vpop.f32.mrb[0].mxu0
    %v4867 = vadd.f32 %v4824, %v4866
    %v4868 = vpop.f32.mrb[0].mxu0
    %v4869 = vadd.f32 %v4826, %v4868
    %v4870 = vpop.f32.mrb[0].mxu0
    %v4871 = vadd.f32 %v4828, %v4870
    %v4872 = vpop.f32.mrb[0].mxu0
    %v4873 = vadd.f32 %v4830, %v4872
    %4874 = vdwg.mxu0
    %4875 = vmatprep.subr.bf16.mxu0 %v4173
    %4876 = vmatpush1.bf16.msra.mxu0 %v4172
    %4877 = vmatprep.subr.bf16.mxu0 %v4179
    %4878 = vmatpush1.bf16.msra.mxu0 %v4178
    %4879 = vmatprep.subr.bf16.mxu0 %v4185
    %4880 = vmatpush1.bf16.msra.mxu0 %v4184
    %4881 = vmatprep.subr.bf16.mxu0 %v4191
    %4882 = vmatpush1.bf16.msra.mxu0 %v4190
    %4883 = vmatprep.subr.bf16.mxu0 %v4197
    %4884 = vmatpush1.bf16.msra.mxu0 %v4196
    %4885 = vmatprep.subr.bf16.mxu0 %v4203
    %4886 = vmatpush1.bf16.msra.mxu0 %v4202
    %4887 = vmatprep.subr.bf16.mxu0 %v4209
    %4888 = vmatpush1.bf16.msra.mxu0 %v4208
    %4889 = vmatprep.subr.bf16.mxu0 %v4215
    %4890 = vmatpush1.bf16.msra.mxu0 %v4214
    %4891 = vmatprep.subr.bf16.mxu0 %v4221
    %4892 = vmatpush1.bf16.msra.mxu0 %v4220
    %4893 = vmatprep.subr.bf16.mxu0 %v4227
    %4894 = vmatpush1.bf16.msra.mxu0 %v4226
    %4895 = vmatprep.subr.bf16.mxu0 %v4233
    %4896 = vmatpush1.bf16.msra.mxu0 %v4232
    %4897 = vmatprep.subr.bf16.mxu0 %v4239
    %4898 = vmatpush1.bf16.msra.mxu0 %v4238
    %4899 = vmatprep.subr.bf16.mxu0 %v4245
    %4900 = vmatpush1.bf16.msra.mxu0 %v4244
    %4901 = vmatprep.subr.bf16.mxu0 %v4251
    %4902 = vmatpush1.bf16.msra.mxu0 %v4250
    %4903 = vmatprep.subr.bf16.mxu0 %v4257
    %4904 = vmatpush1.bf16.msra.mxu0 %v4256
    %4905 = vmatprep.subr.bf16.mxu0 %v4263
    %4906 = vmatpush1.bf16.msra.mxu0 %v4262
    %4907 = vmatprep.mubr.bf16.mxu0 %v3295
    %4908 = vmatmul.mubr.bf16.gmra.mrb[0].mxu0 %v3294
    %v4909 = vpop.f32.mrb[0].mxu0
    %v4910 = vadd.f32 %v3257, %v4909
    %v4911 = vpop.f32.mrb[0].mxu0
    %v4912 = vadd.f32 %v3261, %v4911
    %v4913 = vpop.f32.mrb[0].mxu0
    %v4914 = vadd.f32 %v3257, %v4913
    %v4915 = vpop.f32.mrb[0].mxu0
    %v4916 = vadd.f32 %v3261, %v4915
    %4917 = vdwg.mxu0
    %4918 = vmatprep.subr.bf16.mxu0 %v4269
    %4919 = vmatpush1.bf16.msra.mxu0 %v4268
    %4920 = vmatprep.subr.bf16.mxu0 %v4275
    %4921 = vmatpush1.bf16.msra.mxu0 %v4274
    %4922 = vmatprep.subr.bf16.mxu0 %v4281
    %4923 = vmatpush1.bf16.msra.mxu0 %v4280
    %4924 = vmatprep.subr.bf16.mxu0 %v4287
    %4925 = vmatpush1.bf16.msra.mxu0 %v4286
    %4926 = vmatprep.subr.bf16.mxu0 %v4293
    %4927 = vmatpush1.bf16.msra.mxu0 %v4292
    %4928 = vmatprep.subr.bf16.mxu0 %v4299
    %4929 = vmatpush1.bf16.msra.mxu0 %v4298
    %4930 = vmatprep.subr.bf16.mxu0 %v4305
    %4931 = vmatpush1.bf16.msra.mxu0 %v4304
    %4932 = vmatprep.subr.bf16.mxu0 %v4311
    %4933 = vmatpush1.bf16.msra.mxu0 %v4310
    %4934 = vmatprep.subr.bf16.mxu0 %v4317
    %4935 = vmatpush1.bf16.msra.mxu0 %v4316
    %4936 = vmatprep.subr.bf16.mxu0 %v4323
    %4937 = vmatpush1.bf16.msra.mxu0 %v4322
    %4938 = vmatprep.subr.bf16.mxu0 %v4329
    %4939 = vmatpush1.bf16.msra.mxu0 %v4328
    %4940 = vmatprep.subr.bf16.mxu0 %v4335
    %4941 = vmatpush1.bf16.msra.mxu0 %v4334
    %4942 = vmatprep.subr.bf16.mxu0 %v4341
    %4943 = vmatpush1.bf16.msra.mxu0 %v4340
    %4944 = vmatprep.subr.bf16.mxu0 %v4347
    %4945 = vmatpush1.bf16.msra.mxu0 %v4346
    %4946 = vmatprep.subr.bf16.mxu0 %v4353
    %4947 = vmatpush1.bf16.msra.mxu0 %v4352
    %4948 = vmatprep.subr.bf16.mxu0 %v4359
    %4949 = vmatpush1.bf16.msra.mxu0 %v4358
    %4950 = vmatprep.mubr.bf16.mxu0 %v3297
    %4951 = vmatmul.mubr.bf16.gmra.mrb[0].mxu0 %v3296
    %v4952 = vpop.f32.mrb[0].mxu0
    %v4953 = vadd.f32 %v4910, %v4952
    %v4954 = vpop.f32.mrb[0].mxu0
    %v4955 = vadd.f32 %v4912, %v4954
    %v4956 = vpop.f32.mrb[0].mxu0
    %v4957 = vadd.f32 %v4914, %v4956
    %v4958 = vpop.f32.mrb[0].mxu0
    %v4959 = vadd.f32 %v4916, %v4958
    %4960 = vdwg.mxu0
    %4961 = vmatprep.subr.bf16.mxu0 %v4365
    %4962 = vmatpush1.bf16.msra.mxu0 %v4364
    %4963 = vmatprep.subr.bf16.mxu0 %v4371
    %4964 = vmatpush1.bf16.msra.mxu0 %v4370
    %4965 = vmatprep.subr.bf16.mxu0 %v4377
    %4966 = vmatpush1.bf16.msra.mxu0 %v4376
    %4967 = vmatprep.subr.bf16.mxu0 %v4383
    %4968 = vmatpush1.bf16.msra.mxu0 %v4382
    %4969 = vmatprep.subr.bf16.mxu0 %v4389
    %4970 = vmatpush1.bf16.msra.mxu0 %v4388
    %4971 = vmatprep.subr.bf16.mxu0 %v4395
    %4972 = vmatpush1.bf16.msra.mxu0 %v4394
    %4973 = vmatprep.subr.bf16.mxu0 %v4401
    %4974 = vmatpush1.bf16.msra.mxu0 %v4400
    %4975 = vmatprep.subr.bf16.mxu0 %v4407
    %4976 = vmatpush1.bf16.msra.mxu0 %v4406
    %4977 = vmatprep.subr.bf16.mxu0 %v4413
    %4978 = vmatpush1.bf16.msra.mxu0 %v4412
    %4979 = vmatprep.subr.bf16.mxu0 %v4419
    %4980 = vmatpush1.bf16.msra.mxu0 %v4418
    %4981 = vmatprep.subr.bf16.mxu0 %v4425
    %4982 = vmatpush1.bf16.msra.mxu0 %v4424
    %4983 = vmatprep.subr.bf16.mxu0 %v4431
    %4984 = vmatpush1.bf16.msra.mxu0 %v4430
    %4985 = vmatprep.subr.bf16.mxu0 %v4437
    %4986 = vmatpush1.bf16.msra.mxu0 %v4436
    %4987 = vmatprep.subr.bf16.mxu0 %v4443
    %4988 = vmatpush1.bf16.msra.mxu0 %v4442
    %4989 = vmatprep.subr.bf16.mxu0 %v4449
    %4990 = vmatpush1.bf16.msra.mxu0 %v4448
    %4991 = vmatprep.subr.bf16.mxu0 %v4455
    %4992 = vmatpush1.bf16.msra.mxu0 %v4454
    %4993 = vmatprep.mubr.bf16.mxu0 %v3299
    %4994 = vmatmul.mubr.bf16.gmra.mrb[0].mxu0 %v3298
    %v4995 = vpop.f32.mrb[0].mxu0
    %v4996 = vadd.f32 %v4953, %v4995
    %v4997 = vpop.f32.mrb[0].mxu0
    %v4998 = vadd.f32 %v4955, %v4997
    %v4999 = vpop.f32.mrb[0].mxu0
    %v5000 = vadd.f32 %v4957, %v4999
    %v5001 = vpop.f32.mrb[0].mxu0
    %v5002 = vadd.f32 %v4959, %v5001
    %5003 = vdwg.mxu0
    %5004 = vmatprep.subr.bf16.mxu0 %v4175
    %5005 = vmatpush1.bf16.msra.mxu0 %v4174
    %5006 = vmatprep.subr.bf16.mxu0 %v4181
    %5007 = vmatpush1.bf16.msra.mxu0 %v4180
    %5008 = vmatprep.subr.bf16.mxu0 %v4187
    %5009 = vmatpush1.bf16.msra.mxu0 %v4186
    %5010 = vmatprep.subr.bf16.mxu0 %v4193
    %5011 = vmatpush1.bf16.msra.mxu0 %v4192
    %5012 = vmatprep.subr.bf16.mxu0 %v4199
    %5013 = vmatpush1.bf16.msra.mxu0 %v4198
    %5014 = vmatprep.subr.bf16.mxu0 %v4205
    %5015 = vmatpush1.bf16.msra.mxu0 %v4204
    %5016 = vmatprep.subr.bf16.mxu0 %v4211
    %5017 = vmatpush1.bf16.msra.mxu0 %v4210
    %5018 = vmatprep.subr.bf16.mxu0 %v4217
    %5019 = vmatpush1.bf16.msra.mxu0 %v4216
    %5020 = vmatprep.subr.bf16.mxu0 %v4223
    %5021 = vmatpush1.bf16.msra.mxu0 %v4222
    %5022 = vmatprep.subr.bf16.mxu0 %v4229
    %5023 = vmatpush1.bf16.msra.mxu0 %v4228
    %5024 = vmatprep.subr.bf16.mxu0 %v4235
    %5025 = vmatpush1.bf16.msra.mxu0 %v4234
    %5026 = vmatprep.subr.bf16.mxu0 %v4241
    %5027 = vmatpush1.bf16.msra.mxu0 %v4240
    %5028 = vmatprep.subr.bf16.mxu0 %v4247
    %5029 = vmatpush1.bf16.msra.mxu0 %v4246
    %5030 = vmatprep.subr.bf16.mxu0 %v4253
    %5031 = vmatpush1.bf16.msra.mxu0 %v4252
    %5032 = vmatprep.subr.bf16.mxu0 %v4259
    %5033 = vmatpush1.bf16.msra.mxu0 %v4258
    %5034 = vmatprep.subr.bf16.mxu0 %v4265
    %5035 = vmatpush1.bf16.msra.mxu0 %v4264
    %5036 = vmatprep.mubr.bf16.mxu0 %v3295
    %5037 = vmatmul.mubr.bf16.gmra.mrb[0].mxu0 %v3294
    %v5038 = vpop.f32.mrb[0].mxu0
    %v5039 = vadd.f32 %v3265, %v5038
    %v5040 = vpop.f32.mrb[0].mxu0
    %v5041 = vadd.f32 %v3269, %v5040
    %v5042 = vpop.f32.mrb[0].mxu0
    %v5043 = vadd.f32 %v3265, %v5042
    %v5044 = vpop.f32.mrb[0].mxu0
    %v5045 = vadd.f32 %v3269, %v5044
    %5046 = vdwg.mxu0
    %5047 = vmatprep.subr.bf16.mxu0 %v4271
    %5048 = vmatpush1.bf16.msra.mxu0 %v4270
    %5049 = vmatprep.subr.bf16.mxu0 %v4277
    %5050 = vmatpush1.bf16.msra.mxu0 %v4276
    %5051 = vmatprep.subr.bf16.mxu0 %v4283
    %5052 = vmatpush1.bf16.msra.mxu0 %v4282
    %5053 = vmatprep.subr.bf16.mxu0 %v4289
    %5054 = vmatpush1.bf16.msra.mxu0 %v4288
    %5055 = vmatprep.subr.bf16.mxu0 %v4295
    %5056 = vmatpush1.bf16.msra.mxu0 %v4294
    %5057 = vmatprep.subr.bf16.mxu0 %v4301
    %5058 = vmatpush1.bf16.msra.mxu0 %v4300
    %5059 = vmatprep.subr.bf16.mxu0 %v4307
    %5060 = vmatpush1.bf16.msra.mxu0 %v4306
    %5061 = vmatprep.subr.bf16.mxu0 %v4313
    %5062 = vmatpush1.bf16.msra.mxu0 %v4312
    %5063 = vmatprep.subr.bf16.mxu0 %v4319
    %5064 = vmatpush1.bf16.msra.mxu0 %v4318
    %5065 = vmatprep.subr.bf16.mxu0 %v4325
    %5066 = vmatpush1.bf16.msra.mxu0 %v4324
    %5067 = vmatprep.subr.bf16.mxu0 %v4331
    %5068 = vmatpush1.bf16.msra.mxu0 %v4330
    %5069 = vmatprep.subr.bf16.mxu0 %v4337
    %5070 = vmatpush1.bf16.msra.mxu0 %v4336
    %5071 = vmatprep.subr.bf16.mxu0 %v4343
    %5072 = vmatpush1.bf16.msra.mxu0 %v4342
    %5073 = vmatprep.subr.bf16.mxu0 %v4349
    %5074 = vmatpush1.bf16.msra.mxu0 %v4348
    %5075 = vmatprep.subr.bf16.mxu0 %v4355
    %5076 = vmatpush1.bf16.msra.mxu0 %v4354
    %5077 = vmatprep.subr.bf16.mxu0 %v4361
    %5078 = vmatpush1.bf16.msra.mxu0 %v4360
    %5079 = vmatprep.mubr.bf16.mxu0 %v3297
    %5080 = vmatmul.mubr.bf16.gmra.mrb[0].mxu0 %v3296
    %v5081 = vpop.f32.mrb[0].mxu0
    %v5082 = vadd.f32 %v5039, %v5081
    %v5083 = vpop.f32.mrb[0].mxu0
    %v5084 = vadd.f32 %v5041, %v5083
    %v5085 = vpop.f32.mrb[0].mxu0
    %v5086 = vadd.f32 %v5043, %v5085
    %v5087 = vpop.f32.mrb[0].mxu0
    %v5088 = vadd.f32 %v5045, %v5087
    %5089 = vdwg.mxu0
    %5090 = vmatprep.subr.bf16.mxu0 %v4367
    %5091 = vmatpush1.bf16.msra.mxu0 %v4366
    %5092 = vmatprep.subr.bf16.mxu0 %v4373
    %5093 = vmatpush1.bf16.msra.mxu0 %v4372
    %5094 = vmatprep.subr.bf16.mxu0 %v4379
    %5095 = vmatpush1.bf16.msra.mxu0 %v4378
    %5096 = vmatprep.subr.bf16.mxu0 %v4385
    %5097 = vmatpush1.bf16.msra.mxu0 %v4384
    %5098 = vmatprep.subr.bf16.mxu0 %v4391
    %5099 = vmatpush1.bf16.msra.mxu0 %v4390
    %5100 = vmatprep.subr.bf16.mxu0 %v4397
    %5101 = vmatpush1.bf16.msra.mxu0 %v4396
    %5102 = vmatprep.subr.bf16.mxu0 %v4403
    %5103 = vmatpush1.bf16.msra.mxu0 %v4402
    %5104 = vmatprep.subr.bf16.mxu0 %v4409
    %5105 = vmatpush1.bf16.msra.mxu0 %v4408
    %5106 = vmatprep.subr.bf16.mxu0 %v4415
    %5107 = vmatpush1.bf16.msra.mxu0 %v4414
    %5108 = vmatprep.subr.bf16.mxu0 %v4421
    %5109 = vmatpush1.bf16.msra.mxu0 %v4420
    %5110 = vmatprep.subr.bf16.mxu0 %v4427
    %5111 = vmatpush1.bf16.msra.mxu0 %v4426
    %5112 = vmatprep.subr.bf16.mxu0 %v4433
    %5113 = vmatpush1.bf16.msra.mxu0 %v4432
    %5114 = vmatprep.subr.bf16.mxu0 %v4439
    %5115 = vmatpush1.bf16.msra.mxu0 %v4438
    %5116 = vmatprep.subr.bf16.mxu0 %v4445
    %5117 = vmatpush1.bf16.msra.mxu0 %v4444
    %5118 = vmatprep.subr.bf16.mxu0 %v4451
    %5119 = vmatpush1.bf16.msra.mxu0 %v4450
    %5120 = vmatprep.subr.bf16.mxu0 %v4457
    %5121 = vmatpush1.bf16.msra.mxu0 %v4456
    %5122 = vmatprep.mubr.bf16.mxu0 %v3299
    %5123 = vmatmul.mubr.bf16.gmra.mrb[0].mxu0 %v3298
    %v5124 = vpop.f32.mrb[0].mxu0
    %v5125 = vadd.f32 %v5082, %v5124
    %v5126 = vpop.f32.mrb[0].mxu0
    %v5127 = vadd.f32 %v5084, %v5126
    %v5128 = vpop.f32.mrb[0].mxu0
    %v5129 = vadd.f32 %v5086, %v5128
    %v5130 = vpop.f32.mrb[0].mxu0
    %v5131 = vadd.f32 %v5088, %v5130
    %5132 = vdwg.mxu0
    %v5133 = vtanh.pop %v4867
    %v5134 = vtanh.pop %v4869
    %v5135 = vtanh.pop %v4996
    %v5136 = vtanh.pop %v4998
    %v5137 = vtanh.pop %v5125
    %v5138 = vtanh.pop %v5127
    %v5139 = vtanh.pop %v4871
    %v5140 = vtanh.pop %v4873
    %v5141 = vtanh.pop %v5000
    %v5142 = vtanh.pop %v5002
    %v5143 = vtanh.pop %v5129
    %v5144 = vtanh.pop %v5131
    %5145 = vst [vmem:[#allocation5] sm:$0xff] %v5133
    %5146 = vst [vmem:[#allocation5 + $0x8] sm:$0xff] %v5134
    %5147 = vst [vmem:[#allocation5 + $0x10] sm:$0xff] %v5135
    %5148 = vst [vmem:[#allocation5 + $0x18] sm:$0xff] %v5136
    %5149 = vst [vmem:[#allocation5 + $0x20] sm:$0xff] %v5137
    %5150 = vst [vmem:[#allocation5 + $0x28] sm:$0xff] %v5138
    %5151 = vst [vmem:[#allocation5 + $0x30] sm:$0xff] %v5139
    %5152 = vst [vmem:[#allocation5 + $0x38] sm:$0xff] %v5140
    %5153 = vst [vmem:[#allocation5 + $0x40] sm:$0xff] %v5141
    %5154 = vst [vmem:[#allocation5 + $0x48] sm:$0xff] %v5142
    %5155 = vst [vmem:[#allocation5 + $0x50] sm:$0xff] %v5143
    %5156 = vst [vmem:[#allocation5 + $0x58] sm:$0xff] %v5144
    %v5157 = vpack.c.bf16 %v2932, %v2926
    %v5158 = vpack.c.bf16 %v2933, %v2927
    %v5159 = vpack.c.bf16 %v2934, %v2928
    %v5160 = vpack.c.bf16 %v2935, %v2929
    %v5161 = vpack.c.bf16 %v2936, %v2930
    %v5162 = vpack.c.bf16 %v2937, %v2931
    %v5163 = vpack.c.bf16 %v5139, %v5133
    %v5164 = vpack.c.bf16 %v5140, %v5134
    %v5165 = vpack.c.bf16 %v5141, %v5135
    %v5166 = vpack.c.bf16 %v5142, %v5136
    %v5167 = vpack.c.bf16 %v5143, %v5137
    %v5168 = vpack.c.bf16 %v5144, %v5138
    %v5169 = vld [vmem:[%s7] sm:$0xff]
    %v5170 = vld [vmem:[%s7 + $0x8] sm:$0xff]
    %v5171 = vld [vmem:[%s7 + $0x10] sm:$0xff]
    %v5172 = vld [vmem:[%s7 + $0x18] sm:$0xff]
    %v5173 = vld [vmem:[%s7 + $0x20] sm:$0xff]
    %v5174 = vld [vmem:[%s7 + $0x28] sm:$0xff]
    %v5175 = vld [vmem:[%s7 + $0x30] sm:$0xff]
    %v5176 = vld [vmem:[%s7 + $0x38] sm:$0xff]
    %v5177 = vld [vmem:[%s7 + $0x40] sm:$0xff]
    %v5178 = vld [vmem:[%s7 + $0x48] sm:$0xff]
    %v5179 = vld [vmem:[%s7 + $0x50] sm:$0xff]
    %v5180 = vld [vmem:[%s7 + $0x58] sm:$0xff]
    %v5181 = vld [vmem:[%s7 + $0x60] sm:$0xff]
    %v5182 = vld [vmem:[%s7 + $0x68] sm:$0xff]
    %v5183 = vld [vmem:[%s7 + $0x70] sm:$0xff]
    %v5184 = vld [vmem:[%s7 + $0x78] sm:$0xff]
    %v5185 = vld [vmem:[%s7 + $0x80] sm:$0xff]
    %v5186 = vld [vmem:[%s7 + $0x88] sm:$0xff]
    %v5187 = vld [vmem:[%s7 + $0x90] sm:$0xff]
    %v5188 = vld [vmem:[%s7 + $0x98] sm:$0xff]
    %v5189 = vld [vmem:[%s7 + $0xa0] sm:$0xff]
    %v5190 = vld [vmem:[%s7 + $0xa8] sm:$0xff]
    %v5191 = vld [vmem:[%s7 + $0xb0] sm:$0xff]
    %v5192 = vld [vmem:[%s7 + $0xb8] sm:$0xff]
    %v5193 = vld [vmem:[%s7 + $0xc0] sm:$0xff]
    %v5194 = vld [vmem:[%s7 + $0xc8] sm:$0xff]
    %v5195 = vld [vmem:[%s7 + $0xd0] sm:$0xff]
    %v5196 = vld [vmem:[%s7 + $0xd8] sm:$0xff]
    %v5197 = vld [vmem:[%s7 + $0xe0] sm:$0xff]
    %v5198 = vld [vmem:[%s7 + $0xe8] sm:$0xff]
    %v5199 = vld [vmem:[%s7 + $0xf0] sm:$0xff]
    %v5200 = vld [vmem:[%s7 + $0xf8] sm:$0xff]
    %v5201 = vld [vmem:[%s7 + $0x100] sm:$0xff]
    %v5202 = vld [vmem:[%s7 + $0x108] sm:$0xff]
    %v5203 = vld [vmem:[%s7 + $0x110] sm:$0xff]
    %v5204 = vld [vmem:[%s7 + $0x118] sm:$0xff]
    %v5205 = vld [vmem:[%s7 + $0x120] sm:$0xff]
    %v5206 = vld [vmem:[%s7 + $0x128] sm:$0xff]
    %v5207 = vld [vmem:[%s7 + $0x130] sm:$0xff]
    %v5208 = vld [vmem:[%s7 + $0x138] sm:$0xff]
    %v5209 = vld [vmem:[%s7 + $0x140] sm:$0xff]
    %v5210 = vld [vmem:[%s7 + $0x148] sm:$0xff]
    %v5211 = vld [vmem:[%s7 + $0x150] sm:$0xff]
    %v5212 = vld [vmem:[%s7 + $0x158] sm:$0xff]
    %v5213 = vld [vmem:[%s7 + $0x160] sm:$0xff]
    %v5214 = vld [vmem:[%s7 + $0x168] sm:$0xff]
    %v5215 = vld [vmem:[%s7 + $0x170] sm:$0xff]
    %v5216 = vld [vmem:[%s7 + $0x178] sm:$0xff]
    %v5217 = vld [vmem:[%s7 + $0x180] sm:$0xff]
    %v5218 = vld [vmem:[%s7 + $0x188] sm:$0xff]
    %v5219 = vld [vmem:[%s7 + $0x190] sm:$0xff]
    %v5220 = vld [vmem:[%s7 + $0x198] sm:$0xff]
    %v5221 = vld [vmem:[%s7 + $0x1a0] sm:$0xff]
    %v5222 = vld [vmem:[%s7 + $0x1a8] sm:$0xff]
    %v5223 = vld [vmem:[%s7 + $0x1b0] sm:$0xff]
    %v5224 = vld [vmem:[%s7 + $0x1b8] sm:$0xff]
    %v5225 = vld [vmem:[%s7 + $0x1c0] sm:$0xff]
    %v5226 = vld [vmem:[%s7 + $0x1c8] sm:$0xff]
    %v5227 = vld [vmem:[%s7 + $0x1d0] sm:$0xff]
    %v5228 = vld [vmem:[%s7 + $0x1d8] sm:$0xff]
    %v5229 = vld [vmem:[%s7 + $0x1e0] sm:$0xff]
    %v5230 = vld [vmem:[%s7 + $0x1e8] sm:$0xff]
    %v5231 = vld [vmem:[%s7 + $0x1f0] sm:$0xff]
    %v5232 = vld [vmem:[%s7 + $0x1f8] sm:$0xff]
    %v5233 = vld [vmem:[%s7 + $0x200] sm:$0xff]
    %v5234 = vld [vmem:[%s7 + $0x208] sm:$0xff]
    %v5235 = vld [vmem:[%s7 + $0x210] sm:$0xff]
    %v5236 = vld [vmem:[%s7 + $0x218] sm:$0xff]
    %v5237 = vld [vmem:[%s7 + $0x220] sm:$0xff]
    %v5238 = vld [vmem:[%s7 + $0x228] sm:$0xff]
    %v5239 = vld [vmem:[%s7 + $0x230] sm:$0xff]
    %v5240 = vld [vmem:[%s7 + $0x238] sm:$0xff]
    %v5241 = vld [vmem:[%s7 + $0x240] sm:$0xff]
    %v5242 = vld [vmem:[%s7 + $0x248] sm:$0xff]
    %v5243 = vld [vmem:[%s7 + $0x250] sm:$0xff]
    %v5244 = vld [vmem:[%s7 + $0x258] sm:$0xff]
    %v5245 = vld [vmem:[%s7 + $0x260] sm:$0xff]
    %v5246 = vld [vmem:[%s7 + $0x268] sm:$0xff]
    %v5247 = vld [vmem:[%s7 + $0x270] sm:$0xff]
    %v5248 = vld [vmem:[%s7 + $0x278] sm:$0xff]
    %v5249 = vld [vmem:[%s7 + $0x280] sm:$0xff]
    %v5250 = vld [vmem:[%s7 + $0x288] sm:$0xff]
    %v5251 = vld [vmem:[%s7 + $0x290] sm:$0xff]
    %v5252 = vld [vmem:[%s7 + $0x298] sm:$0xff]
    %v5253 = vld [vmem:[%s7 + $0x2a0] sm:$0xff]
    %v5254 = vld [vmem:[%s7 + $0x2a8] sm:$0xff]
    %v5255 = vld [vmem:[%s7 + $0x2b0] sm:$0xff]
    %v5256 = vld [vmem:[%s7 + $0x2b8] sm:$0xff]
    %v5257 = vld [vmem:[%s7 + $0x2c0] sm:$0xff]
    %v5258 = vld [vmem:[%s7 + $0x2c8] sm:$0xff]
    %v5259 = vld [vmem:[%s7 + $0x2d0] sm:$0xff]
    %v5260 = vld [vmem:[%s7 + $0x2d8] sm:$0xff]
    %v5261 = vld [vmem:[%s7 + $0x2e0] sm:$0xff]
    %v5262 = vld [vmem:[%s7 + $0x2e8] sm:$0xff]
    %v5263 = vld [vmem:[%s7 + $0x2f0] sm:$0xff]
    %v5264 = vld [vmem:[%s7 + $0x2f8] sm:$0xff]
    %v5265 = vld [vmem:[%s8] sm:$0x3]
    %v5267 = vlaneseq
    %v5268 = vshrl.u32 %v5267, 7
    %v5269 = vsub.s32 0, %v5268
    %v5270 = vrot.slane %v5265, %v5269
    %v5271 = vlaneseq
    %v5272 = vshrl.u32 %v5271, 7
    %v5273 = vsub.s32 1, %v5272
    %v5274 = vrot.slane %v5265, %v5273
    %v5373 = vunpack.c.l.b16 %v5169
    %v5374 = vunpack.c.h.b16 %v5169
    %v5375 = vunpack.c.l.b16 %v5170
    %v5376 = vunpack.c.h.b16 %v5170
    %v5377 = vunpack.c.l.b16 %v5171
    %v5378 = vunpack.c.h.b16 %v5171
    %v5379 = vunpack.c.l.b16 %v5172
    %v5380 = vunpack.c.h.b16 %v5172
    %v5381 = vunpack.c.l.b16 %v5173
    %v5382 = vunpack.c.h.b16 %v5173
    %v5383 = vunpack.c.l.b16 %v5174
    %v5384 = vunpack.c.h.b16 %v5174
    %v5385 = vunpack.c.l.b16 %v5175
    %v5386 = vunpack.c.h.b16 %v5175
    %v5387 = vunpack.c.l.b16 %v5176
    %v5388 = vunpack.c.h.b16 %v5176
    %v5389 = vunpack.c.l.b16 %v5177
    %v5390 = vunpack.c.h.b16 %v5177
    %v5391 = vunpack.c.l.b16 %v5178
    %v5392 = vunpack.c.h.b16 %v5178
    %v5393 = vunpack.c.l.b16 %v5179
    %v5394 = vunpack.c.h.b16 %v5179
    %v5395 = vunpack.c.l.b16 %v5180
    %v5396 = vunpack.c.h.b16 %v5180
    %v5397 = vunpack.c.l.b16 %v5181
    %v5398 = vunpack.c.h.b16 %v5181
    %v5399 = vunpack.c.l.b16 %v5182
    %v5400 = vunpack.c.h.b16 %v5182
    %v5401 = vunpack.c.l.b16 %v5183
    %v5402 = vunpack.c.h.b16 %v5183
    %v5403 = vunpack.c.l.b16 %v5184
    %v5404 = vunpack.c.h.b16 %v5184
    %v5405 = vunpack.c.l.b16 %v5185
    %v5406 = vunpack.c.h.b16 %v5185
    %v5407 = vunpack.c.l.b16 %v5186
    %v5408 = vunpack.c.h.b16 %v5186
    %v5409 = vunpack.c.l.b16 %v5187
    %v5410 = vunpack.c.h.b16 %v5187
    %v5411 = vunpack.c.l.b16 %v5188
    %v5412 = vunpack.c.h.b16 %v5188
    %v5413 = vunpack.c.l.b16 %v5189
    %v5414 = vunpack.c.h.b16 %v5189
    %v5415 = vunpack.c.l.b16 %v5190
    %v5416 = vunpack.c.h.b16 %v5190
    %v5417 = vunpack.c.l.b16 %v5191
    %v5418 = vunpack.c.h.b16 %v5191
    %v5419 = vunpack.c.l.b16 %v5192
    %v5420 = vunpack.c.h.b16 %v5192
    %v5421 = vunpack.c.l.b16 %v5193
    %v5422 = vunpack.c.h.b16 %v5193
    %v5423 = vunpack.c.l.b16 %v5194
    %v5424 = vunpack.c.h.b16 %v5194
    %v5425 = vunpack.c.l.b16 %v5195
    %v5426 = vunpack.c.h.b16 %v5195
    %v5427 = vunpack.c.l.b16 %v5196
    %v5428 = vunpack.c.h.b16 %v5196
    %v5429 = vunpack.c.l.b16 %v5197
    %v5430 = vunpack.c.h.b16 %v5197
    %v5431 = vunpack.c.l.b16 %v5198
    %v5432 = vunpack.c.h.b16 %v5198
    %v5433 = vunpack.c.l.b16 %v5199
    %v5434 = vunpack.c.h.b16 %v5199
    %v5435 = vunpack.c.l.b16 %v5200
    %v5436 = vunpack.c.h.b16 %v5200
    %v5437 = vunpack.c.l.b16 %v5201
    %v5438 = vunpack.c.h.b16 %v5201
    %v5439 = vunpack.c.l.b16 %v5202
    %v5440 = vunpack.c.h.b16 %v5202
    %v5441 = vunpack.c.l.b16 %v5203
    %v5442 = vunpack.c.h.b16 %v5203
    %v5443 = vunpack.c.l.b16 %v5204
    %v5444 = vunpack.c.h.b16 %v5204
    %v5445 = vunpack.c.l.b16 %v5205
    %v5446 = vunpack.c.h.b16 %v5205
    %v5447 = vunpack.c.l.b16 %v5206
    %v5448 = vunpack.c.h.b16 %v5206
    %v5449 = vunpack.c.l.b16 %v5207
    %v5450 = vunpack.c.h.b16 %v5207
    %v5451 = vunpack.c.l.b16 %v5208
    %v5452 = vunpack.c.h.b16 %v5208
    %v5453 = vunpack.c.l.b16 %v5209
    %v5454 = vunpack.c.h.b16 %v5209
    %v5455 = vunpack.c.l.b16 %v5210
    %v5456 = vunpack.c.h.b16 %v5210
    %v5457 = vunpack.c.l.b16 %v5211
    %v5458 = vunpack.c.h.b16 %v5211
    %v5459 = vunpack.c.l.b16 %v5212
    %v5460 = vunpack.c.h.b16 %v5212
    %v5461 = vunpack.c.l.b16 %v5213
    %v5462 = vunpack.c.h.b16 %v5213
    %v5463 = vunpack.c.l.b16 %v5214
    %v5464 = vunpack.c.h.b16 %v5214
    %v5465 = vunpack.c.l.b16 %v5215
    %v5466 = vunpack.c.h.b16 %v5215
    %v5467 = vunpack.c.l.b16 %v5216
    %v5468 = vunpack.c.h.b16 %v5216
    %v5469 = vunpack.c.l.b16 %v5217
    %v5470 = vunpack.c.h.b16 %v5217
    %v5471 = vunpack.c.l.b16 %v5218
    %v5472 = vunpack.c.h.b16 %v5218
    %v5473 = vunpack.c.l.b16 %v5219
    %v5474 = vunpack.c.h.b16 %v5219
    %v5475 = vunpack.c.l.b16 %v5220
    %v5476 = vunpack.c.h.b16 %v5220
    %v5477 = vunpack.c.l.b16 %v5221
    %v5478 = vunpack.c.h.b16 %v5221
    %v5479 = vunpack.c.l.b16 %v5222
    %v5480 = vunpack.c.h.b16 %v5222
    %v5481 = vunpack.c.l.b16 %v5223
    %v5482 = vunpack.c.h.b16 %v5223
    %v5483 = vunpack.c.l.b16 %v5224
    %v5484 = vunpack.c.h.b16 %v5224
    %v5485 = vunpack.c.l.b16 %v5225
    %v5486 = vunpack.c.h.b16 %v5225
    %v5487 = vunpack.c.l.b16 %v5226
    %v5488 = vunpack.c.h.b16 %v5226
    %v5489 = vunpack.c.l.b16 %v5227
    %v5490 = vunpack.c.h.b16 %v5227
    %v5491 = vunpack.c.l.b16 %v5228
    %v5492 = vunpack.c.h.b16 %v5228
    %v5493 = vunpack.c.l.b16 %v5229
    %v5494 = vunpack.c.h.b16 %v5229
    %v5495 = vunpack.c.l.b16 %v5230
    %v5496 = vunpack.c.h.b16 %v5230
    %v5497 = vunpack.c.l.b16 %v5231
    %v5498 = vunpack.c.h.b16 %v5231
    %v5499 = vunpack.c.l.b16 %v5232
    %v5500 = vunpack.c.h.b16 %v5232
    %v5501 = vunpack.c.l.b16 %v5233
    %v5502 = vunpack.c.h.b16 %v5233
    %v5503 = vunpack.c.l.b16 %v5234
    %v5504 = vunpack.c.h.b16 %v5234
    %v5505 = vunpack.c.l.b16 %v5235
    %v5506 = vunpack.c.h.b16 %v5235
    %v5507 = vunpack.c.l.b16 %v5236
    %v5508 = vunpack.c.h.b16 %v5236
    %v5509 = vunpack.c.l.b16 %v5237
    %v5510 = vunpack.c.h.b16 %v5237
    %v5511 = vunpack.c.l.b16 %v5238
    %v5512 = vunpack.c.h.b16 %v5238
    %v5513 = vunpack.c.l.b16 %v5239
    %v5514 = vunpack.c.h.b16 %v5239
    %v5515 = vunpack.c.l.b16 %v5240
    %v5516 = vunpack.c.h.b16 %v5240
    %v5517 = vunpack.c.l.b16 %v5241
    %v5518 = vunpack.c.h.b16 %v5241
    %v5519 = vunpack.c.l.b16 %v5242
    %v5520 = vunpack.c.h.b16 %v5242
    %v5521 = vunpack.c.l.b16 %v5243
    %v5522 = vunpack.c.h.b16 %v5243
    %v5523 = vunpack.c.l.b16 %v5244
    %v5524 = vunpack.c.h.b16 %v5244
    %v5525 = vunpack.c.l.b16 %v5245
    %v5526 = vunpack.c.h.b16 %v5245
    %v5527 = vunpack.c.l.b16 %v5246
    %v5528 = vunpack.c.h.b16 %v5246
    %v5529 = vunpack.c.l.b16 %v5247
    %v5530 = vunpack.c.h.b16 %v5247
    %v5531 = vunpack.c.l.b16 %v5248
    %v5532 = vunpack.c.h.b16 %v5248
    %v5533 = vunpack.c.l.b16 %v5249
    %v5534 = vunpack.c.h.b16 %v5249
    %v5535 = vunpack.c.l.b16 %v5250
    %v5536 = vunpack.c.h.b16 %v5250
    %v5537 = vunpack.c.l.b16 %v5251
    %v5538 = vunpack.c.h.b16 %v5251
    %v5539 = vunpack.c.l.b16 %v5252
    %v5540 = vunpack.c.h.b16 %v5252
    %v5541 = vunpack.c.l.b16 %v5253
    %v5542 = vunpack.c.h.b16 %v5253
    %v5543 = vunpack.c.l.b16 %v5254
    %v5544 = vunpack.c.h.b16 %v5254
    %v5545 = vunpack.c.l.b16 %v5255
    %v5546 = vunpack.c.h.b16 %v5255
    %v5547 = vunpack.c.l.b16 %v5256
    %v5548 = vunpack.c.h.b16 %v5256
    %v5549 = vunpack.c.l.b16 %v5257
    %v5550 = vunpack.c.h.b16 %v5257
    %v5551 = vunpack.c.l.b16 %v5258
    %v5552 = vunpack.c.h.b16 %v5258
    %v5553 = vunpack.c.l.b16 %v5259
    %v5554 = vunpack.c.h.b16 %v5259
    %v5555 = vunpack.c.l.b16 %v5260
    %v5556 = vunpack.c.h.b16 %v5260
    %v5557 = vunpack.c.l.b16 %v5261
    %v5558 = vunpack.c.h.b16 %v5261
    %v5559 = vunpack.c.l.b16 %v5262
    %v5560 = vunpack.c.h.b16 %v5262
    %v5561 = vunpack.c.l.b16 %v5263
    %v5562 = vunpack.c.h.b16 %v5263
    %v5563 = vunpack.c.l.b16 %v5264
    %v5564 = vunpack.c.h.b16 %v5264
    %v5565 = vpack.c.b16 %v5375, %v5373
    %v5566 = vpack.c.b16 %v5376, %v5374
    %v5567 = vpack.c.b16 %v5379, %v5377
    %v5568 = vpack.c.b16 %v5380, %v5378
    %v5569 = vpack.c.b16 %v5383, %v5381
    %v5570 = vpack.c.b16 %v5384, %v5382
    %v5571 = vpack.c.b16 %v5387, %v5385
    %v5572 = vpack.c.b16 %v5388, %v5386
    %v5573 = vpack.c.b16 %v5391, %v5389
    %v5574 = vpack.c.b16 %v5392, %v5390
    %v5575 = vpack.c.b16 %v5395, %v5393
    %v5576 = vpack.c.b16 %v5396, %v5394
    %v5577 = vpack.c.b16 %v5399, %v5397
    %v5578 = vpack.c.b16 %v5400, %v5398
    %v5579 = vpack.c.b16 %v5403, %v5401
    %v5580 = vpack.c.b16 %v5404, %v5402
    %v5581 = vpack.c.b16 %v5407, %v5405
    %v5582 = vpack.c.b16 %v5408, %v5406
    %v5583 = vpack.c.b16 %v5411, %v5409
    %v5584 = vpack.c.b16 %v5412, %v5410
    %v5585 = vpack.c.b16 %v5415, %v5413
    %v5586 = vpack.c.b16 %v5416, %v5414
    %v5587 = vpack.c.b16 %v5419, %v5417
    %v5588 = vpack.c.b16 %v5420, %v5418
    %v5589 = vpack.c.b16 %v5423, %v5421
    %v5590 = vpack.c.b16 %v5424, %v5422
    %v5591 = vpack.c.b16 %v5427, %v5425
    %v5592 = vpack.c.b16 %v5428, %v5426
    %v5593 = vpack.c.b16 %v5431, %v5429
    %v5594 = vpack.c.b16 %v5432, %v5430
    %v5595 = vpack.c.b16 %v5435, %v5433
    %v5596 = vpack.c.b16 %v5436, %v5434
    %v5597 = vpack.c.b16 %v5439, %v5437
    %v5598 = vpack.c.b16 %v5440, %v5438
    %v5599 = vpack.c.b16 %v5443, %v5441
    %v5600 = vpack.c.b16 %v5444, %v5442
    %v5601 = vpack.c.b16 %v5447, %v5445
    %v5602 = vpack.c.b16 %v5448, %v5446
    %v5603 = vpack.c.b16 %v5451, %v5449
    %v5604 = vpack.c.b16 %v5452, %v5450
    %v5605 = vpack.c.b16 %v5455, %v5453
    %v5606 = vpack.c.b16 %v5456, %v5454
    %v5607 = vpack.c.b16 %v5459, %v5457
    %v5608 = vpack.c.b16 %v5460, %v5458
    %v5609 = vpack.c.b16 %v5463, %v5461
    %v5610 = vpack.c.b16 %v5464, %v5462
    %v5611 = vpack.c.b16 %v5467, %v5465
    %v5612 = vpack.c.b16 %v5468, %v5466
    %v5613 = vpack.c.b16 %v5471, %v5469
    %v5614 = vpack.c.b16 %v5472, %v5470
    %v5615 = vpack.c.b16 %v5475, %v5473
    %v5616 = vpack.c.b16 %v5476, %v5474
    %v5617 = vpack.c.b16 %v5479, %v5477
    %v5618 = vpack.c.b16 %v5480, %v5478
    %v5619 = vpack.c.b16 %v5483, %v5481
    %v5620 = vpack.c.b16 %v5484, %v5482
    %v5621 = vpack.c.b16 %v5487, %v5485
    %v5622 = vpack.c.b16 %v5488, %v5486
    %v5623 = vpack.c.b16 %v5491, %v5489
    %v5624 = vpack.c.b16 %v5492, %v5490
    %v5625 = vpack.c.b16 %v5495, %v5493
    %v5626 = vpack.c.b16 %v5496, %v5494
    %v5627 = vpack.c.b16 %v5499, %v5497
    %v5628 = vpack.c.b16 %v5500, %v5498
    %v5629 = vpack.c.b16 %v5503, %v5501
    %v5630 = vpack.c.b16 %v5504, %v5502
    %v5631 = vpack.c.b16 %v5507, %v5505
    %v5632 = vpack.c.b16 %v5508, %v5506
    %v5633 = vpack.c.b16 %v5511, %v5509
    %v5634 = vpack.c.b16 %v5512, %v5510
    %v5635 = vpack.c.b16 %v5515, %v5513
    %v5636 = vpack.c.b16 %v5516, %v5514
    %v5637 = vpack.c.b16 %v5519, %v5517
    %v5638 = vpack.c.b16 %v5520, %v5518
    %v5639 = vpack.c.b16 %v5523, %v5521
    %v5640 = vpack.c.b16 %v5524, %v5522
    %v5641 = vpack.c.b16 %v5527, %v5525
    %v5642 = vpack.c.b16 %v5528, %v5526
    %v5643 = vpack.c.b16 %v5531, %v5529
    %v5644 = vpack.c.b16 %v5532, %v5530
    %v5645 = vpack.c.b16 %v5535, %v5533
    %v5646 = vpack.c.b16 %v5536, %v5534
    %v5647 = vpack.c.b16 %v5539, %v5537
    %v5648 = vpack.c.b16 %v5540, %v5538
    %v5649 = vpack.c.b16 %v5543, %v5541
    %v5650 = vpack.c.b16 %v5544, %v5542
    %v5651 = vpack.c.b16 %v5547, %v5545
    %v5652 = vpack.c.b16 %v5548, %v5546
    %v5653 = vpack.c.b16 %v5551, %v5549
    %v5654 = vpack.c.b16 %v5552, %v5550
    %v5655 = vpack.c.b16 %v5555, %v5553
    %v5656 = vpack.c.b16 %v5556, %v5554
    %v5657 = vpack.c.b16 %v5559, %v5557
    %v5658 = vpack.c.b16 %v5560, %v5558
    %v5659 = vpack.c.b16 %v5563, %v5561
    %v5660 = vpack.c.b16 %v5564, %v5562
    %5757 = vmatprep.subr.bf16.mxu0 %v5566
    %5758 = vmatpush1.bf16.msra.mxu0 %v5565
    %5759 = vmatprep.subr.bf16.mxu0 %v5568
    %5760 = vmatpush1.bf16.msra.mxu0 %v5567
    %5761 = vmatprep.subr.bf16.mxu0 %v5570
    %5762 = vmatpush1.bf16.msra.mxu0 %v5569
    %5763 = vmatprep.subr.bf16.mxu0 %v5572
    %5764 = vmatpush1.bf16.msra.mxu0 %v5571
    %5765 = vmatprep.subr.bf16.mxu0 %v5574
    %5766 = vmatpush1.bf16.msra.mxu0 %v5573
    %5767 = vmatprep.subr.bf16.mxu0 %v5576
    %5768 = vmatpush1.bf16.msra.mxu0 %v5575
    %5769 = vmatprep.subr.bf16.mxu0 %v5578
    %5770 = vmatpush1.bf16.msra.mxu0 %v5577
    %5771 = vmatprep.subr.bf16.mxu0 %v5580
    %5772 = vmatpush1.bf16.msra.mxu0 %v5579
    %5773 = vmatprep.subr.bf16.mxu0 %v5582
    %5774 = vmatpush1.bf16.msra.mxu0 %v5581
    %5775 = vmatprep.subr.bf16.mxu0 %v5584
    %5776 = vmatpush1.bf16.msra.mxu0 %v5583
    %5777 = vmatprep.subr.bf16.mxu0 %v5586
    %5778 = vmatpush1.bf16.msra.mxu0 %v5585
    %5779 = vmatprep.subr.bf16.mxu0 %v5588
    %5780 = vmatpush1.bf16.msra.mxu0 %v5587
    %5781 = vmatprep.subr.bf16.mxu0 %v5590
    %5782 = vmatpush1.bf16.msra.mxu0 %v5589
    %5783 = vmatprep.subr.bf16.mxu0 %v5592
    %5784 = vmatpush1.bf16.msra.mxu0 %v5591
    %5785 = vmatprep.subr.bf16.mxu0 %v5594
    %5786 = vmatpush1.bf16.msra.mxu0 %v5593
    %5787 = vmatprep.subr.bf16.mxu0 %v5596
    %5788 = vmatpush1.bf16.msra.mxu0 %v5595
    %5789 = vmatprep.mubr.bf16.mxu0 %v5158
    %5790 = vmatmul.mubr.bf16.gmra.mrb[0].mxu0 %v5157
    %v5791 = vpop.f32.mrb[0].mxu0
    %v5792 = vadd.f32 %v5270, %v5791
    %v5793 = vpop.f32.mrb[0].mxu0
    %v5794 = vpop.f32.mrb[0].mxu0
    %v5795 = vadd.f32 %v5270, %v5794
    %v5796 = vpop.f32.mrb[0].mxu0
    %5797 = vmatprep.mubr.bf16.mxu0 %v5164
    %5798 = vmatmul.mubr.bf16.gmra.mrb[0].mxu0 %v5163
    %v5799 = vpop.f32.mrb[0].mxu0
    %v5800 = vpop.f32.mrb[0].mxu0
    %v5801 = vadd.f32 %v5274, %v5800
    %v5802 = vpop.f32.mrb[0].mxu0
    %v5803 = vpop.f32.mrb[0].mxu0
    %v5804 = vadd.f32 %v5274, %v5803
    %5805 = vdwg.mxu0
    %5806 = vmatprep.subr.bf16.mxu0 %v5598
    %5807 = vmatpush1.bf16.msra.mxu0 %v5597
    %5808 = vmatprep.subr.bf16.mxu0 %v5600
    %5809 = vmatpush1.bf16.msra.mxu0 %v5599
    %5810 = vmatprep.subr.bf16.mxu0 %v5602
    %5811 = vmatpush1.bf16.msra.mxu0 %v5601
    %5812 = vmatprep.subr.bf16.mxu0 %v5604
    %5813 = vmatpush1.bf16.msra.mxu0 %v5603
    %5814 = vmatprep.subr.bf16.mxu0 %v5606
    %5815 = vmatpush1.bf16.msra.mxu0 %v5605
    %5816 = vmatprep.subr.bf16.mxu0 %v5608
    %5817 = vmatpush1.bf16.msra.mxu0 %v5607
    %5818 = vmatprep.subr.bf16.mxu0 %v5610
    %5819 = vmatpush1.bf16.msra.mxu0 %v5609
    %5820 = vmatprep.subr.bf16.mxu0 %v5612
    %5821 = vmatpush1.bf16.msra.mxu0 %v5611
    %5822 = vmatprep.subr.bf16.mxu0 %v5614
    %5823 = vmatpush1.bf16.msra.mxu0 %v5613
    %5824 = vmatprep.subr.bf16.mxu0 %v5616
    %5825 = vmatpush1.bf16.msra.mxu0 %v5615
    %5826 = vmatprep.subr.bf16.mxu0 %v5618
    %5827 = vmatpush1.bf16.msra.mxu0 %v5617
    %5828 = vmatprep.subr.bf16.mxu0 %v5620
    %5829 = vmatpush1.bf16.msra.mxu0 %v5619
    %5830 = vmatprep.subr.bf16.mxu0 %v5622
    %5831 = vmatpush1.bf16.msra.mxu0 %v5621
    %5832 = vmatprep.subr.bf16.mxu0 %v5624
    %5833 = vmatpush1.bf16.msra.mxu0 %v5623
    %5834 = vmatprep.subr.bf16.mxu0 %v5626
    %5835 = vmatpush1.bf16.msra.mxu0 %v5625
    %5836 = vmatprep.subr.bf16.mxu0 %v5628
    %5837 = vmatpush1.bf16.msra.mxu0 %v5627
    %5838 = vmatprep.mubr.bf16.mxu0 %v5160
    %5839 = vmatmul.mubr.bf16.gmra.mrb[0].mxu0 %v5159
    %v5840 = vpop.f32.mrb[0].mxu0
    %v5841 = vadd.f32 %v5792, %v5840
    %v5842 = vpop.f32.mrb[0].mxu0
    %v5843 = vpop.f32.mrb[0].mxu0
    %v5844 = vadd.f32 %v5795, %v5843
    %v5845 = vpop.f32.mrb[0].mxu0
    %5846 = vmatprep.mubr.bf16.mxu0 %v5166
    %5847 = vmatmul.mubr.bf16.gmra.mrb[0].mxu0 %v5165
    %v5848 = vpop.f32.mrb[0].mxu0
    %v5849 = vpop.f32.mrb[0].mxu0
    %v5850 = vadd.f32 %v5801, %v5849
    %v5851 = vpop.f32.mrb[0].mxu0
    %v5852 = vpop.f32.mrb[0].mxu0
    %v5853 = vadd.f32 %v5804, %v5852
    %5854 = vdwg.mxu0
    %5855 = vmatprep.subr.bf16.mxu0 %v5630
    %5856 = vmatpush1.bf16.msra.mxu0 %v5629
    %5857 = vmatprep.subr.bf16.mxu0 %v5632
    %5858 = vmatpush1.bf16.msra.mxu0 %v5631
    %5859 = vmatprep.subr.bf16.mxu0 %v5634
    %5860 = vmatpush1.bf16.msra.mxu0 %v5633
    %5861 = vmatprep.subr.bf16.mxu0 %v5636
    %5862 = vmatpush1.bf16.msra.mxu0 %v5635
    %5863 = vmatprep.subr.bf16.mxu0 %v5638
    %5864 = vmatpush1.bf16.msra.mxu0 %v5637
    %5865 = vmatprep.subr.bf16.mxu0 %v5640
    %5866 = vmatpush1.bf16.msra.mxu0 %v5639
    %5867 = vmatprep.subr.bf16.mxu0 %v5642
    %5868 = vmatpush1.bf16.msra.mxu0 %v5641
    %5869 = vmatprep.subr.bf16.mxu0 %v5644
    %5870 = vmatpush1.bf16.msra.mxu0 %v5643
    %5871 = vmatprep.subr.bf16.mxu0 %v5646
    %5872 = vmatpush1.bf16.msra.mxu0 %v5645
    %5873 = vmatprep.subr.bf16.mxu0 %v5648
    %5874 = vmatpush1.bf16.msra.mxu0 %v5647
    %5875 = vmatprep.subr.bf16.mxu0 %v5650
    %5876 = vmatpush1.bf16.msra.mxu0 %v5649
    %5877 = vmatprep.subr.bf16.mxu0 %v5652
    %5878 = vmatpush1.bf16.msra.mxu0 %v5651
    %5879 = vmatprep.subr.bf16.mxu0 %v5654
    %5880 = vmatpush1.bf16.msra.mxu0 %v5653
    %5881 = vmatprep.subr.bf16.mxu0 %v5656
    %5882 = vmatpush1.bf16.msra.mxu0 %v5655
    %5883 = vmatprep.subr.bf16.mxu0 %v5658
    %5884 = vmatpush1.bf16.msra.mxu0 %v5657
    %5885 = vmatprep.subr.bf16.mxu0 %v5660
    %5886 = vmatpush1.bf16.msra.mxu0 %v5659
    %5887 = vmatprep.mubr.bf16.mxu0 %v5162
    %5888 = vmatmul.mubr.bf16.gmra.mrb[0].mxu0 %v5161
    %v5889 = vpop.f32.mrb[0].mxu0
    %v5890 = vadd.f32 %v5841, %v5889
    %v5891 = vpop.f32.mrb[0].mxu0
    %v5892 = vpop.f32.mrb[0].mxu0
    %v5893 = vadd.f32 %v5844, %v5892
    %v5894 = vpop.f32.mrb[0].mxu0
    %5895 = vmatprep.mubr.bf16.mxu0 %v5168
    %5896 = vmatmul.mubr.bf16.gmra.mrb[0].mxu0 %v5167
    %v5897 = vpop.f32.mrb[0].mxu0
    %v5898 = vpop.f32.mrb[0].mxu0
    %v5899 = vadd.f32 %v5850, %v5898
    %v5900 = vpop.f32.mrb[0].mxu0
    %v5901 = vpop.f32.mrb[0].mxu0
    %v5902 = vadd.f32 %v5853, %v5901
    %5903 = vdwg.mxu0
    %5904 = vst [vmem:[#allocation7] sm:$0xff] %v5890
    %5905 = vst [vmem:[#allocation7 + $0x8] sm:$0xff] %v5893
    %5906 = vst [vmem:[#allocation8] sm:$0xff] %v5899
    %5907 = vst [vmem:[#allocation8 + $0x8] sm:$0xff] %v5902
    %v5908 = vpack.c.bf16 %v5893, %v5890
    %v5909 = vpack.c.bf16 %v5902, %v5899
    %v5910 = vld [vmem:[%s9] sm:$0xf]
    %v5911 = vld [vmem:[%s9 + $0x4] sm:$0xf]
    %v5912 = vld [vmem:[%s9 + $0x8] sm:$0xf]
    %v5913 = vld [vmem:[%s9 + $0xc] sm:$0xf]
    %v5914 = vld [vmem:[%s9 + $0x10] sm:$0xf]
    %v5915 = vld [vmem:[%s9 + $0x14] sm:$0xf]
    %v5916 = vld [vmem:[%s9 + $0x18] sm:$0xf]
    %v5917 = vld [vmem:[%s9 + $0x1c] sm:$0xf]
    %v5918 = vld [vmem:[%s9 + $0x20] sm:$0xf]
    %v5919 = vld [vmem:[%s9 + $0x24] sm:$0xf]
    %v5920 = vld [vmem:[%s9 + $0x28] sm:$0xf]
    %v5921 = vld [vmem:[%s9 + $0x2c] sm:$0xf]
    %v5922 = vld [vmem:[%s9 + $0x30] sm:$0xf]
    %v5923 = vld [vmem:[%s9 + $0x34] sm:$0xf]
    %v5924 = vld [vmem:[%s9 + $0x38] sm:$0xf]
    %v5925 = vld [vmem:[%s9 + $0x3c] sm:$0xf]
    %v5926 = vld [vmem:[%s10] sm:$0x1]
    %v5928 = vlaneseq
    %v5929 = vshrl.u32 %v5928, 7
    %v5930 = vsub.s32 0, %v5929
    %v5931 = vrot.slane %v5926, %v5930
    %v5949 = vunpack.c.l.b16 %v5910
    %v5950 = vunpack.c.l.b16 %v5911
    %v5951 = vunpack.c.l.b16 %v5912
    %v5952 = vunpack.c.l.b16 %v5913
    %v5953 = vunpack.c.l.b16 %v5914
    %v5954 = vunpack.c.l.b16 %v5915
    %v5955 = vunpack.c.l.b16 %v5916
    %v5956 = vunpack.c.l.b16 %v5917
    %v5957 = vunpack.c.l.b16 %v5918
    %v5958 = vunpack.c.l.b16 %v5919
    %v5959 = vunpack.c.l.b16 %v5920
    %v5960 = vunpack.c.l.b16 %v5921
    %v5961 = vunpack.c.l.b16 %v5922
    %v5962 = vunpack.c.l.b16 %v5923
    %v5963 = vunpack.c.l.b16 %v5924
    %v5964 = vunpack.c.l.b16 %v5925
    %v5965 = vpack.c.b16 %v5950, %v5949
    %v5966 = vpack.c.b16 %v5952, %v5951
    %v5967 = vpack.c.b16 %v5954, %v5953
    %v5968 = vpack.c.b16 %v5956, %v5955
    %v5969 = vpack.c.b16 %v5958, %v5957
    %v5970 = vpack.c.b16 %v5960, %v5959
    %v5971 = vpack.c.b16 %v5962, %v5961
    %v5972 = vpack.c.b16 %v5964, %v5963
    %5981 = vmatprep.subr.bf16.mxu0 0
    %5982 = vmatpush1.bf16.msra.mxu0 %v5965
    %5983 = vmatprep.subr.bf16.mxu0 0
    %5984 = vmatpush1.bf16.msra.mxu0 %v5966
    %5985 = vmatprep.subr.bf16.mxu0 0
    %5986 = vmatpush1.bf16.msra.mxu0 %v5967
    %5987 = vmatprep.subr.bf16.mxu0 0
    %5988 = vmatpush1.bf16.msra.mxu0 %v5968
    %5989 = vmatprep.subr.bf16.mxu0 0
    %5990 = vmatpush1.bf16.msra.mxu0 %v5969
    %5991 = vmatprep.subr.bf16.mxu0 0
    %5992 = vmatpush1.bf16.msra.mxu0 %v5970
    %5993 = vmatprep.subr.bf16.mxu0 0
    %5994 = vmatpush1.bf16.msra.mxu0 %v5971
    %5995 = vmatprep.subr.bf16.mxu0 0
    %5996 = vmatpush1.bf16.msra.mxu0 %v5972
    %5997 = vmatprep.subr.bf16.mxu0 0
    %5998 = vmatpush1.bf16.msra.mxu0 0
    %5999 = vmatprep.subr.bf16.mxu0 0
    %6000 = vmatpush1.bf16.msra.mxu0 0
    %6001 = vmatprep.subr.bf16.mxu0 0
    %6002 = vmatpush1.bf16.msra.mxu0 0
    %6003 = vmatprep.subr.bf16.mxu0 0
    %6004 = vmatpush1.bf16.msra.mxu0 0
    %6005 = vmatprep.subr.bf16.mxu0 0
    %6006 = vmatpush1.bf16.msra.mxu0 0
    %6007 = vmatprep.subr.bf16.mxu0 0
    %6008 = vmatpush1.bf16.msra.mxu0 0
    %6009 = vmatprep.subr.bf16.mxu0 0
    %6010 = vmatpush1.bf16.msra.mxu0 0
    %6011 = vmatprep.subr.bf16.mxu0 0
    %6012 = vmatpush1.bf16.msra.mxu0 0
    %6013 = vmatprep.mubr.bf16.mxu0 0
    %6014 = vmatmul.mubr.bf16.gmra.mrb[0].mxu0 %v5908
    %v6015 = vpop.f32.mrb[0].mxu0
    %v6016 = vadd.f32 %v5931, %v6015
    %v6017 = vpop.f32.mrb[0].mxu0
    %v6018 = vpop.f32.mrb[0].mxu0
    %v6019 = vadd.f32 %v5931, %v6018
    %v6020 = vpop.f32.mrb[0].mxu0
    %6021 = vmatprep.mubr.bf16.mxu0 0
    %6022 = vmatmul.mubr.bf16.gmra.mrb[0].mxu0 %v5909
    %v6023 = vpop.f32.mrb[0].mxu0
    %v6024 = vadd.f32 %v5931, %v6023
    %v6025 = vpop.f32.mrb[0].mxu0
    %v6026 = vpop.f32.mrb[0].mxu0
    %v6027 = vadd.f32 %v5931, %v6026
    %v6028 = vpop.f32.mrb[0].mxu0
    %6029 = vdwg.mxu0
    %v6030 = vmul.f32 %v5890, %v5890
    %v6031 = vmul.f32 %v5893, %v5893
    %6032 = vadd.xlane.f32.xlu0 %v6030
    %v6033 = vpop.xlane.xlu0 %6032
    %6034 = vadd.xlane.f32.xlu0 %v6031
    %v6035 = vpop.xlane.xlu0 %6034
    %v6036 = vadd.f32 %v6033, 1e-08
    %v6037 = vadd.f32 %v6035, 1e-08
    %v6038 = vrsqrt.pop %v6036
    %v6039 = vrsqrt.pop %v6037
    %v6040 = vmul.f32 %v5890, %v6038
    %v6041 = vmul.f32 %v5893, %v6039
    %v6042 = vmul.f32 %v5899, %v5899
    %v6043 = vmul.f32 %v5902, %v5902
    %6044 = vadd.xlane.f32.xlu0 %v6042
    %v6045 = vpop.xlane.xlu0 %6044
    %6046 = vadd.xlane.f32.xlu0 %v6043
    %v6047 = vpop.xlane.xlu0 %6046
    %v6048 = vadd.f32 %v6045, 1e-08
    %v6049 = vadd.f32 %v6047, 1e-08
    %v6050 = vrsqrt.pop %v6048
    %v6051 = vrsqrt.pop %v6049
    %v6052 = vmul.f32 %v5899, %v6050
    %v6053 = vmul.f32 %v5902, %v6051
    %v6054 = vmul.f32 %v6040, %v6052
    %v6055 = vmul.f32 %v6041, %v6053
    %6056 = vadd.xlane.f32.xlu0 %v6054
    %v6057 = vpop.xlane.xlu0 %6056
    %6058 = vadd.xlane.f32.xlu0 %v6055
    %v6059 = vpop.xlane.xlu0 %6058
    %v6060 = vadd.f32 %v5890, %v5899
    %v6061 = vadd.f32 %v5893, %v5902
    %v6062 = vmul.f32 %v6060, 0.5
    %v6063 = vmul.f32 %v6061, 0.5
    %6064 = vst [vmem:[#allocation10] sm:$0xff] %v6062
    %6065 = vst [vmem:[#allocation10 + $0x8] sm:$0xff] %v6063
    %v6066 = vmul.f32 %v6062, %v6062
    %v6067 = vmul.f32 %v6063, %v6063
    %v6068 = vmul.f32 %v6062, %v6066
    %v6069 = vmul.f32 %v6063, %v6067
    %v6070 = vmul.f32 %v6068, 0.044715
    %v6071 = vmul.f32 %v6069, 0.044715
    %v6072 = vadd.f32 %v6062, %v6070
    %v6073 = vadd.f32 %v6063, %v6071
    %v6074 = vmul.f32 %v6072, 0.7978846
    %v6075 = vmul.f32 %v6073, 0.7978846
    %v6076 = vtanh.pop %v6074
    %v6077 = vtanh.pop %v6075
    %v6078 = vadd.f32 %v6076, 1.0
    %v6079 = vadd.f32 %v6077, 1.0
    %v6080 = vmul.f32 %v6078, 0.5
    %v6081 = vmul.f32 %v6079, 0.5
    %v6082 = vmul.f32 %v6062, %v6080
    %v6083 = vmul.f32 %v6063, %v6081
    %v6084 = vpack.c.bf16 %v6083, %v6082
    %v6085 = vld [vmem:[%s11] sm:$0xf]
    %v6086 = vld [vmem:[%s11 + $0x4] sm:$0xf]
    %v6087 = vld [vmem:[%s11 + $0x8] sm:$0xf]
    %v6088 = vld [vmem:[%s11 + $0xc] sm:$0xf]
    %v6089 = vld [vmem:[%s11 + $0x10] sm:$0xf]
    %v6090 = vld [vmem:[%s11 + $0x14] sm:$0xf]
    %v6091 = vld [vmem:[%s11 + $0x18] sm:$0xf]
    %v6092 = vld [vmem:[%s11 + $0x1c] sm:$0xf]
    %v6093 = vld [vmem:[%s11 + $0x20] sm:$0xf]
    %v6094 = vld [vmem:[%s11 + $0x24] sm:$0xf]
    %v6095 = vld [vmem:[%s11 + $0x28] sm:$0xf]
    %v6096 = vld [vmem:[%s11 + $0x2c] sm:$0xf]
    %v6097 = vld [vmem:[%s11 + $0x30] sm:$0xf]
    %v6098 = vld [vmem:[%s11 + $0x34] sm:$0xf]
    %v6099 = vld [vmem:[%s11 + $0x38] sm:$0xf]
    %v6100 = vld [vmem:[%s11 + $0x3c] sm:$0xf]
    %v6101 = vld [vmem:[#allocation2] sm:$0x1]
    %v6103 = vlaneseq
    %v6104 = vshrl.u32 %v6103, 7
    %v6105 = vsub.s32 0, %v6104
    %v6106 = vrot.slane %v6101, %v6105
    %v6124 = vunpack.c.l.b16 %v6085
    %v6125 = vunpack.c.l.b16 %v6086
    %v6126 = vunpack.c.l.b16 %v6087
    %v6127 = vunpack.c.l.b16 %v6088
    %v6128 = vunpack.c.l.b16 %v6089
    %v6129 = vunpack.c.l.b16 %v6090
    %v6130 = vunpack.c.l.b16 %v6091
    %v6131 = vunpack.c.l.b16 %v6092
    %v6132 = vunpack.c.l.b16 %v6093
    %v6133 = vunpack.c.l.b16 %v6094
    %v6134 = vunpack.c.l.b16 %v6095
    %v6135 = vunpack.c.l.b16 %v6096
    %v6136 = vunpack.c.l.b16 %v6097
    %v6137 = vunpack.c.l.b16 %v6098
    %v6138 = vunpack.c.l.b16 %v6099
    %v6139 = vunpack.c.l.b16 %v6100
    %v6140 = vpack.c.b16 %v6125, %v6124
    %v6141 = vpack.c.b16 %v6127, %v6126
    %v6142 = vpack.c.b16 %v6129, %v6128
    %v6143 = vpack.c.b16 %v6131, %v6130
    %v6144 = vpack.c.b16 %v6133, %v6132
    %v6145 = vpack.c.b16 %v6135, %v6134
    %v6146 = vpack.c.b16 %v6137, %v6136
    %v6147 = vpack.c.b16 %v6139, %v6138
    %6156 = vmatprep.subr.bf16.mxu0 0
    %6157 = vmatpush1.bf16.msra.mxu0 %v6140
    %6158 = vmatprep.subr.bf16.mxu0 0
    %6159 = vmatpush1.bf16.msra.mxu0 %v6141
    %6160 = vmatprep.subr.bf16.mxu0 0
    %6161 = vmatpush1.bf16.msra.mxu0 %v6142
    %6162 = vmatprep.subr.bf16.mxu0 0
    %6163 = vmatpush1.bf16.msra.mxu0 %v6143
    %6164 = vmatprep.subr.bf16.mxu0 0
    %6165 = vmatpush1.bf16.msra.mxu0 %v6144
    %6166 = vmatprep.subr.bf16.mxu0 0
    %6167 = vmatpush1.bf16.msra.mxu0 %v6145
    %6168 = vmatprep.subr.bf16.mxu0 0
    %6169 = vmatpush1.bf16.msra.mxu0 %v6146
    %6170 = vmatprep.subr.bf16.mxu0 0
    %6171 = vmatpush1.bf16.msra.mxu0 %v6147
    %6172 = vmatprep.subr.bf16.mxu0 0
    %6173 = vmatpush1.bf16.msra.mxu0 0
    %6174 = vmatprep.subr.bf16.mxu0 0
    %6175 = vmatpush1.bf16.msra.mxu0 0
    %6176 = vmatprep.subr.bf16.mxu0 0
    %6177 = vmatpush1.bf16.msra.mxu0 0
    %6178 = vmatprep.subr.bf16.mxu0 0
    %6179 = vmatpush1.bf16.msra.mxu0 0
    %6180 = vmatprep.subr.bf16.mxu0 0
    %6181 = vmatpush1.bf16.msra.mxu0 0
    %6182 = vmatprep.subr.bf16.mxu0 0
    %6183 = vmatpush1.bf16.msra.mxu0 0
    %6184 = vmatprep.subr.bf16.mxu0 0
    %6185 = vmatpush1.bf16.msra.mxu0 0
    %6186 = vmatprep.subr.bf16.mxu0 0
    %6187 = vmatpush1.bf16.msra.mxu0 0
    %6188 = vmatprep.mubr.bf16.mxu0 0
    %6189 = vmatmul.mubr.bf16.gmra.mrb[0].mxu0 %v6084
    %v6190 = vpop.f32.mrb[0].mxu0
    %v6191 = vadd.f32 %v6106, %v6190
    %v6192 = vpop.f32.mrb[0].mxu0
    %v6193 = vpop.f32.mrb[0].mxu0
    %v6194 = vadd.f32 %v6106, %v6193
    %v6195 = vpop.f32.mrb[0].mxu0
    %6196 = vdwg.mxu0
    %6199 = vrot.lane.b32.xlu0 %v6191, 5
    %v6200 = vpop.permute.xlu0 %6199
    %6201 = vrot.lane.b32.xlu0 %v6194, 5
    %v6202 = vpop.permute.xlu0 %6201
    %vm6205 = vcmask 15360
    %v6206 = vsel %vm6205, %v6016, %v6024
    %v6207 = vsel %vm6205, %v6019, %v6027
    %vm6208 = vcmask 31744
    %v6209 = vsel %vm6208, %v6206, %v6057
    %v6210 = vsel %vm6208, %v6207, %v6059
    %vm6211 = vcmask 39936
    %v6212 = vsel %vm6211, %v6209, %v6200
    %v6213 = vsel %vm6211, %v6210, %v6202
    %vm6214 = vcmask 48128
    %v6215 = vsel %vm6214, %v6212, 0.0
    %v6216 = vsel %vm6214, %v6213, 0.0
    %6217 = vst [vmem:[%s18] sm:$0xff] %v6215
    %6218 = vst [vmem:[%s18 + $0x8] sm:$0xff] %v6216
    // Predicated region
    $region54: #{text_image_weibo_forward.1} parent=1 // pred_check
      _
    $region55: #{text_image_weibo_forward.1} parent=1 // pred_check_branch
      %6220 = sbr.rel (0) target = $region57
    $region56: #{text_image_weibo_forward.1} parent=1 // pred_region
      %s6222 = ssub.s32 1536, 1536
      %6223 = vsyncadd [#allocation4], %s6222
      %s6224 = sshll.u32 [#allocation3], 4
      %s6225 = int_to_ptr.vmem [resolvable:$true] %s6224
      %6230 = dma.vmem_to_hbm [thread:$0]  %s6225, 1536, %s13, [#allocation4], 768, 768, 48
    $region57: #{text_image_weibo_forward.1} parent=1 // pred_fallthru
      _
    // Predicated region
    $region58: #{text_image_weibo_forward.1} parent=1 // pred_check
      _
    $region59: #{text_image_weibo_forward.1} parent=1 // pred_check_branch
      %6232 = sbr.rel (0) target = $region61
    $region60: #{text_image_weibo_forward.1} parent=1 // pred_region
      %s6234 = ssub.s32 1536, 1536
      %6235 = vsyncadd [#allocation6], %s6234
      %s6236 = sshll.u32 [#allocation5], 4
      %s6237 = int_to_ptr.vmem [resolvable:$true] %s6236
      %6242 = dma.vmem_to_hbm [thread:$0]  %s6237, 1536, %s14, [#allocation6], 768, 768, 48
    $region61: #{text_image_weibo_forward.1} parent=1 // pred_fallthru
      _
    // Predicated region
    $region62: #{text_image_weibo_forward.1} parent=1 // pred_check
      _
    $region63: #{text_image_weibo_forward.1} parent=1 // pred_check_branch
      %6244 = sbr.rel (0) target = $region65
    $region64: #{text_image_weibo_forward.1} parent=1 // pred_region
      %s6246 = ssub.s32 256, 256
      %6247 = vsyncadd [#allocation6], %s6246
      %s6248 = sshll.u32 [#allocation7], 4
      %s6249 = int_to_ptr.vmem [resolvable:$true] %s6248
      %6254 = dma.vmem_to_hbm [thread:$0]  %s6249, 256, %s15, [#allocation6], 128, 128, 8
    $region65: #{text_image_weibo_forward.1} parent=1 // pred_fallthru
      _
    // Predicated region
    $region66: #{text_image_weibo_forward.1} parent=1 // pred_check
      _
    $region67: #{text_image_weibo_forward.1} parent=1 // pred_check_branch
      %6256 = sbr.rel (0) target = $region69
    $region68: #{text_image_weibo_forward.1} parent=1 // pred_region
      %s6258 = ssub.s32 256, 256
      %6259 = vsyncadd [#allocation9], %s6258
      %s6260 = sshll.u32 [#allocation8], 4
      %s6261 = int_to_ptr.vmem [resolvable:$true] %s6260
      %6266 = dma.vmem_to_hbm [thread:$0]  %s6261, 256, %s16, [#allocation9], 128, 128, 8
    $region69: #{text_image_weibo_forward.1} parent=1 // pred_fallthru
      _
    // Predicated region
    $region70: #{text_image_weibo_forward.1} parent=1 // pred_check
      _
    $region71: #{text_image_weibo_forward.1} parent=1 // pred_check_branch
      %6268 = sbr.rel (0) target = $region73
    $region72: #{text_image_weibo_forward.1} parent=1 // pred_region
      %s6270 = ssub.s32 256, 256
      %6271 = vsyncadd [#allocation9], %s6270
      %s6272 = sshll.u32 [#allocation10], 4
      %s6273 = int_to_ptr.vmem [resolvable:$true] %s6272
      %6278 = dma.vmem_to_hbm [thread:$0]  %s6273, 256, %s17, [#allocation9], 128, 128, 8
    $region73: #{text_image_weibo_forward.1} parent=1 // pred_fallthru
      _
    // Predicated region
    $region74: #{text_image_weibo_forward.1} parent=1 // pred_check
      _
    $region75: #{text_image_weibo_forward.1} parent=1 // pred_check_branch
      %6280 = sbr.rel (0) target = $region77
    $region76: #{text_image_weibo_forward.1} parent=1 // pred_region
      _
    $region77: #{text_image_weibo_forward.1} parent=1 // pred_fallthru
      _
    // Predicated region
    $region78: #{text_image_weibo_forward.1} parent=1 // pred_check
      _
    $region79: #{text_image_weibo_forward.1} parent=1 // pred_check_branch
      %6282 = sbr.rel (0) target = $region81
    $region80: #{text_image_weibo_forward.1} parent=1 // pred_region
      %6283 = dma.done [#allocation4], 1536
    $region81: #{text_image_weibo_forward.1} parent=1 // pred_fallthru
      _
    // Predicated region
    $region82: #{text_image_weibo_forward.1} parent=1 // pred_check
      _
    $region83: #{text_image_weibo_forward.1} parent=1 // pred_check_branch
      %6285 = sbr.rel (0) target = $region85
    $region84: #{text_image_weibo_forward.1} parent=1 // pred_region
      %6286 = dma.done [#allocation6], 1536
    $region85: #{text_image_weibo_forward.1} parent=1 // pred_fallthru
      _
    // Predicated region
    $region86: #{text_image_weibo_forward.1} parent=1 // pred_check
      _
    $region87: #{text_image_weibo_forward.1} parent=1 // pred_check_branch
      %6288 = sbr.rel (0) target = $region89
    $region88: #{text_image_weibo_forward.1} parent=1 // pred_region
      %6289 = dma.done [#allocation6], 256
    $region89: #{text_image_weibo_forward.1} parent=1 // pred_fallthru
      _
    // Predicated region
    $region90: #{text_image_weibo_forward.1} parent=1 // pred_check
      _
    $region91: #{text_image_weibo_forward.1} parent=1 // pred_check_branch
      %6291 = sbr.rel (0) target = $region93
    $region92: #{text_image_weibo_forward.1} parent=1 // pred_region
      %6292 = dma.done [#allocation9], 256
    $region93: #{text_image_weibo_forward.1} parent=1 // pred_fallthru
      _
    // Predicated region
    $region94: #{text_image_weibo_forward.1} parent=1 // pred_check
      _
    $region95: #{text_image_weibo_forward.1} parent=1 // pred_check_branch
      %6294 = sbr.rel (0) target = $region97
    $region96: #{text_image_weibo_forward.1} parent=1 // pred_region
      %6295 = dma.done [#allocation9], 256
    $region97: #{text_image_weibo_forward.1} parent=1 // pred_fallthru
      _
    // Predicated region
    $region98: #{text_image_weibo_forward.1} parent=1 // pred_check
      _
    $region99: #{text_image_weibo_forward.1} parent=1 // pred_check_branch
      %6297 = sbr.rel (0) target = $region101
    $region100: #{text_image_weibo_forward.1} parent=1 // pred_region
      _
    $region101: #{text_image_weibo_forward.1} parent=1 // pred_fallthru
      _
    %6298 = vsyncpa [#allocation4], 1
    %6299 = vsyncpa [#allocation6], 1
    %6300 = vsyncpa [#allocation9], 1

</llo_original>
